<compile_context>
chip_gen: v7x
topology: tpu7x:2x2x1
jax: 0.10.0
libtpu: 0.0.40
codegen_flags: <defaults>
</compile_context>

<pallas_src>
import functools
import math

import jax
import jax.numpy as jnp
from jax.experimental import pallas as pl
from jax.experimental.pallas import tpu as pltpu

AUDIO_DIM = 1024
TEXT_DIM = 768
COMMON_DIM = 512
NUM_CLASSES = 2
OUT_PAD = 128          # classifier output padded to a full lane width


def _round_up(x, m):
    return ((x + m - 1) // m) * m


def _head_kernel(audio_ref, text_ref,
                 wa_ref, wt_ref, b1_ref, bf2_ref, bc1_ref, bc2_ref,
                 wf2_ref, wc1_ref, wc2_ref,
                 out_ref,
                 *scratch, manual_prefetch):
    if manual_prefetch:
        # grid == (1,) on this path: start the later-layer weight DMAs now so they
        # overlap the first (folded) matmuls, wait right before each use.
        wf2_buf, wc1_buf, wc2_buf, sem = scratch
        cp_f2 = pltpu.make_async_copy(wf2_ref, wf2_buf, sem.at[0])
        cp_c1 = pltpu.make_async_copy(wc1_ref, wc1_buf, sem.at[1])
        cp_c2 = pltpu.make_async_copy(wc2_ref, wc2_buf, sem.at[2])
        cp_f2.start()
        cp_c1.start()
        cp_c2.start()

        def get_wf2():
            cp_f2.wait()
            return wf2_buf[...]

        def get_wc1():
            cp_c1.wait()
            return wc1_buf[...]

        def get_wc2():
            cp_c2.wait()
            return wc2_buf[...]
    else:
        get_wf2 = lambda: wf2_ref[...]
        get_wc1 = lambda: wc1_ref[...]
        get_wc2 = lambda: wc2_ref[...]

    a = audio_ref[...]                       # (TB, 1024) bf16
    t = text_ref[...]                        # (TB, 768)  bf16

    # Folded pre-ReLU chain.  Single-token attention (softmax over one key == 1.0)
    # means attended = out_proj(v_proj(text_proj)), so audio_proj, text_proj, v_proj,
    # out_proj and the concat-split fusion matmul all fold into two matmuls + bias.
    h1 = jnp.dot(a, wa_ref[...], preferred_element_type=jnp.float32)
    h1 = h1 + jnp.dot(t, wt_ref[...], preferred_element_type=jnp.float32)
    h1 = jnp.maximum(h1 + b1_ref[...], 0.0)

    # fusion MLP second linear
    f_out = jnp.dot(h1.astype(jnp.bfloat16), get_wf2(),
                    preferred_element_type=jnp.float32) + bf2_ref[...]

    # classifier head (dropout = identity in eval mode); wc2 is lane-padded to 128
    c1 = jnp.maximum(
        jnp.dot(f_out.astype(jnp.bfloat16), get_wc1(),
                preferred_element_type=jnp.float32) + bc1_ref[...], 0.0)
    out_ref[...] = (jnp.dot(c1.astype(jnp.bfloat16), get_wc2(),
                            preferred_element_type=jnp.float32)
                    + bc2_ref[...]).astype(out_ref.dtype)


def init_params(key):
    """Deterministic synthetic parameters, folded offline.

    The pre-ReLU linear chain (audio_proj, text_proj, attention v/out proj, first
    fusion linear) is folded in f32 on host into Wa' (1024x512), Wt' (768x512) and
    b1' (1x512), then cast once to bf16 (bias stays f32).  Remaining weights are
    stored pre-transposed as (in, out) bf16; wc2/bc2 are zero-padded to 128 lanes.
    """
    def linear(k, fan_in, fan_out):
        kw, kb = jax.random.split(k)
        bound = 1.0 / math.sqrt(fan_in)
        w = jax.random.uniform(kw, (fan_in, fan_out), jnp.float32, -bound, bound)
        b = jax.random.uniform(kb, (1, fan_out), jnp.float32, -bound, bound)
        return w, b

    keys = jax.random.split(key, 8)
    wa, ba = linear(keys[0], AUDIO_DIM, COMMON_DIM)          # audio_proj
    wt, bt = linear(keys[1], TEXT_DIM, COMMON_DIM)           # text_proj
    wv, bv = linear(keys[2], COMMON_DIM, COMMON_DIM)         # attention v_proj
    wo, bo = linear(keys[3], COMMON_DIM, COMMON_DIM)         # attention out_proj
    wf1, bf1 = linear(keys[4], COMMON_DIM * 2, COMMON_DIM)   # fusion linear 1 (1024,512)
    wf2, bf2 = linear(keys[5], COMMON_DIM, COMMON_DIM)       # fusion linear 2
    wc1, bc1 = linear(keys[6], COMMON_DIM, COMMON_DIM // 2)  # classifier linear 1
    wc2, bc2 = linear(keys[7], COMMON_DIM // 2, NUM_CLASSES)  # classifier linear 2

    wf1a = wf1[:COMMON_DIM, :]     # acts on audio_proj half of the concat
    wf1b = wf1[COMMON_DIM:, :]     # acts on attended half of the concat

    # Offline f32 fold of the full pre-ReLU chain (attention softmax weight == 1.0).
    wa_fold = wa @ wf1a                                       # (1024, 512)
    wt_fold = wt @ wv @ wo @ wf1b                             # (768, 512)
    b1_fold = ba @ wf1a + ((bt @ wv + bv) @ wo + bo) @ wf1b + bf1   # (1, 512)

    p = {
        "wa_f": wa_fold.astype(jnp.bfloat16),
        "wt_f": wt_fold.astype(jnp.bfloat16),
        "b1_f": b1_fold,                                      # f32
        "wf2": wf2.astype(jnp.bfloat16), "bf2": bf2,
        "wc1": wc1.astype(jnp.bfloat16), "bc1": bc1,
        "wc2": jnp.zeros((COMMON_DIM // 2, OUT_PAD), jnp.bfloat16)
                 .at[:, :NUM_CLASSES].set(wc2.astype(jnp.bfloat16)),
        "bc2": jnp.zeros((1, OUT_PAD), jnp.float32)
                 .at[:, :NUM_CLASSES].set(bc2),
    }
    return p


def multimodal_head(audio_features, text_features, p, *, max_tb=512):
    B = audio_features.shape[0]

    # bf16 activations at the boundary (halves activation DMA; matches bf16-in /
    # f32-accumulate matmuls inside the kernel).
    a16 = audio_features.astype(jnp.bfloat16)
    t16 = text_features.astype(jnp.bfloat16)

    # Pad the batch to a multiple of 16 (bf16 sublane pack): full-vreg unmasked
    # loads/stores for tiny batches.  Padded rows are garbage-in/garbage-out and
    # sliced off below; no cross-row reduction exists, so this is safe.
    Bp = _round_up(max(B, 1), 16)
    if Bp != B:
        a16 = jnp.pad(a16, ((0, Bp - B), (0, 0)))
        t16 = jnp.pad(t16, ((0, Bp - B), (0, 0)))

    if Bp >= 512:
        # >= 2 grid steps so the "parallel" batch axis can shard across v7x's two
        # TensorCores; below that the duplicated per-core weight DMA eats the gain.
        TB = min(max_tb, Bp // 2)
    else:
        TB = Bp
    grid = (pl.cdiv(Bp, TB),)
    manual_prefetch = grid[0] == 1

    early_weights = (p["wa_f"], p["wt_f"], p["b1_f"], p["bf2"], p["bc1"], p["bc2"])
    later_weights = (p["wf2"], p["wc1"], p["wc2"])

    in_specs = [pl.BlockSpec((TB, AUDIO_DIM), lambda i: (i, 0)),
                pl.BlockSpec((TB, TEXT_DIM), lambda i: (i, 0))]
    # Early-stage weights + biases: full array as one block with a constant block
    # index -> DMA'd once, VMEM-resident across the batch grid.
    in_specs += [pl.BlockSpec(w.shape, lambda i: (0, 0)) for w in early_weights]

    if manual_prefetch:
        # grid == (1,): BlockSpec pipelining gives zero overlap, so ship the
        # later-layer weights as raw refs and DMA them manually inside the kernel
        # (started at entry, waited just before use -> hidden behind the first matmuls).
        in_specs += [pl.BlockSpec(memory_space=pl.ANY)] * len(later_weights)
        scratch_shapes = [
            pltpu.VMEM((COMMON_DIM, COMMON_DIM), jnp.bfloat16),        # wf2
            pltpu.VMEM((COMMON_DIM, COMMON_DIM // 2), jnp.bfloat16),   # wc1
            pltpu.VMEM((COMMON_DIM // 2, OUT_PAD), jnp.bfloat16),      # wc2
            pltpu.SemaphoreType.DMA((3,)),
        ]
        dim_sems = ("arbitrary",)
    else:
        in_specs += [pl.BlockSpec(w.shape, lambda i: (0, 0)) for w in later_weights]
        scratch_shapes = []
        dim_sems = ("parallel",)

    # bf16 output: only 2 of the 128 padded lanes are ever read, so halving the
    # writeback is free accuracy-wise; cast back to f32 after slicing.
    out = pl.pallas_call(
        functools.partial(_head_kernel, manual_prefetch=manual_prefetch),
        out_shape=jax.ShapeDtypeStruct((Bp, OUT_PAD), jnp.bfloat16),
        grid=grid,
        in_specs=in_specs,
        out_specs=pl.BlockSpec((TB, OUT_PAD), lambda i: (i, 0)),
        scratch_shapes=scratch_shapes,
        compiler_params=pltpu.CompilerParams(
            dimension_semantics=dim_sems,
            vmem_limit_bytes=32 * 1024 * 1024),
    )(a16, t16, *early_weights, *later_weights)

    return out[:B, :NUM_CLASSES].astype(jnp.float32)


def multimodal_head_ref(audio_features, text_features, p):
    """Pure-JAX reference (same folded bf16 weights, f32 accumulate) for validation."""
    f32 = jnp.float32
    bf = lambda x: x.astype(jnp.bfloat16).astype(f32)   # mirror the kernel's casts
    a = bf(audio_features)
    t = bf(text_features)
    # attention softmax over a single key == 1.0 -> pre-ReLU chain folds into one GEMM pair
    h1 = jax.nn.relu(a @ p["wa_f"].astype(f32) + t @ p["wt_f"].astype(f32) + p["b1_f"])
    f_out = bf(h1) @ p["wf2"].astype(f32) + p["bf2"]
    c1 = jax.nn.relu(bf(f_out) @ p["wc1"].astype(f32) + p["bc1"])
    out = bf(c1) @ p["wc2"].astype(f32) + p["bc2"]
    return out[:, :NUM_CLASSES]


if __name__ == "__main__":
    # TODO(synk): Wav2Vec2 / BERT / Whisper encoders, tokenization and ASR generation
    # are not translatable to Pallas; we start from their pooled feature outputs.
    key = jax.random.PRNGKey(0)
    k_audio, k_text, k_param = jax.random.split(key, 3)

    B = 2
    audio_features = jax.random.normal(k_audio, (B, AUDIO_DIM), jnp.float32)
    text_features = jax.random.normal(k_text, (B, TEXT_DIM), jnp.float32)
    params = init_params(k_param)

    out = multimodal_head(audio_features, text_features, params)
    out = jax.block_until_ready(out)

    ref = multimodal_head_ref(audio_features, text_features, params)
    assert out.shape == (B, NUM_CLASSES), out.shape
    assert jnp.allclose(out, ref, rtol=1e-2, atol=1e-2), (out, ref)

    print("KERNEL_OK")
</pallas_src>

<mosaic_0001>
module attributes {stable_mosaic.version = 11 : i64} {
  func.func @_head_kernel(%arg0: i32, %arg1: memref<16x1024xbf16, #tpu.memory_space<vmem>>, %arg2: memref<16x768xbf16, #tpu.memory_space<vmem>>, %arg3: memref<1024x512xbf16, #tpu.memory_space<vmem>>, %arg4: memref<768x512xbf16, #tpu.memory_space<vmem>>, %arg5: memref<1x512xf32, #tpu.memory_space<vmem>>, %arg6: memref<1x512xf32, #tpu.memory_space<vmem>>, %arg7: memref<1x256xf32, #tpu.memory_space<vmem>>, %arg8: memref<1x128xf32, #tpu.memory_space<vmem>>, %arg9: memref<512x512xbf16, #tpu.memory_space<any>>, %arg10: memref<512x256xbf16, #tpu.memory_space<any>>, %arg11: memref<256x128xbf16, #tpu.memory_space<any>>, %arg12: memref<16x128xbf16, #tpu.memory_space<vmem>>, %arg13: memref<512x512xbf16, #tpu.memory_space<vmem>>, %arg14: memref<512x256xbf16, #tpu.memory_space<vmem>>, %arg15: memref<256x128xbf16, #tpu.memory_space<vmem>>, %arg16: memref<3x!tpu.dma_semaphore, #tpu.memory_space<semaphore_mem>>) attributes {dimension_semantics = [#tpu.dimension_semantics<arbitrary>], iteration_bounds = array<i64: 1>, scalar_prefetch = 0 : i64, scratch_operands = 4 : i64, tpu.core_type = #tpu.core_type<tc>, window_params = [{transform_indices = @transform_0, window_bounds = array<i64: 16, 1024>}, {transform_indices = @transform_1, window_bounds = array<i64: 16, 768>}, {pipeline_mode = #tpu.pipeline_mode<synchronous>, transform_indices = @transform_2, window_bounds = array<i64: 1024, 512>}, {pipeline_mode = #tpu.pipeline_mode<synchronous>, transform_indices = @transform_3, window_bounds = array<i64: 768, 512>}, {pipeline_mode = #tpu.pipeline_mode<synchronous>, transform_indices = @transform_4, window_bounds = array<i64: 1, 512>}, {pipeline_mode = #tpu.pipeline_mode<synchronous>, transform_indices = @transform_5, window_bounds = array<i64: 1, 512>}, {pipeline_mode = #tpu.pipeline_mode<synchronous>, transform_indices = @transform_6, window_bounds = array<i64: 1, 256>}, {pipeline_mode = #tpu.pipeline_mode<synchronous>, transform_indices = @transform_7, window_bounds = array<i64: 1, 128>}, {}, {}, {}, {transform_indices = @transform_11, window_bounds = array<i64: 16, 128>}]} {
    %c0_i32 = arith.constant 0 : i32
    %0 = tpu.memref_slice %arg16[%c0_i32] : memref<3x!tpu.dma_semaphore, #tpu.memory_space<semaphore_mem>> -> memref<1x!tpu.dma_semaphore, #tpu.memory_space<semaphore_mem>>
    %1 = tpu.memref_squeeze %0 : memref<1x!tpu.dma_semaphore, #tpu.memory_space<semaphore_mem>> -> memref<!tpu.dma_semaphore, #tpu.memory_space<semaphore_mem>>
    tpu.enqueue_dma source(%arg9 : memref<512x512xbf16, #tpu.memory_space<any>>) target(%arg13 : memref<512x512xbf16, #tpu.memory_space<vmem>>) target_semaphore(%1 : memref<!tpu.dma_semaphore, #tpu.memory_space<semaphore_mem>>)
    %c1_i32 = arith.constant 1 : i32
    %2 = tpu.memref_slice %arg16[%c1_i32] : memref<3x!tpu.dma_semaphore, #tpu.memory_space<semaphore_mem>> -> memref<1x!tpu.dma_semaphore, #tpu.memory_space<semaphore_mem>>
    %3 = tpu.memref_squeeze %2 : memref<1x!tpu.dma_semaphore, #tpu.memory_space<semaphore_mem>> -> memref<!tpu.dma_semaphore, #tpu.memory_space<semaphore_mem>>
    tpu.enqueue_dma source(%arg10 : memref<512x256xbf16, #tpu.memory_space<any>>) target(%arg14 : memref<512x256xbf16, #tpu.memory_space<vmem>>) target_semaphore(%3 : memref<!tpu.dma_semaphore, #tpu.memory_space<semaphore_mem>>)
    %c2_i32 = arith.constant 2 : i32
    %4 = tpu.memref_slice %arg16[%c2_i32] : memref<3x!tpu.dma_semaphore, #tpu.memory_space<semaphore_mem>> -> memref<1x!tpu.dma_semaphore, #tpu.memory_space<semaphore_mem>>
    %5 = tpu.memref_squeeze %4 : memref<1x!tpu.dma_semaphore, #tpu.memory_space<semaphore_mem>> -> memref<!tpu.dma_semaphore, #tpu.memory_space<semaphore_mem>>
    tpu.enqueue_dma source(%arg11 : memref<256x128xbf16, #tpu.memory_space<any>>) target(%arg15 : memref<256x128xbf16, #tpu.memory_space<vmem>>) target_semaphore(%5 : memref<!tpu.dma_semaphore, #tpu.memory_space<semaphore_mem>>)
    %c0 = arith.constant 0 : index
    %c0_0 = arith.constant 0 : index
    %6 = vector.load %arg1[%c0, %c0_0] : memref<16x1024xbf16, #tpu.memory_space<vmem>>, vector<16x1024xbf16>
    %c0_1 = arith.constant 0 : index
    %c0_2 = arith.constant 0 : index
    %7 = vector.load %arg2[%c0_1, %c0_2] : memref<16x768xbf16, #tpu.memory_space<vmem>>, vector<16x768xbf16>
    %c0_3 = arith.constant 0 : index
    %c0_4 = arith.constant 0 : index
    %8 = vector.load %arg3[%c0_3, %c0_4] : memref<1024x512xbf16, #tpu.memory_space<vmem>>, vector<1024x512xbf16>
    %cst = arith.constant dense<0.000000e+00> : vector<16x512xf32>
    %9 = tpu.matmul %6, %8, %cst {dimension_numbers = #tpu.dot_dimension_numbers<[1], [0], [0], [1], [0, 0, 1, 1], [], []>} : vector<16x1024xbf16>, vector<1024x512xbf16>, vector<16x512xf32> -> vector<16x512xf32>
    %c0_5 = arith.constant 0 : index
    %c0_6 = arith.constant 0 : index
    %10 = vector.load %arg4[%c0_5, %c0_6] : memref<768x512xbf16, #tpu.memory_space<vmem>>, vector<768x512xbf16>
    %cst_7 = arith.constant dense<0.000000e+00> : vector<16x512xf32>
    %11 = tpu.matmul %7, %10, %cst_7 {dimension_numbers = #tpu.dot_dimension_numbers<[1], [0], [0], [1], [0, 0, 1, 1], [], []>} : vector<16x768xbf16>, vector<768x512xbf16>, vector<16x512xf32> -> vector<16x512xf32>
    %12 = arith.addf %9, %11 : vector<16x512xf32>
    %c0_8 = arith.constant 0 : index
    %c0_9 = arith.constant 0 : index
    %13 = vector.load %arg5[%c0_8, %c0_9] : memref<1x512xf32, #tpu.memory_space<vmem>>, vector<1x512xf32>
    %14 = vector.broadcast %13 : vector<1x512xf32> to vector<16x512xf32>
    %15 = arith.addf %12, %14 : vector<16x512xf32>
    %cst_10 = arith.constant 0.000000e+00 : f32
    %16 = vector.broadcast %cst_10 : f32 to vector<16x512xf32>
    %17 = arith.maximumf %15, %16 : vector<16x512xf32>
    %18 = arith.truncf %17 : vector<16x512xf32> to vector<16x512xbf16>
    %c0_i32_11 = arith.constant 0 : i32
    %19 = tpu.memref_slice %arg16[%c0_i32_11] : memref<3x!tpu.dma_semaphore, #tpu.memory_space<semaphore_mem>> -> memref<1x!tpu.dma_semaphore, #tpu.memory_space<semaphore_mem>>
    %20 = tpu.memref_squeeze %19 : memref<1x!tpu.dma_semaphore, #tpu.memory_space<semaphore_mem>> -> memref<!tpu.dma_semaphore, #tpu.memory_space<semaphore_mem>>
    tpu.wait_dma2 semaphore(%20 : memref<!tpu.dma_semaphore, #tpu.memory_space<semaphore_mem>>) src(%arg9 : memref<512x512xbf16, #tpu.memory_space<any>>) dst(%arg13 : memref<512x512xbf16, #tpu.memory_space<vmem>>)
    %c0_12 = arith.constant 0 : index
    %c0_13 = arith.constant 0 : index
    %21 = vector.load %arg13[%c0_12, %c0_13] : memref<512x512xbf16, #tpu.memory_space<vmem>>, vector<512x512xbf16>
    %cst_14 = arith.constant dense<0.000000e+00> : vector<16x512xf32>
    %22 = tpu.matmul %18, %21, %cst_14 {dimension_numbers = #tpu.dot_dimension_numbers<[1], [0], [0], [1], [0, 0, 1, 1], [], []>} : vector<16x512xbf16>, vector<512x512xbf16>, vector<16x512xf32> -> vector<16x512xf32>
    %c0_15 = arith.constant 0 : index
    %c0_16 = arith.constant 0 : index
    %23 = vector.load %arg6[%c0_15, %c0_16] : memref<1x512xf32, #tpu.memory_space<vmem>>, vector<1x512xf32>
    %24 = vector.broadcast %23 : vector<1x512xf32> to vector<16x512xf32>
    %25 = arith.addf %22, %24 : vector<16x512xf32>
    %26 = arith.truncf %25 : vector<16x512xf32> to vector<16x512xbf16>
    %c1_i32_17 = arith.constant 1 : i32
    %27 = tpu.memref_slice %arg16[%c1_i32_17] : memref<3x!tpu.dma_semaphore, #tpu.memory_space<semaphore_mem>> -> memref<1x!tpu.dma_semaphore, #tpu.memory_space<semaphore_mem>>
    %28 = tpu.memref_squeeze %27 : memref<1x!tpu.dma_semaphore, #tpu.memory_space<semaphore_mem>> -> memref<!tpu.dma_semaphore, #tpu.memory_space<semaphore_mem>>
    tpu.wait_dma2 semaphore(%28 : memref<!tpu.dma_semaphore, #tpu.memory_space<semaphore_mem>>) src(%arg10 : memref<512x256xbf16, #tpu.memory_space<any>>) dst(%arg14 : memref<512x256xbf16, #tpu.memory_space<vmem>>)
    %c0_18 = arith.constant 0 : index
    %c0_19 = arith.constant 0 : index
    %29 = vector.load %arg14[%c0_18, %c0_19] : memref<512x256xbf16, #tpu.memory_space<vmem>>, vector<512x256xbf16>
    %cst_20 = arith.constant dense<0.000000e+00> : vector<16x256xf32>
    %30 = tpu.matmul %26, %29, %cst_20 {dimension_numbers = #tpu.dot_dimension_numbers<[1], [0], [0], [1], [0, 0, 1, 1], [], []>} : vector<16x512xbf16>, vector<512x256xbf16>, vector<16x256xf32> -> vector<16x256xf32>
    %c0_21 = arith.constant 0 : index
    %c0_22 = arith.constant 0 : index
    %31 = vector.load %arg7[%c0_21, %c0_22] : memref<1x256xf32, #tpu.memory_space<vmem>>, vector<1x256xf32>
    %32 = vector.broadcast %31 : vector<1x256xf32> to vector<16x256xf32>
    %33 = arith.addf %30, %32 : vector<16x256xf32>
    %cst_23 = arith.constant 0.000000e+00 : f32
    %34 = vector.broadcast %cst_23 : f32 to vector<16x256xf32>
    %35 = arith.maximumf %33, %34 : vector<16x256xf32>
    %36 = arith.truncf %35 : vector<16x256xf32> to vector<16x256xbf16>
    %c2_i32_24 = arith.constant 2 : i32
    %37 = tpu.memref_slice %arg16[%c2_i32_24] : memref<3x!tpu.dma_semaphore, #tpu.memory_space<semaphore_mem>> -> memref<1x!tpu.dma_semaphore, #tpu.memory_space<semaphore_mem>>
    %38 = tpu.memref_squeeze %37 : memref<1x!tpu.dma_semaphore, #tpu.memory_space<semaphore_mem>> -> memref<!tpu.dma_semaphore, #tpu.memory_space<semaphore_mem>>
    tpu.wait_dma2 semaphore(%38 : memref<!tpu.dma_semaphore, #tpu.memory_space<semaphore_mem>>) src(%arg11 : memref<256x128xbf16, #tpu.memory_space<any>>) dst(%arg15 : memref<256x128xbf16, #tpu.memory_space<vmem>>)
    %c0_25 = arith.constant 0 : index
    %c0_26 = arith.constant 0 : index
    %39 = vector.load %arg15[%c0_25, %c0_26] : memref<256x128xbf16, #tpu.memory_space<vmem>>, vector<256x128xbf16>
    %cst_27 = arith.constant dense<0.000000e+00> : vector<16x128xf32>
    %40 = tpu.matmul %36, %39, %cst_27 {dimension_numbers = #tpu.dot_dimension_numbers<[1], [0], [0], [1], [0, 0, 1, 1], [], []>} : vector<16x256xbf16>, vector<256x128xbf16>, vector<16x128xf32> -> vector<16x128xf32>
    %c0_28 = arith.constant 0 : index
    %c0_29 = arith.constant 0 : index
    %41 = vector.load %arg8[%c0_28, %c0_29] : memref<1x128xf32, #tpu.memory_space<vmem>>, vector<1x128xf32>
    %42 = vector.broadcast %41 : vector<1x128xf32> to vector<16x128xf32>
    %43 = arith.addf %40, %42 : vector<16x128xf32>
    %44 = arith.truncf %43 : vector<16x128xf32> to vector<16x128xbf16>
    %c0_30 = arith.constant 0 : index
    %c0_31 = arith.constant 0 : index
    %45 = vector.load %arg12[%c0_30, %c0_31] : memref<16x128xbf16, #tpu.memory_space<vmem>>, vector<16x128xbf16>
    tpu.vector_store %arg12[%c0_30, %c0_31], %44 {strides = array<i32>} : memref<16x128xbf16, #tpu.memory_space<vmem>>, vector<16x128xbf16>,
    return
  }
  func.func @transform_0(%arg0: i32) -> (i32, i32) {
    %c0_i32 = arith.constant 0 : i32
    %c0_i32_0 = arith.constant 0 : i32
    return %arg0, %c0_i32 : i32, i32
  }
  func.func @transform_1(%arg0: i32) -> (i32, i32) {
    %c0_i32 = arith.constant 0 : i32
    %c0_i32_0 = arith.constant 0 : i32
    return %arg0, %c0_i32 : i32, i32
  }
  func.func @transform_2(%arg0: i32) -> (i32, i32) {
    %c0_i32 = arith.constant 0 : i32
    %c0_i32_0 = arith.constant 0 : i32
    %c0_i32_1 = arith.constant 0 : i32
    return %c0_i32, %c0_i32_0 : i32, i32
  }
  func.func @transform_3(%arg0: i32) -> (i32, i32) {
    %c0_i32 = arith.constant 0 : i32
    %c0_i32_0 = arith.constant 0 : i32
    %c0_i32_1 = arith.constant 0 : i32
    return %c0_i32, %c0_i32_0 : i32, i32
  }
  func.func @transform_4(%arg0: i32) -> (i32, i32) {
    %c0_i32 = arith.constant 0 : i32
    %c0_i32_0 = arith.constant 0 : i32
    %c0_i32_1 = arith.constant 0 : i32
    return %c0_i32, %c0_i32_0 : i32, i32
  }
  func.func @transform_5(%arg0: i32) -> (i32, i32) {
    %c0_i32 = arith.constant 0 : i32
    %c0_i32_0 = arith.constant 0 : i32
    %c0_i32_1 = arith.constant 0 : i32
    return %c0_i32, %c0_i32_0 : i32, i32
  }
  func.func @transform_6(%arg0: i32) -> (i32, i32) {
    %c0_i32 = arith.constant 0 : i32
    %c0_i32_0 = arith.constant 0 : i32
    %c0_i32_1 = arith.constant 0 : i32
    return %c0_i32, %c0_i32_0 : i32, i32
  }
  func.func @transform_7(%arg0: i32) -> (i32, i32) {
    %c0_i32 = arith.constant 0 : i32
    %c0_i32_0 = arith.constant 0 : i32
    %c0_i32_1 = arith.constant 0 : i32
    return %c0_i32, %c0_i32_0 : i32, i32
  }
  func.func @transform_11(%arg0: i32) -> (i32, i32) {
    %c0_i32 = arith.constant 0 : i32
    %c0_i32_0 = arith.constant 0 : i32
    return %arg0, %c0_i32 : i32, i32
  }
}

</mosaic_0001>

<llo_original>
// kernel: tpu_custom_call.1
$region0: #{tpu_custom_call.1}
  #allocation0 [shape = 'u32[]', space=smem, size = 0x4, offset = 0x4, fixed_abs, tag = 'smem constant byte address 0x4 - core index']
  #allocation1 [shape = 'u32[144,128]{1,0:T(1,128)}', space=vmem, size = 0x12000, scoped, tag = 'internal scratch']
  #allocation2 [shape = 'bf16[512,512]{1,0:T(16,128)(2,1)}', space=vmem, size = 0x80000, scoped, tag = 'scratch operand']
  #allocation3 [shape = 'bf16[512,256]{1,0:T(16,128)(2,1)}', space=vmem, size = 0x40000, scoped, tag = 'scratch operand']
  #allocation4 [shape = 'bf16[256,128]{1,0:T(16,128)(2,1)}', space=vmem, size = 0x10000, scoped, tag = 'scratch operand']
  #allocation5 [shape = 's32[3]{0}', space=sflag, size = 0xc, scoped, tag = 'scratch operand']
  #allocation15 [shape = 's32[]', space=sflag, size = 0x4, offset = 0, fixed_abs, tag = 'sflag constant byte address 0x0 - dummy sync flag']
  #allocation17 [shape = 's32[]', space=sflag, size = 0x4, offset = 0, fixed_abs, tag = 'sflag constant byte address 0x0 - dummy sync flag']
  #allocation19 [shape = 's32[]', space=sflag, size = 0x4, offset = 0, fixed_abs, tag = 'sflag constant byte address 0x0 - dummy sync flag']
  #allocation20 [shape = 's32[]', space=sflag, size = 0x4, offset = 0, fixed_abs, tag = 'sflag constant byte address 0x0 - dummy sync flag']
  #allocation21 [shape = 'u32[]', space=smem, size = 0x4, offset = 0x44, fixed_abs, tag = 'smem constant byte address 0x44 - assertion arg 0']
  #allocation22 [shape = 'u32[]', space=smem, size = 0x4, offset = 0x48, fixed_abs, tag = 'smem constant byte address 0x48 - assertion arg 1']
  %s0 = inlined_call_operand.hbm [shape: bf16[16,1024], index: 0, kind: input, shape index: {}]
  %s1 = inlined_call_operand.hbm [shape: bf16[16,768], index: 1, kind: input, shape index: {}]
  %s2 = inlined_call_operand.hbm [shape: bf16[1024,512], index: 2, kind: input, shape index: {}]
  %s3 = inlined_call_operand.hbm [shape: bf16[768,512], index: 3, kind: input, shape index: {}]
  %s4 = inlined_call_operand.vmem [shape: f32[1,512], index: 4, kind: input, shape index: {}]
  %s5 = inlined_call_operand.vmem [shape: f32[1,512], index: 5, kind: input, shape index: {}]
  %s6 = inlined_call_operand.vmem [shape: f32[1,256], index: 6, kind: input, shape index: {}]
  %s7 = inlined_call_operand.vmem [shape: f32[1,128], index: 7, kind: input, shape index: {}]
  %s8 = inlined_call_operand.hbm [shape: bf16[512,512], index: 8, kind: input, shape index: {}]
  %s9 = inlined_call_operand.hbm [shape: bf16[512,256], index: 9, kind: input, shape index: {}]
  %s10 = inlined_call_operand.hbm [shape: bf16[256,128], index: 10, kind: input, shape index: {}]
  %s11 = inlined_call_operand.hbm [shape: bf16[16,128], index: 11, kind: output, shape index: {}]
  %s12 = sld [smem:[#allocation0]]
  $region62: #{tpu_custom_call.1} parent=0
    _
  %s14 = ssub.s32 1, %s12
  %s15 = scalar_select 0, %s14, %s12
  $region1: #{tpu_custom_call.1} parent=0
    #allocation6 [shape = 'u8[32768]{0}', space=vmem, size = 0x8000, scoped, tag = 'input window, operand 0, single buffered']
    #allocation7 [shape = 's32[1]{0}', space=sflag, size = 0x4, scoped, tag = 'scoped memory for tpu_custom_call.1']
    #allocation8 [shape = 's32[1]{0}', space=sflag, size = 0x4, scoped, tag = 'scoped memory for tpu_custom_call.1']
    #allocation9 [shape = 'u8[24576]{0}', space=vmem, size = 0x6000, scoped, tag = 'input window, operand 1, single buffered']
    #allocation10 [shape = 's32[1]{0}', space=sflag, size = 0x4, scoped, tag = 'scoped memory for tpu_custom_call.1']
    #allocation11 [shape = 'u8[1048576]{0}', space=vmem, size = 0x100000, scoped, tag = 'input window, operand 2, single buffered']
    #allocation12 [shape = 'u8[786432]{0}', space=vmem, size = 0xc0000, scoped, tag = 'input window, operand 3, single buffered']
    #allocation13 [shape = 's32[1]{0}', space=sflag, size = 0x4, scoped, tag = 'scoped memory for tpu_custom_call.1']
    #allocation14 [shape = 'u8[4096]{0}', space=vmem, size = 0x1000, scoped, tag = 'output window, operand 0, single buffered']
    #allocation16 [shape = 'u32[9]{0}', space=smem, size = 0x24, scoped, tag = 'DMA stride descriptor']
    #allocation18 [shape = 'u32[9]{0}', space=smem, size = 0x24, scoped, tag = 'DMA stride descriptor']
    %16 = vsyncpa [#allocation7], 0
    %17 = vsyncpa [#allocation10], 0
    %18 = vsyncpa [#allocation13], 0
    %19 = vsyncpa [#allocation8], 0
    // Predicated region
    $region2: #{tpu_custom_call.1} parent=1 // pred_check
      _
    $region3: #{tpu_custom_call.1} parent=1 // pred_check_branch
      %21 = sbr.rel (0) target = $region5
    $region4: #{tpu_custom_call.1} parent=1 // pred_region
      %s23 = ssub.s32 1024, 1024
      %24 = vsyncadd [#allocation7], %s23
      %s25 = sshll.u32 [#allocation6], 4
      %s26 = int_to_ptr.vmem [resolvable:$true] %s25
      %31 = dma.hbm_to_vmem [thread:$0]  %s0, 1024, %s26, [#allocation7], 512, 512, 32
    $region5: #{tpu_custom_call.1} parent=1 // pred_fallthru
      _
    // Predicated region
    $region6: #{tpu_custom_call.1} parent=1 // pred_check
      _
    $region7: #{tpu_custom_call.1} parent=1 // pred_check_branch
      %33 = sbr.rel (0) target = $region9
    $region8: #{tpu_custom_call.1} parent=1 // pred_region
      %s35 = ssub.s32 768, 768
      %36 = vsyncadd [#allocation10], %s35
      %s37 = sshll.u32 [#allocation9], 4
      %s38 = int_to_ptr.vmem [resolvable:$true] %s37
      %43 = dma.hbm_to_vmem [thread:$0]  %s1, 768, %s38, [#allocation10], 384, 384, 24
    $region9: #{tpu_custom_call.1} parent=1 // pred_fallthru
      _
    // Predicated region
    $region10: #{tpu_custom_call.1} parent=1 // pred_check
      _
    $region11: #{tpu_custom_call.1} parent=1 // pred_check_branch
      %45 = sbr.rel (0) target = $region13
    $region12: #{tpu_custom_call.1} parent=1 // pred_region
      %s47 = ssub.s32 32768, 32768
      %48 = vsyncadd [#allocation10], %s47
      %s49 = sshll.u32 [#allocation11], 4
      %s50 = int_to_ptr.vmem [resolvable:$true] %s49
      %55 = dma.hbm_to_vmem [thread:$0]  %s2, 32768, %s50, [#allocation10], 256, 256, 16
    $region13: #{tpu_custom_call.1} parent=1 // pred_fallthru
      _
    // Predicated region
    $region14: #{tpu_custom_call.1} parent=1 // pred_check
      _
    $region15: #{tpu_custom_call.1} parent=1 // pred_check_branch
      %57 = sbr.rel (0) target = $region17
    $region16: #{tpu_custom_call.1} parent=1 // pred_region
      %s59 = ssub.s32 24576, 24576
      %60 = vsyncadd [#allocation13], %s59
      %s61 = sshll.u32 [#allocation12], 4
      %s62 = int_to_ptr.vmem [resolvable:$true] %s61
      %67 = dma.hbm_to_vmem [thread:$0]  %s3, 24576, %s62, [#allocation13], 256, 256, 16
    $region17: #{tpu_custom_call.1} parent=1 // pred_fallthru
      _
    // Predicated region
    $region18: #{tpu_custom_call.1} parent=1 // pred_check
      _
    $region19: #{tpu_custom_call.1} parent=1 // pred_check_branch
      %69 = sbr.rel (0) target = $region21
    $region20: #{tpu_custom_call.1} parent=1 // pred_region
      _
    $region21: #{tpu_custom_call.1} parent=1 // pred_fallthru
      _
    // Predicated region
    $region22: #{tpu_custom_call.1} parent=1 // pred_check
      _
    $region23: #{tpu_custom_call.1} parent=1 // pred_check_branch
      %71 = sbr.rel (0) target = $region25
    $region24: #{tpu_custom_call.1} parent=1 // pred_region
      _
    $region25: #{tpu_custom_call.1} parent=1 // pred_fallthru
      _
    // Predicated region
    $region26: #{tpu_custom_call.1} parent=1 // pred_check
      _
    $region27: #{tpu_custom_call.1} parent=1 // pred_check_branch
      %73 = sbr.rel (0) target = $region29
    $region28: #{tpu_custom_call.1} parent=1 // pred_region
      _
    $region29: #{tpu_custom_call.1} parent=1 // pred_fallthru
      _
    // Predicated region
    $region30: #{tpu_custom_call.1} parent=1 // pred_check
      _
    $region31: #{tpu_custom_call.1} parent=1 // pred_check_branch
      %75 = sbr.rel (0) target = $region33
    $region32: #{tpu_custom_call.1} parent=1 // pred_region
      _
    $region33: #{tpu_custom_call.1} parent=1 // pred_fallthru
      _
    // Predicated region
    $region34: #{tpu_custom_call.1} parent=1 // pred_check
      _
    $region35: #{tpu_custom_call.1} parent=1 // pred_check_branch
      %77 = sbr.rel (0) target = $region37
    $region36: #{tpu_custom_call.1} parent=1 // pred_region
      %78 = dma.done [#allocation7], 1024
    $region37: #{tpu_custom_call.1} parent=1 // pred_fallthru
      _
    // Predicated region
    $region38: #{tpu_custom_call.1} parent=1 // pred_check
      _
    $region39: #{tpu_custom_call.1} parent=1 // pred_check_branch
      %80 = sbr.rel (0) target = $region41
    $region40: #{tpu_custom_call.1} parent=1 // pred_region
      %81 = dma.done [#allocation10], 768
    $region41: #{tpu_custom_call.1} parent=1 // pred_fallthru
      _
    // Predicated region
    $region42: #{tpu_custom_call.1} parent=1 // pred_check
      _
    $region43: #{tpu_custom_call.1} parent=1 // pred_check_branch
      %83 = sbr.rel (0) target = $region45
    $region44: #{tpu_custom_call.1} parent=1 // pred_region
      %84 = dma.done [#allocation10], 32768
    $region45: #{tpu_custom_call.1} parent=1 // pred_fallthru
      _
    // Predicated region
    $region46: #{tpu_custom_call.1} parent=1 // pred_check
      _
    $region47: #{tpu_custom_call.1} parent=1 // pred_check_branch
      %86 = sbr.rel (0) target = $region49
    $region48: #{tpu_custom_call.1} parent=1 // pred_region
      %87 = dma.done [#allocation13], 24576
    $region49: #{tpu_custom_call.1} parent=1 // pred_fallthru
      _
    %s90 = sshll.u32 1, 14
    %s91 = sxor.u32 4294967295, %s90
    %s93 = sld [smem:[#allocation0]]
    %s94 = sadd.s32 2, %s93
    %s96 = sshll.u32 7, 26
    %s97 = sxor.u32 4294967295, %s96
    %s98 = sand.u32 0, %s97
    %s99 = sshll.u32 %s94, 26
    %s100 = sor.u32 %s98, %s99
    %s101 = sshll.u32 [#allocation2], 4
    %s102 = int_to_ptr.vmem [resolvable:$true] %s101
    %105 = sst [smem:[#allocation16]] 512
    %s106 = scalar_lea.smem [#allocation16], 1
    %107 = sst [smem:[%s106]] 512
    %s108 = scalar_lea.smem [#allocation16], 2
    %109 = sst [smem:[%s108]] 4
    %s110 = scalar_lea.smem [#allocation16], 3
    %111 = sst [smem:[%s110]] 64
    %s112 = scalar_lea.smem [#allocation16], 4
    %113 = sst [smem:[%s112]] 128
    %s114 = scalar_lea.smem [#allocation16], 5
    %115 = sst [smem:[%s114]] 2
    %s116 = scalar_lea.smem [#allocation16], 6
    %117 = sst [smem:[%s116]] 256
    %s118 = scalar_lea.smem [#allocation16], 7
    %119 = sst [smem:[%s118]] 64
    %s120 = scalar_lea.smem [#allocation16], 8
    %121 = sst [smem:[%s120]] 4
    %123 = dma.general %s8, 16384, %s102, [#allocation5], [#allocation15], [#allocation16], %s100, 0
    %s124 = scalar_lea.sflag [#allocation5], 1
    %s126 = sshll.u32 1, 14
    %s127 = sxor.u32 4294967295, %s126
    %s129 = sadd.s32 2, %s93
    %s131 = sshll.u32 7, 26
    %s132 = sxor.u32 4294967295, %s131
    %s133 = sand.u32 0, %s132
    %s134 = sshll.u32 %s129, 26
    %s135 = sor.u32 %s133, %s134
    %s136 = sshll.u32 [#allocation3], 4
    %s137 = int_to_ptr.vmem [resolvable:$true] %s136
    %140 = sst [smem:[#allocation18]] 256
    %s141 = scalar_lea.smem [#allocation18], 1
    %142 = sst [smem:[%s141]] 256
    %s143 = scalar_lea.smem [#allocation18], 2
    %144 = sst [smem:[%s143]] 2
    %s145 = scalar_lea.smem [#allocation18], 3
    %146 = sst [smem:[%s145]] 64
    %s147 = scalar_lea.smem [#allocation18], 4
    %148 = sst [smem:[%s147]] 128
    %s149 = scalar_lea.smem [#allocation18], 5
    %150 = sst [smem:[%s149]] 2
    %s151 = scalar_lea.smem [#allocation18], 6
    %152 = sst [smem:[%s151]] 128
    %s153 = scalar_lea.smem [#allocation18], 7
    %154 = sst [smem:[%s153]] 64
    %s155 = scalar_lea.smem [#allocation18], 8
    %156 = sst [smem:[%s155]] 4
    %158 = dma.general %s9, 8192, %s137, %s124, [#allocation17], [#allocation18], %s135, 0
    %s159 = scalar_lea.sflag [#allocation5], 2
    // Predicated region
    $region50: #{tpu_custom_call.1} parent=1 // pred_check
      _
    $region51: #{tpu_custom_call.1} parent=1 // pred_check_branch
      %161 = sbr.rel target = $region53
    $region52: #{tpu_custom_call.1} parent=1 // pred_region
      %162 = sst [smem:[#allocation21]] [#allocation20]
      %163 = sst [smem:[#allocation22]] [#allocation19]
    $region53: #{tpu_custom_call.1} parent=1 // pred_fallthru
      _
    %165 = shalt.err (0)
    %s167 = sshll.u32 [#allocation4], 4
    %s168 = int_to_ptr.vmem [resolvable:$true] %s167
    %170 = dma.hbm_to_vmem [thread:$0]  %s10, 2048, %s168, %s159
    %v171 = vld [vmem:[#allocation6] sm:$0xff]
    %v172 = vld [vmem:[#allocation6 + $0x8] sm:$0xff]
    %v173 = vld [vmem:[#allocation6 + $0x10] sm:$0xff]
    %v174 = vld [vmem:[#allocation6 + $0x18] sm:$0xff]
    %v175 = vld [vmem:[#allocation6 + $0x20] sm:$0xff]
    %v176 = vld [vmem:[#allocation6 + $0x28] sm:$0xff]
    %v177 = vld [vmem:[#allocation6 + $0x30] sm:$0xff]
    %v178 = vld [vmem:[#allocation6 + $0x38] sm:$0xff]
    %v179 = vld [vmem:[#allocation9] sm:$0xff]
    %v180 = vld [vmem:[#allocation9 + $0x8] sm:$0xff]
    %v181 = vld [vmem:[#allocation9 + $0x10] sm:$0xff]
    %v182 = vld [vmem:[#allocation9 + $0x18] sm:$0xff]
    %v183 = vld [vmem:[#allocation9 + $0x20] sm:$0xff]
    %v184 = vld [vmem:[#allocation9 + $0x28] sm:$0xff]
    %v185 = vld [vmem:[#allocation11] sm:$0xff]
    %v186 = vld [vmem:[#allocation11 + $0x8] sm:$0xff]
    %v187 = vld [vmem:[#allocation11 + $0x10] sm:$0xff]
    %v188 = vld [vmem:[#allocation11 + $0x18] sm:$0xff]
    %v189 = vld [vmem:[#allocation11 + $0x20] sm:$0xff]
    %v190 = vld [vmem:[#allocation11 + $0x28] sm:$0xff]
    %v191 = vld [vmem:[#allocation11 + $0x30] sm:$0xff]
    %v192 = vld [vmem:[#allocation11 + $0x38] sm:$0xff]
    %v193 = vld [vmem:[#allocation11 + $0x40] sm:$0xff]
    %v194 = vld [vmem:[#allocation11 + $0x48] sm:$0xff]
    %v195 = vld [vmem:[#allocation11 + $0x50] sm:$0xff]
    %v196 = vld [vmem:[#allocation11 + $0x58] sm:$0xff]
    %v197 = vld [vmem:[#allocation11 + $0x60] sm:$0xff]
    %v198 = vld [vmem:[#allocation11 + $0x68] sm:$0xff]
    %v199 = vld [vmem:[#allocation11 + $0x70] sm:$0xff]
    %v200 = vld [vmem:[#allocation11 + $0x78] sm:$0xff]
    %v201 = vld [vmem:[#allocation11 + $0x80] sm:$0xff]
    %v202 = vld [vmem:[#allocation11 + $0x88] sm:$0xff]
    %v203 = vld [vmem:[#allocation11 + $0x90] sm:$0xff]
    %v204 = vld [vmem:[#allocation11 + $0x98] sm:$0xff]
    %v205 = vld [vmem:[#allocation11 + $0xa0] sm:$0xff]
    %v206 = vld [vmem:[#allocation11 + $0xa8] sm:$0xff]
    %v207 = vld [vmem:[#allocation11 + $0xb0] sm:$0xff]
    %v208 = vld [vmem:[#allocation11 + $0xb8] sm:$0xff]
    %v209 = vld [vmem:[#allocation11 + $0xc0] sm:$0xff]
    %v210 = vld [vmem:[#allocation11 + $0xc8] sm:$0xff]
    %v211 = vld [vmem:[#allocation11 + $0xd0] sm:$0xff]
    %v212 = vld [vmem:[#allocation11 + $0xd8] sm:$0xff]
    %v213 = vld [vmem:[#allocation11 + $0xe0] sm:$0xff]
    %v214 = vld [vmem:[#allocation11 + $0xe8] sm:$0xff]
    %v215 = vld [vmem:[#allocation11 + $0xf0] sm:$0xff]
    %v216 = vld [vmem:[#allocation11 + $0xf8] sm:$0xff]
    %v217 = vld [vmem:[#allocation11 + $0x100] sm:$0xff]
    %v218 = vld [vmem:[#allocation11 + $0x108] sm:$0xff]
    %v219 = vld [vmem:[#allocation11 + $0x110] sm:$0xff]
    %v220 = vld [vmem:[#allocation11 + $0x118] sm:$0xff]
    %v221 = vld [vmem:[#allocation11 + $0x120] sm:$0xff]
    %v222 = vld [vmem:[#allocation11 + $0x128] sm:$0xff]
    %v223 = vld [vmem:[#allocation11 + $0x130] sm:$0xff]
    %v224 = vld [vmem:[#allocation11 + $0x138] sm:$0xff]
    %v225 = vld [vmem:[#allocation11 + $0x140] sm:$0xff]
    %v226 = vld [vmem:[#allocation11 + $0x148] sm:$0xff]
    %v227 = vld [vmem:[#allocation11 + $0x150] sm:$0xff]
    %v228 = vld [vmem:[#allocation11 + $0x158] sm:$0xff]
    %v229 = vld [vmem:[#allocation11 + $0x160] sm:$0xff]
    %v230 = vld [vmem:[#allocation11 + $0x168] sm:$0xff]
    %v231 = vld [vmem:[#allocation11 + $0x170] sm:$0xff]
    %v232 = vld [vmem:[#allocation11 + $0x178] sm:$0xff]
    %v233 = vld [vmem:[#allocation11 + $0x180] sm:$0xff]
    %v234 = vld [vmem:[#allocation11 + $0x188] sm:$0xff]
    %v235 = vld [vmem:[#allocation11 + $0x190] sm:$0xff]
    %v236 = vld [vmem:[#allocation11 + $0x198] sm:$0xff]
    %v237 = vld [vmem:[#allocation11 + $0x1a0] sm:$0xff]
    %v238 = vld [vmem:[#allocation11 + $0x1a8] sm:$0xff]
    %v239 = vld [vmem:[#allocation11 + $0x1b0] sm:$0xff]
    %v240 = vld [vmem:[#allocation11 + $0x1b8] sm:$0xff]
    %v241 = vld [vmem:[#allocation11 + $0x1c0] sm:$0xff]
    %v242 = vld [vmem:[#allocation11 + $0x1c8] sm:$0xff]
    %v243 = vld [vmem:[#allocation11 + $0x1d0] sm:$0xff]
    %v244 = vld [vmem:[#allocation11 + $0x1d8] sm:$0xff]
    %v245 = vld [vmem:[#allocation11 + $0x1e0] sm:$0xff]
    %v246 = vld [vmem:[#allocation11 + $0x1e8] sm:$0xff]
    %v247 = vld [vmem:[#allocation11 + $0x1f0] sm:$0xff]
    %v248 = vld [vmem:[#allocation11 + $0x1f8] sm:$0xff]
    %v249 = vld [vmem:[#allocation11 + $0x200] sm:$0xff]
    %v250 = vld [vmem:[#allocation11 + $0x208] sm:$0xff]
    %v251 = vld [vmem:[#allocation11 + $0x210] sm:$0xff]
    %v252 = vld [vmem:[#allocation11 + $0x218] sm:$0xff]
    %v253 = vld [vmem:[#allocation11 + $0x220] sm:$0xff]
    %v254 = vld [vmem:[#allocation11 + $0x228] sm:$0xff]
    %v255 = vld [vmem:[#allocation11 + $0x230] sm:$0xff]
    %v256 = vld [vmem:[#allocation11 + $0x238] sm:$0xff]
    %v257 = vld [vmem:[#allocation11 + $0x240] sm:$0xff]
    %v258 = vld [vmem:[#allocation11 + $0x248] sm:$0xff]
    %v259 = vld [vmem:[#allocation11 + $0x250] sm:$0xff]
    %v260 = vld [vmem:[#allocation11 + $0x258] sm:$0xff]
    %v261 = vld [vmem:[#allocation11 + $0x260] sm:$0xff]
    %v262 = vld [vmem:[#allocation11 + $0x268] sm:$0xff]
    %v263 = vld [vmem:[#allocation11 + $0x270] sm:$0xff]
    %v264 = vld [vmem:[#allocation11 + $0x278] sm:$0xff]
    %v265 = vld [vmem:[#allocation11 + $0x280] sm:$0xff]
    %v266 = vld [vmem:[#allocation11 + $0x288] sm:$0xff]
    %v267 = vld [vmem:[#allocation11 + $0x290] sm:$0xff]
    %v268 = vld [vmem:[#allocation11 + $0x298] sm:$0xff]
    %v269 = vld [vmem:[#allocation11 + $0x2a0] sm:$0xff]
    %v270 = vld [vmem:[#allocation11 + $0x2a8] sm:$0xff]
    %v271 = vld [vmem:[#allocation11 + $0x2b0] sm:$0xff]
    %v272 = vld [vmem:[#allocation11 + $0x2b8] sm:$0xff]
    %v273 = vld [vmem:[#allocation11 + $0x2c0] sm:$0xff]
    %v274 = vld [vmem:[#allocation11 + $0x2c8] sm:$0xff]
    %v275 = vld [vmem:[#allocation11 + $0x2d0] sm:$0xff]
    %v276 = vld [vmem:[#allocation11 + $0x2d8] sm:$0xff]
    %v277 = vld [vmem:[#allocation11 + $0x2e0] sm:$0xff]
    %v278 = vld [vmem:[#allocation11 + $0x2e8] sm:$0xff]
    %v279 = vld [vmem:[#allocation11 + $0x2f0] sm:$0xff]
    %v280 = vld [vmem:[#allocation11 + $0x2f8] sm:$0xff]
    %v281 = vld [vmem:[#allocation11 + $0x300] sm:$0xff]
    %v282 = vld [vmem:[#allocation11 + $0x308] sm:$0xff]
    %v283 = vld [vmem:[#allocation11 + $0x310] sm:$0xff]
    %v284 = vld [vmem:[#allocation11 + $0x318] sm:$0xff]
    %v285 = vld [vmem:[#allocation11 + $0x320] sm:$0xff]
    %v286 = vld [vmem:[#allocation11 + $0x328] sm:$0xff]
    %v287 = vld [vmem:[#allocation11 + $0x330] sm:$0xff]
    %v288 = vld [vmem:[#allocation11 + $0x338] sm:$0xff]
    %v289 = vld [vmem:[#allocation11 + $0x340] sm:$0xff]
    %v290 = vld [vmem:[#allocation11 + $0x348] sm:$0xff]
    %v291 = vld [vmem:[#allocation11 + $0x350] sm:$0xff]
    %v292 = vld [vmem:[#allocation11 + $0x358] sm:$0xff]
    %v293 = vld [vmem:[#allocation11 + $0x360] sm:$0xff]
    %v294 = vld [vmem:[#allocation11 + $0x368] sm:$0xff]
    %v295 = vld [vmem:[#allocation11 + $0x370] sm:$0xff]
    %v296 = vld [vmem:[#allocation11 + $0x378] sm:$0xff]
    %v297 = vld [vmem:[#allocation11 + $0x380] sm:$0xff]
    %v298 = vld [vmem:[#allocation11 + $0x388] sm:$0xff]
    %v299 = vld [vmem:[#allocation11 + $0x390] sm:$0xff]
    %v300 = vld [vmem:[#allocation11 + $0x398] sm:$0xff]
    %v301 = vld [vmem:[#allocation11 + $0x3a0] sm:$0xff]
    %v302 = vld [vmem:[#allocation11 + $0x3a8] sm:$0xff]
    %v303 = vld [vmem:[#allocation11 + $0x3b0] sm:$0xff]
    %v304 = vld [vmem:[#allocation11 + $0x3b8] sm:$0xff]
    %v305 = vld [vmem:[#allocation11 + $0x3c0] sm:$0xff]
    %v306 = vld [vmem:[#allocation11 + $0x3c8] sm:$0xff]
    %v307 = vld [vmem:[#allocation11 + $0x3d0] sm:$0xff]
    %v308 = vld [vmem:[#allocation11 + $0x3d8] sm:$0xff]
    %v309 = vld [vmem:[#allocation11 + $0x3e0] sm:$0xff]
    %v310 = vld [vmem:[#allocation11 + $0x3e8] sm:$0xff]
    %v311 = vld [vmem:[#allocation11 + $0x3f0] sm:$0xff]
    %v312 = vld [vmem:[#allocation11 + $0x3f8] sm:$0xff]
    %v313 = vld [vmem:[#allocation11 + $0x400] sm:$0xff]
    %v314 = vld [vmem:[#allocation11 + $0x408] sm:$0xff]
    %v315 = vld [vmem:[#allocation11 + $0x410] sm:$0xff]
    %v316 = vld [vmem:[#allocation11 + $0x418] sm:$0xff]
    %v317 = vld [vmem:[#allocation11 + $0x420] sm:$0xff]
    %v318 = vld [vmem:[#allocation11 + $0x428] sm:$0xff]
    %v319 = vld [vmem:[#allocation11 + $0x430] sm:$0xff]
    %v320 = vld [vmem:[#allocation11 + $0x438] sm:$0xff]
    %v321 = vld [vmem:[#allocation11 + $0x440] sm:$0xff]
    %v322 = vld [vmem:[#allocation11 + $0x448] sm:$0xff]
    %v323 = vld [vmem:[#allocation11 + $0x450] sm:$0xff]
    %v324 = vld [vmem:[#allocation11 + $0x458] sm:$0xff]
    %v325 = vld [vmem:[#allocation11 + $0x460] sm:$0xff]
    %v326 = vld [vmem:[#allocation11 + $0x468] sm:$0xff]
    %v327 = vld [vmem:[#allocation11 + $0x470] sm:$0xff]
    %v328 = vld [vmem:[#allocation11 + $0x478] sm:$0xff]
    %v329 = vld [vmem:[#allocation11 + $0x480] sm:$0xff]
    %v330 = vld [vmem:[#allocation11 + $0x488] sm:$0xff]
    %v331 = vld [vmem:[#allocation11 + $0x490] sm:$0xff]
    %v332 = vld [vmem:[#allocation11 + $0x498] sm:$0xff]
    %v333 = vld [vmem:[#allocation11 + $0x4a0] sm:$0xff]
    %v334 = vld [vmem:[#allocation11 + $0x4a8] sm:$0xff]
    %v335 = vld [vmem:[#allocation11 + $0x4b0] sm:$0xff]
    %v336 = vld [vmem:[#allocation11 + $0x4b8] sm:$0xff]
    %v337 = vld [vmem:[#allocation11 + $0x4c0] sm:$0xff]
    %v338 = vld [vmem:[#allocation11 + $0x4c8] sm:$0xff]
    %v339 = vld [vmem:[#allocation11 + $0x4d0] sm:$0xff]
    %v340 = vld [vmem:[#allocation11 + $0x4d8] sm:$0xff]
    %v341 = vld [vmem:[#allocation11 + $0x4e0] sm:$0xff]
    %v342 = vld [vmem:[#allocation11 + $0x4e8] sm:$0xff]
    %v343 = vld [vmem:[#allocation11 + $0x4f0] sm:$0xff]
    %v344 = vld [vmem:[#allocation11 + $0x4f8] sm:$0xff]
    %v345 = vld [vmem:[#allocation11 + $0x500] sm:$0xff]
    %v346 = vld [vmem:[#allocation11 + $0x508] sm:$0xff]
    %v347 = vld [vmem:[#allocation11 + $0x510] sm:$0xff]
    %v348 = vld [vmem:[#allocation11 + $0x518] sm:$0xff]
    %v349 = vld [vmem:[#allocation11 + $0x520] sm:$0xff]
    %v350 = vld [vmem:[#allocation11 + $0x528] sm:$0xff]
    %v351 = vld [vmem:[#allocation11 + $0x530] sm:$0xff]
    %v352 = vld [vmem:[#allocation11 + $0x538] sm:$0xff]
    %v353 = vld [vmem:[#allocation11 + $0x540] sm:$0xff]
    %v354 = vld [vmem:[#allocation11 + $0x548] sm:$0xff]
    %v355 = vld [vmem:[#allocation11 + $0x550] sm:$0xff]
    %v356 = vld [vmem:[#allocation11 + $0x558] sm:$0xff]
    %v357 = vld [vmem:[#allocation11 + $0x560] sm:$0xff]
    %v358 = vld [vmem:[#allocation11 + $0x568] sm:$0xff]
    %v359 = vld [vmem:[#allocation11 + $0x570] sm:$0xff]
    %v360 = vld [vmem:[#allocation11 + $0x578] sm:$0xff]
    %v361 = vld [vmem:[#allocation11 + $0x580] sm:$0xff]
    %v362 = vld [vmem:[#allocation11 + $0x588] sm:$0xff]
    %v363 = vld [vmem:[#allocation11 + $0x590] sm:$0xff]
    %v364 = vld [vmem:[#allocation11 + $0x598] sm:$0xff]
    %v365 = vld [vmem:[#allocation11 + $0x5a0] sm:$0xff]
    %v366 = vld [vmem:[#allocation11 + $0x5a8] sm:$0xff]
    %v367 = vld [vmem:[#allocation11 + $0x5b0] sm:$0xff]
    %v368 = vld [vmem:[#allocation11 + $0x5b8] sm:$0xff]
    %v369 = vld [vmem:[#allocation11 + $0x5c0] sm:$0xff]
    %v370 = vld [vmem:[#allocation11 + $0x5c8] sm:$0xff]
    %v371 = vld [vmem:[#allocation11 + $0x5d0] sm:$0xff]
    %v372 = vld [vmem:[#allocation11 + $0x5d8] sm:$0xff]
    %v373 = vld [vmem:[#allocation11 + $0x5e0] sm:$0xff]
    %v374 = vld [vmem:[#allocation11 + $0x5e8] sm:$0xff]
    %v375 = vld [vmem:[#allocation11 + $0x5f0] sm:$0xff]
    %v376 = vld [vmem:[#allocation11 + $0x5f8] sm:$0xff]
    %v377 = vld [vmem:[#allocation11 + $0x600] sm:$0xff]
    %v378 = vld [vmem:[#allocation11 + $0x608] sm:$0xff]
    %v379 = vld [vmem:[#allocation11 + $0x610] sm:$0xff]
    %v380 = vld [vmem:[#allocation11 + $0x618] sm:$0xff]
    %v381 = vld [vmem:[#allocation11 + $0x620] sm:$0xff]
    %v382 = vld [vmem:[#allocation11 + $0x628] sm:$0xff]
    %v383 = vld [vmem:[#allocation11 + $0x630] sm:$0xff]
    %v384 = vld [vmem:[#allocation11 + $0x638] sm:$0xff]
    %v385 = vld [vmem:[#allocation11 + $0x640] sm:$0xff]
    %v386 = vld [vmem:[#allocation11 + $0x648] sm:$0xff]
    %v387 = vld [vmem:[#allocation11 + $0x650] sm:$0xff]
    %v388 = vld [vmem:[#allocation11 + $0x658] sm:$0xff]
    %v389 = vld [vmem:[#allocation11 + $0x660] sm:$0xff]
    %v390 = vld [vmem:[#allocation11 + $0x668] sm:$0xff]
    %v391 = vld [vmem:[#allocation11 + $0x670] sm:$0xff]
    %v392 = vld [vmem:[#allocation11 + $0x678] sm:$0xff]
    %v393 = vld [vmem:[#allocation11 + $0x680] sm:$0xff]
    %v394 = vld [vmem:[#allocation11 + $0x688] sm:$0xff]
    %v395 = vld [vmem:[#allocation11 + $0x690] sm:$0xff]
    %v396 = vld [vmem:[#allocation11 + $0x698] sm:$0xff]
    %v397 = vld [vmem:[#allocation11 + $0x6a0] sm:$0xff]
    %v398 = vld [vmem:[#allocation11 + $0x6a8] sm:$0xff]
    %v399 = vld [vmem:[#allocation11 + $0x6b0] sm:$0xff]
    %v400 = vld [vmem:[#allocation11 + $0x6b8] sm:$0xff]
    %v401 = vld [vmem:[#allocation11 + $0x6c0] sm:$0xff]
    %v402 = vld [vmem:[#allocation11 + $0x6c8] sm:$0xff]
    %v403 = vld [vmem:[#allocation11 + $0x6d0] sm:$0xff]
    %v404 = vld [vmem:[#allocation11 + $0x6d8] sm:$0xff]
    %v405 = vld [vmem:[#allocation11 + $0x6e0] sm:$0xff]
    %v406 = vld [vmem:[#allocation11 + $0x6e8] sm:$0xff]
    %v407 = vld [vmem:[#allocation11 + $0x6f0] sm:$0xff]
    %v408 = vld [vmem:[#allocation11 + $0x6f8] sm:$0xff]
    %v409 = vld [vmem:[#allocation11 + $0x700] sm:$0xff]
    %v410 = vld [vmem:[#allocation11 + $0x708] sm:$0xff]
    %v411 = vld [vmem:[#allocation11 + $0x710] sm:$0xff]
    %v412 = vld [vmem:[#allocation11 + $0x718] sm:$0xff]
    %v413 = vld [vmem:[#allocation11 + $0x720] sm:$0xff]
    %v414 = vld [vmem:[#allocation11 + $0x728] sm:$0xff]
    %v415 = vld [vmem:[#allocation11 + $0x730] sm:$0xff]
    %v416 = vld [vmem:[#allocation11 + $0x738] sm:$0xff]
    %v417 = vld [vmem:[#allocation11 + $0x740] sm:$0xff]
    %v418 = vld [vmem:[#allocation11 + $0x748] sm:$0xff]
    %v419 = vld [vmem:[#allocation11 + $0x750] sm:$0xff]
    %v420 = vld [vmem:[#allocation11 + $0x758] sm:$0xff]
    %v421 = vld [vmem:[#allocation11 + $0x760] sm:$0xff]
    %v422 = vld [vmem:[#allocation11 + $0x768] sm:$0xff]
    %v423 = vld [vmem:[#allocation11 + $0x770] sm:$0xff]
    %v424 = vld [vmem:[#allocation11 + $0x778] sm:$0xff]
    %v425 = vld [vmem:[#allocation11 + $0x780] sm:$0xff]
    %v426 = vld [vmem:[#allocation11 + $0x788] sm:$0xff]
    %v427 = vld [vmem:[#allocation11 + $0x790] sm:$0xff]
    %v428 = vld [vmem:[#allocation11 + $0x798] sm:$0xff]
    %v429 = vld [vmem:[#allocation11 + $0x7a0] sm:$0xff]
    %v430 = vld [vmem:[#allocation11 + $0x7a8] sm:$0xff]
    %v431 = vld [vmem:[#allocation11 + $0x7b0] sm:$0xff]
    %v432 = vld [vmem:[#allocation11 + $0x7b8] sm:$0xff]
    %v433 = vld [vmem:[#allocation11 + $0x7c0] sm:$0xff]
    %v434 = vld [vmem:[#allocation11 + $0x7c8] sm:$0xff]
    %v435 = vld [vmem:[#allocation11 + $0x7d0] sm:$0xff]
    %v436 = vld [vmem:[#allocation11 + $0x7d8] sm:$0xff]
    %v437 = vld [vmem:[#allocation11 + $0x7e0] sm:$0xff]
    %v438 = vld [vmem:[#allocation11 + $0x7e8] sm:$0xff]
    %v439 = vld [vmem:[#allocation11 + $0x7f0] sm:$0xff]
    %v440 = vld [vmem:[#allocation11 + $0x7f8] sm:$0xff]
    %v441 = vld [vmem:[#allocation12] sm:$0xff]
    %v442 = vld [vmem:[#allocation12 + $0x8] sm:$0xff]
    %v443 = vld [vmem:[#allocation12 + $0x10] sm:$0xff]
    %v444 = vld [vmem:[#allocation12 + $0x18] sm:$0xff]
    %v445 = vld [vmem:[#allocation12 + $0x20] sm:$0xff]
    %v446 = vld [vmem:[#allocation12 + $0x28] sm:$0xff]
    %v447 = vld [vmem:[#allocation12 + $0x30] sm:$0xff]
    %v448 = vld [vmem:[#allocation12 + $0x38] sm:$0xff]
    %v449 = vld [vmem:[#allocation12 + $0x40] sm:$0xff]
    %v450 = vld [vmem:[#allocation12 + $0x48] sm:$0xff]
    %v451 = vld [vmem:[#allocation12 + $0x50] sm:$0xff]
    %v452 = vld [vmem:[#allocation12 + $0x58] sm:$0xff]
    %v453 = vld [vmem:[#allocation12 + $0x60] sm:$0xff]
    %v454 = vld [vmem:[#allocation12 + $0x68] sm:$0xff]
    %v455 = vld [vmem:[#allocation12 + $0x70] sm:$0xff]
    %v456 = vld [vmem:[#allocation12 + $0x78] sm:$0xff]
    %v457 = vld [vmem:[#allocation12 + $0x80] sm:$0xff]
    %v458 = vld [vmem:[#allocation12 + $0x88] sm:$0xff]
    %v459 = vld [vmem:[#allocation12 + $0x90] sm:$0xff]
    %v460 = vld [vmem:[#allocation12 + $0x98] sm:$0xff]
    %v461 = vld [vmem:[#allocation12 + $0xa0] sm:$0xff]
    %v462 = vld [vmem:[#allocation12 + $0xa8] sm:$0xff]
    %v463 = vld [vmem:[#allocation12 + $0xb0] sm:$0xff]
    %v464 = vld [vmem:[#allocation12 + $0xb8] sm:$0xff]
    %v465 = vld [vmem:[#allocation12 + $0xc0] sm:$0xff]
    %v466 = vld [vmem:[#allocation12 + $0xc8] sm:$0xff]
    %v467 = vld [vmem:[#allocation12 + $0xd0] sm:$0xff]
    %v468 = vld [vmem:[#allocation12 + $0xd8] sm:$0xff]
    %v469 = vld [vmem:[#allocation12 + $0xe0] sm:$0xff]
    %v470 = vld [vmem:[#allocation12 + $0xe8] sm:$0xff]
    %v471 = vld [vmem:[#allocation12 + $0xf0] sm:$0xff]
    %v472 = vld [vmem:[#allocation12 + $0xf8] sm:$0xff]
    %v473 = vld [vmem:[#allocation12 + $0x100] sm:$0xff]
    %v474 = vld [vmem:[#allocation12 + $0x108] sm:$0xff]
    %v475 = vld [vmem:[#allocation12 + $0x110] sm:$0xff]
    %v476 = vld [vmem:[#allocation12 + $0x118] sm:$0xff]
    %v477 = vld [vmem:[#allocation12 + $0x120] sm:$0xff]
    %v478 = vld [vmem:[#allocation12 + $0x128] sm:$0xff]
    %v479 = vld [vmem:[#allocation12 + $0x130] sm:$0xff]
    %v480 = vld [vmem:[#allocation12 + $0x138] sm:$0xff]
    %v481 = vld [vmem:[#allocation12 + $0x140] sm:$0xff]
    %v482 = vld [vmem:[#allocation12 + $0x148] sm:$0xff]
    %v483 = vld [vmem:[#allocation12 + $0x150] sm:$0xff]
    %v484 = vld [vmem:[#allocation12 + $0x158] sm:$0xff]
    %v485 = vld [vmem:[#allocation12 + $0x160] sm:$0xff]
    %v486 = vld [vmem:[#allocation12 + $0x168] sm:$0xff]
    %v487 = vld [vmem:[#allocation12 + $0x170] sm:$0xff]
    %v488 = vld [vmem:[#allocation12 + $0x178] sm:$0xff]
    %v489 = vld [vmem:[#allocation12 + $0x180] sm:$0xff]
    %v490 = vld [vmem:[#allocation12 + $0x188] sm:$0xff]
    %v491 = vld [vmem:[#allocation12 + $0x190] sm:$0xff]
    %v492 = vld [vmem:[#allocation12 + $0x198] sm:$0xff]
    %v493 = vld [vmem:[#allocation12 + $0x1a0] sm:$0xff]
    %v494 = vld [vmem:[#allocation12 + $0x1a8] sm:$0xff]
    %v495 = vld [vmem:[#allocation12 + $0x1b0] sm:$0xff]
    %v496 = vld [vmem:[#allocation12 + $0x1b8] sm:$0xff]
    %v497 = vld [vmem:[#allocation12 + $0x1c0] sm:$0xff]
    %v498 = vld [vmem:[#allocation12 + $0x1c8] sm:$0xff]
    %v499 = vld [vmem:[#allocation12 + $0x1d0] sm:$0xff]
    %v500 = vld [vmem:[#allocation12 + $0x1d8] sm:$0xff]
    %v501 = vld [vmem:[#allocation12 + $0x1e0] sm:$0xff]
    %v502 = vld [vmem:[#allocation12 + $0x1e8] sm:$0xff]
    %v503 = vld [vmem:[#allocation12 + $0x1f0] sm:$0xff]
    %v504 = vld [vmem:[#allocation12 + $0x1f8] sm:$0xff]
    %v505 = vld [vmem:[#allocation12 + $0x200] sm:$0xff]
    %v506 = vld [vmem:[#allocation12 + $0x208] sm:$0xff]
    %v507 = vld [vmem:[#allocation12 + $0x210] sm:$0xff]
    %v508 = vld [vmem:[#allocation12 + $0x218] sm:$0xff]
    %v509 = vld [vmem:[#allocation12 + $0x220] sm:$0xff]
    %v510 = vld [vmem:[#allocation12 + $0x228] sm:$0xff]
    %v511 = vld [vmem:[#allocation12 + $0x230] sm:$0xff]
    %v512 = vld [vmem:[#allocation12 + $0x238] sm:$0xff]
    %v513 = vld [vmem:[#allocation12 + $0x240] sm:$0xff]
    %v514 = vld [vmem:[#allocation12 + $0x248] sm:$0xff]
    %v515 = vld [vmem:[#allocation12 + $0x250] sm:$0xff]
    %v516 = vld [vmem:[#allocation12 + $0x258] sm:$0xff]
    %v517 = vld [vmem:[#allocation12 + $0x260] sm:$0xff]
    %v518 = vld [vmem:[#allocation12 + $0x268] sm:$0xff]
    %v519 = vld [vmem:[#allocation12 + $0x270] sm:$0xff]
    %v520 = vld [vmem:[#allocation12 + $0x278] sm:$0xff]
    %v521 = vld [vmem:[#allocation12 + $0x280] sm:$0xff]
    %v522 = vld [vmem:[#allocation12 + $0x288] sm:$0xff]
    %v523 = vld [vmem:[#allocation12 + $0x290] sm:$0xff]
    %v524 = vld [vmem:[#allocation12 + $0x298] sm:$0xff]
    %v525 = vld [vmem:[#allocation12 + $0x2a0] sm:$0xff]
    %v526 = vld [vmem:[#allocation12 + $0x2a8] sm:$0xff]
    %v527 = vld [vmem:[#allocation12 + $0x2b0] sm:$0xff]
    %v528 = vld [vmem:[#allocation12 + $0x2b8] sm:$0xff]
    %v529 = vld [vmem:[#allocation12 + $0x2c0] sm:$0xff]
    %v530 = vld [vmem:[#allocation12 + $0x2c8] sm:$0xff]
    %v531 = vld [vmem:[#allocation12 + $0x2d0] sm:$0xff]
    %v532 = vld [vmem:[#allocation12 + $0x2d8] sm:$0xff]
    %v533 = vld [vmem:[#allocation12 + $0x2e0] sm:$0xff]
    %v534 = vld [vmem:[#allocation12 + $0x2e8] sm:$0xff]
    %v535 = vld [vmem:[#allocation12 + $0x2f0] sm:$0xff]
    %v536 = vld [vmem:[#allocation12 + $0x2f8] sm:$0xff]
    %v537 = vld [vmem:[#allocation12 + $0x300] sm:$0xff]
    %v538 = vld [vmem:[#allocation12 + $0x308] sm:$0xff]
    %v539 = vld [vmem:[#allocation12 + $0x310] sm:$0xff]
    %v540 = vld [vmem:[#allocation12 + $0x318] sm:$0xff]
    %v541 = vld [vmem:[#allocation12 + $0x320] sm:$0xff]
    %v542 = vld [vmem:[#allocation12 + $0x328] sm:$0xff]
    %v543 = vld [vmem:[#allocation12 + $0x330] sm:$0xff]
    %v544 = vld [vmem:[#allocation12 + $0x338] sm:$0xff]
    %v545 = vld [vmem:[#allocation12 + $0x340] sm:$0xff]
    %v546 = vld [vmem:[#allocation12 + $0x348] sm:$0xff]
    %v547 = vld [vmem:[#allocation12 + $0x350] sm:$0xff]
    %v548 = vld [vmem:[#allocation12 + $0x358] sm:$0xff]
    %v549 = vld [vmem:[#allocation12 + $0x360] sm:$0xff]
    %v550 = vld [vmem:[#allocation12 + $0x368] sm:$0xff]
    %v551 = vld [vmem:[#allocation12 + $0x370] sm:$0xff]
    %v552 = vld [vmem:[#allocation12 + $0x378] sm:$0xff]
    %v553 = vld [vmem:[#allocation12 + $0x380] sm:$0xff]
    %v554 = vld [vmem:[#allocation12 + $0x388] sm:$0xff]
    %v555 = vld [vmem:[#allocation12 + $0x390] sm:$0xff]
    %v556 = vld [vmem:[#allocation12 + $0x398] sm:$0xff]
    %v557 = vld [vmem:[#allocation12 + $0x3a0] sm:$0xff]
    %v558 = vld [vmem:[#allocation12 + $0x3a8] sm:$0xff]
    %v559 = vld [vmem:[#allocation12 + $0x3b0] sm:$0xff]
    %v560 = vld [vmem:[#allocation12 + $0x3b8] sm:$0xff]
    %v561 = vld [vmem:[#allocation12 + $0x3c0] sm:$0xff]
    %v562 = vld [vmem:[#allocation12 + $0x3c8] sm:$0xff]
    %v563 = vld [vmem:[#allocation12 + $0x3d0] sm:$0xff]
    %v564 = vld [vmem:[#allocation12 + $0x3d8] sm:$0xff]
    %v565 = vld [vmem:[#allocation12 + $0x3e0] sm:$0xff]
    %v566 = vld [vmem:[#allocation12 + $0x3e8] sm:$0xff]
    %v567 = vld [vmem:[#allocation12 + $0x3f0] sm:$0xff]
    %v568 = vld [vmem:[#allocation12 + $0x3f8] sm:$0xff]
    %v569 = vld [vmem:[#allocation12 + $0x400] sm:$0xff]
    %v570 = vld [vmem:[#allocation12 + $0x408] sm:$0xff]
    %v571 = vld [vmem:[#allocation12 + $0x410] sm:$0xff]
    %v572 = vld [vmem:[#allocation12 + $0x418] sm:$0xff]
    %v573 = vld [vmem:[#allocation12 + $0x420] sm:$0xff]
    %v574 = vld [vmem:[#allocation12 + $0x428] sm:$0xff]
    %v575 = vld [vmem:[#allocation12 + $0x430] sm:$0xff]
    %v576 = vld [vmem:[#allocation12 + $0x438] sm:$0xff]
    %v577 = vld [vmem:[#allocation12 + $0x440] sm:$0xff]
    %v578 = vld [vmem:[#allocation12 + $0x448] sm:$0xff]
    %v579 = vld [vmem:[#allocation12 + $0x450] sm:$0xff]
    %v580 = vld [vmem:[#allocation12 + $0x458] sm:$0xff]
    %v581 = vld [vmem:[#allocation12 + $0x460] sm:$0xff]
    %v582 = vld [vmem:[#allocation12 + $0x468] sm:$0xff]
    %v583 = vld [vmem:[#allocation12 + $0x470] sm:$0xff]
    %v584 = vld [vmem:[#allocation12 + $0x478] sm:$0xff]
    %v585 = vld [vmem:[#allocation12 + $0x480] sm:$0xff]
    %v586 = vld [vmem:[#allocation12 + $0x488] sm:$0xff]
    %v587 = vld [vmem:[#allocation12 + $0x490] sm:$0xff]
    %v588 = vld [vmem:[#allocation12 + $0x498] sm:$0xff]
    %v589 = vld [vmem:[#allocation12 + $0x4a0] sm:$0xff]
    %v590 = vld [vmem:[#allocation12 + $0x4a8] sm:$0xff]
    %v591 = vld [vmem:[#allocation12 + $0x4b0] sm:$0xff]
    %v592 = vld [vmem:[#allocation12 + $0x4b8] sm:$0xff]
    %v593 = vld [vmem:[#allocation12 + $0x4c0] sm:$0xff]
    %v594 = vld [vmem:[#allocation12 + $0x4c8] sm:$0xff]
    %v595 = vld [vmem:[#allocation12 + $0x4d0] sm:$0xff]
    %v596 = vld [vmem:[#allocation12 + $0x4d8] sm:$0xff]
    %v597 = vld [vmem:[#allocation12 + $0x4e0] sm:$0xff]
    %v598 = vld [vmem:[#allocation12 + $0x4e8] sm:$0xff]
    %v599 = vld [vmem:[#allocation12 + $0x4f0] sm:$0xff]
    %v600 = vld [vmem:[#allocation12 + $0x4f8] sm:$0xff]
    %v601 = vld [vmem:[#allocation12 + $0x500] sm:$0xff]
    %v602 = vld [vmem:[#allocation12 + $0x508] sm:$0xff]
    %v603 = vld [vmem:[#allocation12 + $0x510] sm:$0xff]
    %v604 = vld [vmem:[#allocation12 + $0x518] sm:$0xff]
    %v605 = vld [vmem:[#allocation12 + $0x520] sm:$0xff]
    %v606 = vld [vmem:[#allocation12 + $0x528] sm:$0xff]
    %v607 = vld [vmem:[#allocation12 + $0x530] sm:$0xff]
    %v608 = vld [vmem:[#allocation12 + $0x538] sm:$0xff]
    %v609 = vld [vmem:[#allocation12 + $0x540] sm:$0xff]
    %v610 = vld [vmem:[#allocation12 + $0x548] sm:$0xff]
    %v611 = vld [vmem:[#allocation12 + $0x550] sm:$0xff]
    %v612 = vld [vmem:[#allocation12 + $0x558] sm:$0xff]
    %v613 = vld [vmem:[#allocation12 + $0x560] sm:$0xff]
    %v614 = vld [vmem:[#allocation12 + $0x568] sm:$0xff]
    %v615 = vld [vmem:[#allocation12 + $0x570] sm:$0xff]
    %v616 = vld [vmem:[#allocation12 + $0x578] sm:$0xff]
    %v617 = vld [vmem:[#allocation12 + $0x580] sm:$0xff]
    %v618 = vld [vmem:[#allocation12 + $0x588] sm:$0xff]
    %v619 = vld [vmem:[#allocation12 + $0x590] sm:$0xff]
    %v620 = vld [vmem:[#allocation12 + $0x598] sm:$0xff]
    %v621 = vld [vmem:[#allocation12 + $0x5a0] sm:$0xff]
    %v622 = vld [vmem:[#allocation12 + $0x5a8] sm:$0xff]
    %v623 = vld [vmem:[#allocation12 + $0x5b0] sm:$0xff]
    %v624 = vld [vmem:[#allocation12 + $0x5b8] sm:$0xff]
    %v625 = vld [vmem:[#allocation12 + $0x5c0] sm:$0xff]
    %v626 = vld [vmem:[#allocation12 + $0x5c8] sm:$0xff]
    %v627 = vld [vmem:[#allocation12 + $0x5d0] sm:$0xff]
    %v628 = vld [vmem:[#allocation12 + $0x5d8] sm:$0xff]
    %v629 = vld [vmem:[#allocation12 + $0x5e0] sm:$0xff]
    %v630 = vld [vmem:[#allocation12 + $0x5e8] sm:$0xff]
    %v631 = vld [vmem:[#allocation12 + $0x5f0] sm:$0xff]
    %v632 = vld [vmem:[#allocation12 + $0x5f8] sm:$0xff]
    %v639 = vunpack.c.l.b16 %v179
    %v640 = vunpack.c.h.b16 %v179
    %v641 = vunpack.c.l.b16 %v180
    %v642 = vunpack.c.h.b16 %v180
    %v643 = vunpack.c.l.b16 %v181
    %v644 = vunpack.c.h.b16 %v181
    %v645 = vunpack.c.l.b16 %v182
    %v646 = vunpack.c.h.b16 %v182
    %v647 = vunpack.c.l.b16 %v183
    %v648 = vunpack.c.h.b16 %v183
    %v649 = vunpack.c.l.b16 %v184
    %v650 = vunpack.c.h.b16 %v184
    %v651 = vpack.c.b16 %v645, %v639
    %v652 = vpack.c.b16 %v646, %v640
    %v653 = vpack.c.b16 %v647, %v641
    %v654 = vpack.c.b16 %v648, %v642
    %v655 = vpack.c.b16 %v649, %v643
    %v656 = vpack.c.b16 %v650, %v644
    %v855 = vunpack.c.l.b16 %v441
    %v856 = vunpack.c.h.b16 %v441
    %v857 = vunpack.c.l.b16 %v442
    %v858 = vunpack.c.h.b16 %v442
    %v859 = vunpack.c.l.b16 %v443
    %v860 = vunpack.c.h.b16 %v443
    %v861 = vunpack.c.l.b16 %v444
    %v862 = vunpack.c.h.b16 %v444
    %v863 = vunpack.c.l.b16 %v445
    %v864 = vunpack.c.h.b16 %v445
    %v865 = vunpack.c.l.b16 %v446
    %v866 = vunpack.c.h.b16 %v446
    %v867 = vunpack.c.l.b16 %v447
    %v868 = vunpack.c.h.b16 %v447
    %v869 = vunpack.c.l.b16 %v448
    %v870 = vunpack.c.h.b16 %v448
    %v871 = vunpack.c.l.b16 %v449
    %v872 = vunpack.c.h.b16 %v449
    %v873 = vunpack.c.l.b16 %v450
    %v874 = vunpack.c.h.b16 %v450
    %v875 = vunpack.c.l.b16 %v451
    %v876 = vunpack.c.h.b16 %v451
    %v877 = vunpack.c.l.b16 %v452
    %v878 = vunpack.c.h.b16 %v452
    %v879 = vunpack.c.l.b16 %v453
    %v880 = vunpack.c.h.b16 %v453
    %v881 = vunpack.c.l.b16 %v454
    %v882 = vunpack.c.h.b16 %v454
    %v883 = vunpack.c.l.b16 %v455
    %v884 = vunpack.c.h.b16 %v455
    %v885 = vunpack.c.l.b16 %v456
    %v886 = vunpack.c.h.b16 %v456
    %v887 = vunpack.c.l.b16 %v457
    %v888 = vunpack.c.h.b16 %v457
    %v889 = vunpack.c.l.b16 %v458
    %v890 = vunpack.c.h.b16 %v458
    %v891 = vunpack.c.l.b16 %v459
    %v892 = vunpack.c.h.b16 %v459
    %v893 = vunpack.c.l.b16 %v460
    %v894 = vunpack.c.h.b16 %v460
    %v895 = vunpack.c.l.b16 %v461
    %v896 = vunpack.c.h.b16 %v461
    %v897 = vunpack.c.l.b16 %v462
    %v898 = vunpack.c.h.b16 %v462
    %v899 = vunpack.c.l.b16 %v463
    %v900 = vunpack.c.h.b16 %v463
    %v901 = vunpack.c.l.b16 %v464
    %v902 = vunpack.c.h.b16 %v464
    %v903 = vunpack.c.l.b16 %v465
    %v904 = vunpack.c.h.b16 %v465
    %v905 = vunpack.c.l.b16 %v466
    %v906 = vunpack.c.h.b16 %v466
    %v907 = vunpack.c.l.b16 %v467
    %v908 = vunpack.c.h.b16 %v467
    %v909 = vunpack.c.l.b16 %v468
    %v910 = vunpack.c.h.b16 %v468
    %v911 = vunpack.c.l.b16 %v469
    %v912 = vunpack.c.h.b16 %v469
    %v913 = vunpack.c.l.b16 %v470
    %v914 = vunpack.c.h.b16 %v470
    %v915 = vunpack.c.l.b16 %v471
    %v916 = vunpack.c.h.b16 %v471
    %v917 = vunpack.c.l.b16 %v472
    %v918 = vunpack.c.h.b16 %v472
    %v919 = vunpack.c.l.b16 %v473
    %v920 = vunpack.c.h.b16 %v473
    %v921 = vunpack.c.l.b16 %v474
    %v922 = vunpack.c.h.b16 %v474
    %v923 = vunpack.c.l.b16 %v475
    %v924 = vunpack.c.h.b16 %v475
    %v925 = vunpack.c.l.b16 %v476
    %v926 = vunpack.c.h.b16 %v476
    %v927 = vunpack.c.l.b16 %v477
    %v928 = vunpack.c.h.b16 %v477
    %v929 = vunpack.c.l.b16 %v478
    %v930 = vunpack.c.h.b16 %v478
    %v931 = vunpack.c.l.b16 %v479
    %v932 = vunpack.c.h.b16 %v479
    %v933 = vunpack.c.l.b16 %v480
    %v934 = vunpack.c.h.b16 %v480
    %v935 = vunpack.c.l.b16 %v481
    %v936 = vunpack.c.h.b16 %v481
    %v937 = vunpack.c.l.b16 %v482
    %v938 = vunpack.c.h.b16 %v482
    %v939 = vunpack.c.l.b16 %v483
    %v940 = vunpack.c.h.b16 %v483
    %v941 = vunpack.c.l.b16 %v484
    %v942 = vunpack.c.h.b16 %v484
    %v943 = vunpack.c.l.b16 %v485
    %v944 = vunpack.c.h.b16 %v485
    %v945 = vunpack.c.l.b16 %v486
    %v946 = vunpack.c.h.b16 %v486
    %v947 = vunpack.c.l.b16 %v487
    %v948 = vunpack.c.h.b16 %v487
    %v949 = vunpack.c.l.b16 %v488
    %v950 = vunpack.c.h.b16 %v488
    %v951 = vunpack.c.l.b16 %v489
    %v952 = vunpack.c.h.b16 %v489
    %v953 = vunpack.c.l.b16 %v490
    %v954 = vunpack.c.h.b16 %v490
    %v955 = vunpack.c.l.b16 %v491
    %v956 = vunpack.c.h.b16 %v491
    %v957 = vunpack.c.l.b16 %v492
    %v958 = vunpack.c.h.b16 %v492
    %v959 = vunpack.c.l.b16 %v493
    %v960 = vunpack.c.h.b16 %v493
    %v961 = vunpack.c.l.b16 %v494
    %v962 = vunpack.c.h.b16 %v494
    %v963 = vunpack.c.l.b16 %v495
    %v964 = vunpack.c.h.b16 %v495
    %v965 = vunpack.c.l.b16 %v496
    %v966 = vunpack.c.h.b16 %v496
    %v967 = vunpack.c.l.b16 %v497
    %v968 = vunpack.c.h.b16 %v497
    %v969 = vunpack.c.l.b16 %v498
    %v970 = vunpack.c.h.b16 %v498
    %v971 = vunpack.c.l.b16 %v499
    %v972 = vunpack.c.h.b16 %v499
    %v973 = vunpack.c.l.b16 %v500
    %v974 = vunpack.c.h.b16 %v500
    %v975 = vunpack.c.l.b16 %v501
    %v976 = vunpack.c.h.b16 %v501
    %v977 = vunpack.c.l.b16 %v502
    %v978 = vunpack.c.h.b16 %v502
    %v979 = vunpack.c.l.b16 %v503
    %v980 = vunpack.c.h.b16 %v503
    %v981 = vunpack.c.l.b16 %v504
    %v982 = vunpack.c.h.b16 %v504
    %v983 = vunpack.c.l.b16 %v505
    %v984 = vunpack.c.h.b16 %v505
    %v985 = vunpack.c.l.b16 %v506
    %v986 = vunpack.c.h.b16 %v506
    %v987 = vunpack.c.l.b16 %v507
    %v988 = vunpack.c.h.b16 %v507
    %v989 = vunpack.c.l.b16 %v508
    %v990 = vunpack.c.h.b16 %v508
    %v991 = vunpack.c.l.b16 %v509
    %v992 = vunpack.c.h.b16 %v509
    %v993 = vunpack.c.l.b16 %v510
    %v994 = vunpack.c.h.b16 %v510
    %v995 = vunpack.c.l.b16 %v511
    %v996 = vunpack.c.h.b16 %v511
    %v997 = vunpack.c.l.b16 %v512
    %v998 = vunpack.c.h.b16 %v512
    %v999 = vunpack.c.l.b16 %v513
    %v1000 = vunpack.c.h.b16 %v513
    %v1001 = vunpack.c.l.b16 %v514
    %v1002 = vunpack.c.h.b16 %v514
    %v1003 = vunpack.c.l.b16 %v515
    %v1004 = vunpack.c.h.b16 %v515
    %v1005 = vunpack.c.l.b16 %v516
    %v1006 = vunpack.c.h.b16 %v516
    %v1007 = vunpack.c.l.b16 %v517
    %v1008 = vunpack.c.h.b16 %v517
    %v1009 = vunpack.c.l.b16 %v518
    %v1010 = vunpack.c.h.b16 %v518
    %v1011 = vunpack.c.l.b16 %v519
    %v1012 = vunpack.c.h.b16 %v519
    %v1013 = vunpack.c.l.b16 %v520
    %v1014 = vunpack.c.h.b16 %v520
    %v1015 = vunpack.c.l.b16 %v521
    %v1016 = vunpack.c.h.b16 %v521
    %v1017 = vunpack.c.l.b16 %v522
    %v1018 = vunpack.c.h.b16 %v522
    %v1019 = vunpack.c.l.b16 %v523
    %v1020 = vunpack.c.h.b16 %v523
    %v1021 = vunpack.c.l.b16 %v524
    %v1022 = vunpack.c.h.b16 %v524
    %v1023 = vunpack.c.l.b16 %v525
    %v1024 = vunpack.c.h.b16 %v525
    %v1025 = vunpack.c.l.b16 %v526
    %v1026 = vunpack.c.h.b16 %v526
    %v1027 = vunpack.c.l.b16 %v527
    %v1028 = vunpack.c.h.b16 %v527
    %v1029 = vunpack.c.l.b16 %v528
    %v1030 = vunpack.c.h.b16 %v528
    %v1031 = vunpack.c.l.b16 %v529
    %v1032 = vunpack.c.h.b16 %v529
    %v1033 = vunpack.c.l.b16 %v530
    %v1034 = vunpack.c.h.b16 %v530
    %v1035 = vunpack.c.l.b16 %v531
    %v1036 = vunpack.c.h.b16 %v531
    %v1037 = vunpack.c.l.b16 %v532
    %v1038 = vunpack.c.h.b16 %v532
    %v1039 = vunpack.c.l.b16 %v533
    %v1040 = vunpack.c.h.b16 %v533
    %v1041 = vunpack.c.l.b16 %v534
    %v1042 = vunpack.c.h.b16 %v534
    %v1043 = vunpack.c.l.b16 %v535
    %v1044 = vunpack.c.h.b16 %v535
    %v1045 = vunpack.c.l.b16 %v536
    %v1046 = vunpack.c.h.b16 %v536
    %v1047 = vunpack.c.l.b16 %v537
    %v1048 = vunpack.c.h.b16 %v537
    %v1049 = vunpack.c.l.b16 %v538
    %v1050 = vunpack.c.h.b16 %v538
    %v1051 = vunpack.c.l.b16 %v539
    %v1052 = vunpack.c.h.b16 %v539
    %v1053 = vunpack.c.l.b16 %v540
    %v1054 = vunpack.c.h.b16 %v540
    %v1055 = vunpack.c.l.b16 %v541
    %v1056 = vunpack.c.h.b16 %v541
    %v1057 = vunpack.c.l.b16 %v542
    %v1058 = vunpack.c.h.b16 %v542
    %v1059 = vunpack.c.l.b16 %v543
    %v1060 = vunpack.c.h.b16 %v543
    %v1061 = vunpack.c.l.b16 %v544
    %v1062 = vunpack.c.h.b16 %v544
    %v1063 = vunpack.c.l.b16 %v545
    %v1064 = vunpack.c.h.b16 %v545
    %v1065 = vunpack.c.l.b16 %v546
    %v1066 = vunpack.c.h.b16 %v546
    %v1067 = vunpack.c.l.b16 %v547
    %v1068 = vunpack.c.h.b16 %v547
    %v1069 = vunpack.c.l.b16 %v548
    %v1070 = vunpack.c.h.b16 %v548
    %v1071 = vunpack.c.l.b16 %v549
    %v1072 = vunpack.c.h.b16 %v549
    %v1073 = vunpack.c.l.b16 %v550
    %v1074 = vunpack.c.h.b16 %v550
    %v1075 = vunpack.c.l.b16 %v551
    %v1076 = vunpack.c.h.b16 %v551
    %v1077 = vunpack.c.l.b16 %v552
    %v1078 = vunpack.c.h.b16 %v552
    %v1079 = vunpack.c.l.b16 %v553
    %v1080 = vunpack.c.h.b16 %v553
    %v1081 = vunpack.c.l.b16 %v554
    %v1082 = vunpack.c.h.b16 %v554
    %v1083 = vunpack.c.l.b16 %v555
    %v1084 = vunpack.c.h.b16 %v555
    %v1085 = vunpack.c.l.b16 %v556
    %v1086 = vunpack.c.h.b16 %v556
    %v1087 = vunpack.c.l.b16 %v557
    %v1088 = vunpack.c.h.b16 %v557
    %v1089 = vunpack.c.l.b16 %v558
    %v1090 = vunpack.c.h.b16 %v558
    %v1091 = vunpack.c.l.b16 %v559
    %v1092 = vunpack.c.h.b16 %v559
    %v1093 = vunpack.c.l.b16 %v560
    %v1094 = vunpack.c.h.b16 %v560
    %v1095 = vunpack.c.l.b16 %v561
    %v1096 = vunpack.c.h.b16 %v561
    %v1097 = vunpack.c.l.b16 %v562
    %v1098 = vunpack.c.h.b16 %v562
    %v1099 = vunpack.c.l.b16 %v563
    %v1100 = vunpack.c.h.b16 %v563
    %v1101 = vunpack.c.l.b16 %v564
    %v1102 = vunpack.c.h.b16 %v564
    %v1103 = vunpack.c.l.b16 %v565
    %v1104 = vunpack.c.h.b16 %v565
    %v1105 = vunpack.c.l.b16 %v566
    %v1106 = vunpack.c.h.b16 %v566
    %v1107 = vunpack.c.l.b16 %v567
    %v1108 = vunpack.c.h.b16 %v567
    %v1109 = vunpack.c.l.b16 %v568
    %v1110 = vunpack.c.h.b16 %v568
    %v1111 = vunpack.c.l.b16 %v569
    %v1112 = vunpack.c.h.b16 %v569
    %v1113 = vunpack.c.l.b16 %v570
    %v1114 = vunpack.c.h.b16 %v570
    %v1115 = vunpack.c.l.b16 %v571
    %v1116 = vunpack.c.h.b16 %v571
    %v1117 = vunpack.c.l.b16 %v572
    %v1118 = vunpack.c.h.b16 %v572
    %v1119 = vunpack.c.l.b16 %v573
    %v1120 = vunpack.c.h.b16 %v573
    %v1121 = vunpack.c.l.b16 %v574
    %v1122 = vunpack.c.h.b16 %v574
    %v1123 = vunpack.c.l.b16 %v575
    %v1124 = vunpack.c.h.b16 %v575
    %v1125 = vunpack.c.l.b16 %v576
    %v1126 = vunpack.c.h.b16 %v576
    %v1127 = vunpack.c.l.b16 %v577
    %v1128 = vunpack.c.h.b16 %v577
    %v1129 = vunpack.c.l.b16 %v578
    %v1130 = vunpack.c.h.b16 %v578
    %v1131 = vunpack.c.l.b16 %v579
    %v1132 = vunpack.c.h.b16 %v579
    %v1133 = vunpack.c.l.b16 %v580
    %v1134 = vunpack.c.h.b16 %v580
    %v1135 = vunpack.c.l.b16 %v581
    %v1136 = vunpack.c.h.b16 %v581
    %v1137 = vunpack.c.l.b16 %v582
    %v1138 = vunpack.c.h.b16 %v582
    %v1139 = vunpack.c.l.b16 %v583
    %v1140 = vunpack.c.h.b16 %v583
    %v1141 = vunpack.c.l.b16 %v584
    %v1142 = vunpack.c.h.b16 %v584
    %v1143 = vunpack.c.l.b16 %v585
    %v1144 = vunpack.c.h.b16 %v585
    %v1145 = vunpack.c.l.b16 %v586
    %v1146 = vunpack.c.h.b16 %v586
    %v1147 = vunpack.c.l.b16 %v587
    %v1148 = vunpack.c.h.b16 %v587
    %v1149 = vunpack.c.l.b16 %v588
    %v1150 = vunpack.c.h.b16 %v588
    %v1151 = vunpack.c.l.b16 %v589
    %v1152 = vunpack.c.h.b16 %v589
    %v1153 = vunpack.c.l.b16 %v590
    %v1154 = vunpack.c.h.b16 %v590
    %v1155 = vunpack.c.l.b16 %v591
    %v1156 = vunpack.c.h.b16 %v591
    %v1157 = vunpack.c.l.b16 %v592
    %v1158 = vunpack.c.h.b16 %v592
    %v1159 = vunpack.c.l.b16 %v593
    %v1160 = vunpack.c.h.b16 %v593
    %v1161 = vunpack.c.l.b16 %v594
    %v1162 = vunpack.c.h.b16 %v594
    %v1163 = vunpack.c.l.b16 %v595
    %v1164 = vunpack.c.h.b16 %v595
    %v1165 = vunpack.c.l.b16 %v596
    %v1166 = vunpack.c.h.b16 %v596
    %v1167 = vunpack.c.l.b16 %v597
    %v1168 = vunpack.c.h.b16 %v597
    %v1169 = vunpack.c.l.b16 %v598
    %v1170 = vunpack.c.h.b16 %v598
    %v1171 = vunpack.c.l.b16 %v599
    %v1172 = vunpack.c.h.b16 %v599
    %v1173 = vunpack.c.l.b16 %v600
    %v1174 = vunpack.c.h.b16 %v600
    %v1175 = vunpack.c.l.b16 %v601
    %v1176 = vunpack.c.h.b16 %v601
    %v1177 = vunpack.c.l.b16 %v602
    %v1178 = vunpack.c.h.b16 %v602
    %v1179 = vunpack.c.l.b16 %v603
    %v1180 = vunpack.c.h.b16 %v603
    %v1181 = vunpack.c.l.b16 %v604
    %v1182 = vunpack.c.h.b16 %v604
    %v1183 = vunpack.c.l.b16 %v605
    %v1184 = vunpack.c.h.b16 %v605
    %v1185 = vunpack.c.l.b16 %v606
    %v1186 = vunpack.c.h.b16 %v606
    %v1187 = vunpack.c.l.b16 %v607
    %v1188 = vunpack.c.h.b16 %v607
    %v1189 = vunpack.c.l.b16 %v608
    %v1190 = vunpack.c.h.b16 %v608
    %v1191 = vunpack.c.l.b16 %v609
    %v1192 = vunpack.c.h.b16 %v609
    %v1193 = vunpack.c.l.b16 %v610
    %v1194 = vunpack.c.h.b16 %v610
    %v1195 = vunpack.c.l.b16 %v611
    %v1196 = vunpack.c.h.b16 %v611
    %v1197 = vunpack.c.l.b16 %v612
    %v1198 = vunpack.c.h.b16 %v612
    %v1199 = vunpack.c.l.b16 %v613
    %v1200 = vunpack.c.h.b16 %v613
    %v1201 = vunpack.c.l.b16 %v614
    %v1202 = vunpack.c.h.b16 %v614
    %v1203 = vunpack.c.l.b16 %v615
    %v1204 = vunpack.c.h.b16 %v615
    %v1205 = vunpack.c.l.b16 %v616
    %v1206 = vunpack.c.h.b16 %v616
    %v1207 = vunpack.c.l.b16 %v617
    %v1208 = vunpack.c.h.b16 %v617
    %v1209 = vunpack.c.l.b16 %v618
    %v1210 = vunpack.c.h.b16 %v618
    %v1211 = vunpack.c.l.b16 %v619
    %v1212 = vunpack.c.h.b16 %v619
    %v1213 = vunpack.c.l.b16 %v620
    %v1214 = vunpack.c.h.b16 %v620
    %v1215 = vunpack.c.l.b16 %v621
    %v1216 = vunpack.c.h.b16 %v621
    %v1217 = vunpack.c.l.b16 %v622
    %v1218 = vunpack.c.h.b16 %v622
    %v1219 = vunpack.c.l.b16 %v623
    %v1220 = vunpack.c.h.b16 %v623
    %v1221 = vunpack.c.l.b16 %v624
    %v1222 = vunpack.c.h.b16 %v624
    %v1223 = vunpack.c.l.b16 %v625
    %v1224 = vunpack.c.h.b16 %v625
    %v1225 = vunpack.c.l.b16 %v626
    %v1226 = vunpack.c.h.b16 %v626
    %v1227 = vunpack.c.l.b16 %v627
    %v1228 = vunpack.c.h.b16 %v627
    %v1229 = vunpack.c.l.b16 %v628
    %v1230 = vunpack.c.h.b16 %v628
    %v1231 = vunpack.c.l.b16 %v629
    %v1232 = vunpack.c.h.b16 %v629
    %v1233 = vunpack.c.l.b16 %v630
    %v1234 = vunpack.c.h.b16 %v630
    %v1235 = vunpack.c.l.b16 %v631
    %v1236 = vunpack.c.h.b16 %v631
    %v1237 = vunpack.c.l.b16 %v632
    %v1238 = vunpack.c.h.b16 %v632
    %v1239 = vpack.c.b16 %v859, %v855
    %v1240 = vpack.c.b16 %v860, %v856
    %v1241 = vpack.c.b16 %v861, %v857
    %v1242 = vpack.c.b16 %v862, %v858
    %v1243 = vpack.c.b16 %v867, %v863
    %v1244 = vpack.c.b16 %v868, %v864
    %v1245 = vpack.c.b16 %v869, %v865
    %v1246 = vpack.c.b16 %v870, %v866
    %v1247 = vpack.c.b16 %v875, %v871
    %v1248 = vpack.c.b16 %v876, %v872
    %v1249 = vpack.c.b16 %v877, %v873
    %v1250 = vpack.c.b16 %v878, %v874
    %v1251 = vpack.c.b16 %v883, %v879
    %v1252 = vpack.c.b16 %v884, %v880
    %v1253 = vpack.c.b16 %v885, %v881
    %v1254 = vpack.c.b16 %v886, %v882
    %v1255 = vpack.c.b16 %v891, %v887
    %v1256 = vpack.c.b16 %v892, %v888
    %v1257 = vpack.c.b16 %v893, %v889
    %v1258 = vpack.c.b16 %v894, %v890
    %v1259 = vpack.c.b16 %v899, %v895
    %v1260 = vpack.c.b16 %v900, %v896
    %v1261 = vpack.c.b16 %v901, %v897
    %v1262 = vpack.c.b16 %v902, %v898
    %v1263 = vpack.c.b16 %v907, %v903
    %v1264 = vpack.c.b16 %v908, %v904
    %v1265 = vpack.c.b16 %v909, %v905
    %v1266 = vpack.c.b16 %v910, %v906
    %v1267 = vpack.c.b16 %v915, %v911
    %v1268 = vpack.c.b16 %v916, %v912
    %v1269 = vpack.c.b16 %v917, %v913
    %v1270 = vpack.c.b16 %v918, %v914
    %v1271 = vpack.c.b16 %v923, %v919
    %v1272 = vpack.c.b16 %v924, %v920
    %v1273 = vpack.c.b16 %v925, %v921
    %v1274 = vpack.c.b16 %v926, %v922
    %v1275 = vpack.c.b16 %v931, %v927
    %v1276 = vpack.c.b16 %v932, %v928
    %v1277 = vpack.c.b16 %v933, %v929
    %v1278 = vpack.c.b16 %v934, %v930
    %v1279 = vpack.c.b16 %v939, %v935
    %v1280 = vpack.c.b16 %v940, %v936
    %v1281 = vpack.c.b16 %v941, %v937
    %v1282 = vpack.c.b16 %v942, %v938
    %v1283 = vpack.c.b16 %v947, %v943
    %v1284 = vpack.c.b16 %v948, %v944
    %v1285 = vpack.c.b16 %v949, %v945
    %v1286 = vpack.c.b16 %v950, %v946
    %v1287 = vpack.c.b16 %v955, %v951
    %v1288 = vpack.c.b16 %v956, %v952
    %v1289 = vpack.c.b16 %v957, %v953
    %v1290 = vpack.c.b16 %v958, %v954
    %v1291 = vpack.c.b16 %v963, %v959
    %v1292 = vpack.c.b16 %v964, %v960
    %v1293 = vpack.c.b16 %v965, %v961
    %v1294 = vpack.c.b16 %v966, %v962
    %v1295 = vpack.c.b16 %v971, %v967
    %v1296 = vpack.c.b16 %v972, %v968
    %v1297 = vpack.c.b16 %v973, %v969
    %v1298 = vpack.c.b16 %v974, %v970
    %v1299 = vpack.c.b16 %v979, %v975
    %v1300 = vpack.c.b16 %v980, %v976
    %v1301 = vpack.c.b16 %v981, %v977
    %v1302 = vpack.c.b16 %v982, %v978
    %v1303 = vpack.c.b16 %v987, %v983
    %v1304 = vpack.c.b16 %v988, %v984
    %v1305 = vpack.c.b16 %v989, %v985
    %v1306 = vpack.c.b16 %v990, %v986
    %v1307 = vpack.c.b16 %v995, %v991
    %v1308 = vpack.c.b16 %v996, %v992
    %v1309 = vpack.c.b16 %v997, %v993
    %v1310 = vpack.c.b16 %v998, %v994
    %v1311 = vpack.c.b16 %v1003, %v999
    %v1312 = vpack.c.b16 %v1004, %v1000
    %v1313 = vpack.c.b16 %v1005, %v1001
    %v1314 = vpack.c.b16 %v1006, %v1002
    %v1315 = vpack.c.b16 %v1011, %v1007
    %v1316 = vpack.c.b16 %v1012, %v1008
    %v1317 = vpack.c.b16 %v1013, %v1009
    %v1318 = vpack.c.b16 %v1014, %v1010
    %v1319 = vpack.c.b16 %v1019, %v1015
    %v1320 = vpack.c.b16 %v1020, %v1016
    %v1321 = vpack.c.b16 %v1021, %v1017
    %v1322 = vpack.c.b16 %v1022, %v1018
    %v1323 = vpack.c.b16 %v1027, %v1023
    %v1324 = vpack.c.b16 %v1028, %v1024
    %v1325 = vpack.c.b16 %v1029, %v1025
    %v1326 = vpack.c.b16 %v1030, %v1026
    %v1327 = vpack.c.b16 %v1035, %v1031
    %v1328 = vpack.c.b16 %v1036, %v1032
    %v1329 = vpack.c.b16 %v1037, %v1033
    %v1330 = vpack.c.b16 %v1038, %v1034
    %v1331 = vpack.c.b16 %v1043, %v1039
    %v1332 = vpack.c.b16 %v1044, %v1040
    %v1333 = vpack.c.b16 %v1045, %v1041
    %v1334 = vpack.c.b16 %v1046, %v1042
    %v1335 = vpack.c.b16 %v1051, %v1047
    %v1336 = vpack.c.b16 %v1052, %v1048
    %v1337 = vpack.c.b16 %v1053, %v1049
    %v1338 = vpack.c.b16 %v1054, %v1050
    %v1339 = vpack.c.b16 %v1059, %v1055
    %v1340 = vpack.c.b16 %v1060, %v1056
    %v1341 = vpack.c.b16 %v1061, %v1057
    %v1342 = vpack.c.b16 %v1062, %v1058
    %v1343 = vpack.c.b16 %v1067, %v1063
    %v1344 = vpack.c.b16 %v1068, %v1064
    %v1345 = vpack.c.b16 %v1069, %v1065
    %v1346 = vpack.c.b16 %v1070, %v1066
    %v1347 = vpack.c.b16 %v1075, %v1071
    %v1348 = vpack.c.b16 %v1076, %v1072
    %v1349 = vpack.c.b16 %v1077, %v1073
    %v1350 = vpack.c.b16 %v1078, %v1074
    %v1351 = vpack.c.b16 %v1083, %v1079
    %v1352 = vpack.c.b16 %v1084, %v1080
    %v1353 = vpack.c.b16 %v1085, %v1081
    %v1354 = vpack.c.b16 %v1086, %v1082
    %v1355 = vpack.c.b16 %v1091, %v1087
    %v1356 = vpack.c.b16 %v1092, %v1088
    %v1357 = vpack.c.b16 %v1093, %v1089
    %v1358 = vpack.c.b16 %v1094, %v1090
    %v1359 = vpack.c.b16 %v1099, %v1095
    %v1360 = vpack.c.b16 %v1100, %v1096
    %v1361 = vpack.c.b16 %v1101, %v1097
    %v1362 = vpack.c.b16 %v1102, %v1098
    %v1363 = vpack.c.b16 %v1107, %v1103
    %v1364 = vpack.c.b16 %v1108, %v1104
    %v1365 = vpack.c.b16 %v1109, %v1105
    %v1366 = vpack.c.b16 %v1110, %v1106
    %v1367 = vpack.c.b16 %v1115, %v1111
    %v1368 = vpack.c.b16 %v1116, %v1112
    %v1369 = vpack.c.b16 %v1117, %v1113
    %v1370 = vpack.c.b16 %v1118, %v1114
    %v1371 = vpack.c.b16 %v1123, %v1119
    %v1372 = vpack.c.b16 %v1124, %v1120
    %v1373 = vpack.c.b16 %v1125, %v1121
    %v1374 = vpack.c.b16 %v1126, %v1122
    %v1375 = vpack.c.b16 %v1131, %v1127
    %v1376 = vpack.c.b16 %v1132, %v1128
    %v1377 = vpack.c.b16 %v1133, %v1129
    %v1378 = vpack.c.b16 %v1134, %v1130
    %v1379 = vpack.c.b16 %v1139, %v1135
    %v1380 = vpack.c.b16 %v1140, %v1136
    %v1381 = vpack.c.b16 %v1141, %v1137
    %v1382 = vpack.c.b16 %v1142, %v1138
    %v1383 = vpack.c.b16 %v1147, %v1143
    %v1384 = vpack.c.b16 %v1148, %v1144
    %v1385 = vpack.c.b16 %v1149, %v1145
    %v1386 = vpack.c.b16 %v1150, %v1146
    %v1387 = vpack.c.b16 %v1155, %v1151
    %v1388 = vpack.c.b16 %v1156, %v1152
    %v1389 = vpack.c.b16 %v1157, %v1153
    %v1390 = vpack.c.b16 %v1158, %v1154
    %v1391 = vpack.c.b16 %v1163, %v1159
    %v1392 = vpack.c.b16 %v1164, %v1160
    %v1393 = vpack.c.b16 %v1165, %v1161
    %v1394 = vpack.c.b16 %v1166, %v1162
    %v1395 = vpack.c.b16 %v1171, %v1167
    %v1396 = vpack.c.b16 %v1172, %v1168
    %v1397 = vpack.c.b16 %v1173, %v1169
    %v1398 = vpack.c.b16 %v1174, %v1170
    %v1399 = vpack.c.b16 %v1179, %v1175
    %v1400 = vpack.c.b16 %v1180, %v1176
    %v1401 = vpack.c.b16 %v1181, %v1177
    %v1402 = vpack.c.b16 %v1182, %v1178
    %v1403 = vpack.c.b16 %v1187, %v1183
    %v1404 = vpack.c.b16 %v1188, %v1184
    %v1405 = vpack.c.b16 %v1189, %v1185
    %v1406 = vpack.c.b16 %v1190, %v1186
    %v1407 = vpack.c.b16 %v1195, %v1191
    %v1408 = vpack.c.b16 %v1196, %v1192
    %v1409 = vpack.c.b16 %v1197, %v1193
    %v1410 = vpack.c.b16 %v1198, %v1194
    %v1411 = vpack.c.b16 %v1203, %v1199
    %v1412 = vpack.c.b16 %v1204, %v1200
    %v1413 = vpack.c.b16 %v1205, %v1201
    %v1414 = vpack.c.b16 %v1206, %v1202
    %v1415 = vpack.c.b16 %v1211, %v1207
    %v1416 = vpack.c.b16 %v1212, %v1208
    %v1417 = vpack.c.b16 %v1213, %v1209
    %v1418 = vpack.c.b16 %v1214, %v1210
    %v1419 = vpack.c.b16 %v1219, %v1215
    %v1420 = vpack.c.b16 %v1220, %v1216
    %v1421 = vpack.c.b16 %v1221, %v1217
    %v1422 = vpack.c.b16 %v1222, %v1218
    %v1423 = vpack.c.b16 %v1227, %v1223
    %v1424 = vpack.c.b16 %v1228, %v1224
    %v1425 = vpack.c.b16 %v1229, %v1225
    %v1426 = vpack.c.b16 %v1230, %v1226
    %v1427 = vpack.c.b16 %v1235, %v1231
    %v1428 = vpack.c.b16 %v1236, %v1232
    %v1429 = vpack.c.b16 %v1237, %v1233
    %v1430 = vpack.c.b16 %v1238, %v1234
    %1623 = vmatprep.subr.bf16.mxu0 %v1240
    %1624 = vmatpush1.bf16.msra.mxu0 %v1239
    %1625 = vmatprep.subr.bf16.mxu0 %v1244
    %1626 = vmatpush1.bf16.msra.mxu0 %v1243
    %1627 = vmatprep.subr.bf16.mxu0 %v1248
    %1628 = vmatpush1.bf16.msra.mxu0 %v1247
    %1629 = vmatprep.subr.bf16.mxu0 %v1252
    %1630 = vmatpush1.bf16.msra.mxu0 %v1251
    %1631 = vmatprep.subr.bf16.mxu0 %v1256
    %1632 = vmatpush1.bf16.msra.mxu0 %v1255
    %1633 = vmatprep.subr.bf16.mxu0 %v1260
    %1634 = vmatpush1.bf16.msra.mxu0 %v1259
    %1635 = vmatprep.subr.bf16.mxu0 %v1264
    %1636 = vmatpush1.bf16.msra.mxu0 %v1263
    %1637 = vmatprep.subr.bf16.mxu0 %v1268
    %1638 = vmatpush1.bf16.msra.mxu0 %v1267
    %1639 = vmatprep.subr.bf16.mxu0 %v1272
    %1640 = vmatpush1.bf16.msra.mxu0 %v1271
    %1641 = vmatprep.subr.bf16.mxu0 %v1276
    %1642 = vmatpush1.bf16.msra.mxu0 %v1275
    %1643 = vmatprep.subr.bf16.mxu0 %v1280
    %1644 = vmatpush1.bf16.msra.mxu0 %v1279
    %1645 = vmatprep.subr.bf16.mxu0 %v1284
    %1646 = vmatpush1.bf16.msra.mxu0 %v1283
    %1647 = vmatprep.subr.bf16.mxu0 %v1288
    %1648 = vmatpush1.bf16.msra.mxu0 %v1287
    %1649 = vmatprep.subr.bf16.mxu0 %v1292
    %1650 = vmatpush1.bf16.msra.mxu0 %v1291
    %1651 = vmatprep.subr.bf16.mxu0 %v1296
    %1652 = vmatpush1.bf16.msra.mxu0 %v1295
    %1653 = vmatprep.subr.bf16.mxu0 %v1300
    %1654 = vmatpush1.bf16.msra.mxu0 %v1299
    %1655 = vmatprep.mubr.bf16.mxu0 %v652
    %1656 = vmatmul.mubr.bf16.gmra.mrb[0].mxu0 %v651
    %v1657 = vpop.f32.mrb[0].mxu0
    %v1658 = vadd.f32 0.0, %v1657
    %v1659 = vpop.f32.mrb[0].mxu0
    %v1660 = vadd.f32 0.0, %v1659
    %v1661 = vpop.f32.mrb[0].mxu0
    %v1662 = vadd.f32 0.0, %v1661
    %v1663 = vpop.f32.mrb[0].mxu0
    %v1664 = vadd.f32 0.0, %v1663
    %1665 = vdwg.mxu0
    %1666 = vmatprep.subr.bf16.mxu0 %v1304
    %1667 = vmatpush1.bf16.msra.mxu0 %v1303
    %1668 = vmatprep.subr.bf16.mxu0 %v1308
    %1669 = vmatpush1.bf16.msra.mxu0 %v1307
    %1670 = vmatprep.subr.bf16.mxu0 %v1312
    %1671 = vmatpush1.bf16.msra.mxu0 %v1311
    %1672 = vmatprep.subr.bf16.mxu0 %v1316
    %1673 = vmatpush1.bf16.msra.mxu0 %v1315
    %1674 = vmatprep.subr.bf16.mxu0 %v1320
    %1675 = vmatpush1.bf16.msra.mxu0 %v1319
    %1676 = vmatprep.subr.bf16.mxu0 %v1324
    %1677 = vmatpush1.bf16.msra.mxu0 %v1323
    %1678 = vmatprep.subr.bf16.mxu0 %v1328
    %1679 = vmatpush1.bf16.msra.mxu0 %v1327
    %1680 = vmatprep.subr.bf16.mxu0 %v1332
    %1681 = vmatpush1.bf16.msra.mxu0 %v1331
    %1682 = vmatprep.subr.bf16.mxu0 %v1336
    %1683 = vmatpush1.bf16.msra.mxu0 %v1335
    %1684 = vmatprep.subr.bf16.mxu0 %v1340
    %1685 = vmatpush1.bf16.msra.mxu0 %v1339
    %1686 = vmatprep.subr.bf16.mxu0 %v1344
    %1687 = vmatpush1.bf16.msra.mxu0 %v1343
    %1688 = vmatprep.subr.bf16.mxu0 %v1348
    %1689 = vmatpush1.bf16.msra.mxu0 %v1347
    %1690 = vmatprep.subr.bf16.mxu0 %v1352
    %1691 = vmatpush1.bf16.msra.mxu0 %v1351
    %1692 = vmatprep.subr.bf16.mxu0 %v1356
    %1693 = vmatpush1.bf16.msra.mxu0 %v1355
    %1694 = vmatprep.subr.bf16.mxu0 %v1360
    %1695 = vmatpush1.bf16.msra.mxu0 %v1359
    %1696 = vmatprep.subr.bf16.mxu0 %v1364
    %1697 = vmatpush1.bf16.msra.mxu0 %v1363
    %1698 = vmatprep.mubr.bf16.mxu0 %v654
    %1699 = vmatmul.mubr.bf16.gmra.mrb[0].mxu0 %v653
    %v1700 = vpop.f32.mrb[0].mxu0
    %v1701 = vadd.f32 %v1658, %v1700
    %v1702 = vpop.f32.mrb[0].mxu0
    %v1703 = vadd.f32 %v1660, %v1702
    %v1704 = vpop.f32.mrb[0].mxu0
    %v1705 = vadd.f32 %v1662, %v1704
    %v1706 = vpop.f32.mrb[0].mxu0
    %v1707 = vadd.f32 %v1664, %v1706
    %1708 = vdwg.mxu0
    %1709 = vmatprep.subr.bf16.mxu0 %v1368
    %1710 = vmatpush1.bf16.msra.mxu0 %v1367
    %1711 = vmatprep.subr.bf16.mxu0 %v1372
    %1712 = vmatpush1.bf16.msra.mxu0 %v1371
    %1713 = vmatprep.subr.bf16.mxu0 %v1376
    %1714 = vmatpush1.bf16.msra.mxu0 %v1375
    %1715 = vmatprep.subr.bf16.mxu0 %v1380
    %1716 = vmatpush1.bf16.msra.mxu0 %v1379
    %1717 = vmatprep.subr.bf16.mxu0 %v1384
    %1718 = vmatpush1.bf16.msra.mxu0 %v1383
    %1719 = vmatprep.subr.bf16.mxu0 %v1388
    %1720 = vmatpush1.bf16.msra.mxu0 %v1387
    %1721 = vmatprep.subr.bf16.mxu0 %v1392
    %1722 = vmatpush1.bf16.msra.mxu0 %v1391
    %1723 = vmatprep.subr.bf16.mxu0 %v1396
    %1724 = vmatpush1.bf16.msra.mxu0 %v1395
    %1725 = vmatprep.subr.bf16.mxu0 %v1400
    %1726 = vmatpush1.bf16.msra.mxu0 %v1399
    %1727 = vmatprep.subr.bf16.mxu0 %v1404
    %1728 = vmatpush1.bf16.msra.mxu0 %v1403
    %1729 = vmatprep.subr.bf16.mxu0 %v1408
    %1730 = vmatpush1.bf16.msra.mxu0 %v1407
    %1731 = vmatprep.subr.bf16.mxu0 %v1412
    %1732 = vmatpush1.bf16.msra.mxu0 %v1411
    %1733 = vmatprep.subr.bf16.mxu0 %v1416
    %1734 = vmatpush1.bf16.msra.mxu0 %v1415
    %1735 = vmatprep.subr.bf16.mxu0 %v1420
    %1736 = vmatpush1.bf16.msra.mxu0 %v1419
    %1737 = vmatprep.subr.bf16.mxu0 %v1424
    %1738 = vmatpush1.bf16.msra.mxu0 %v1423
    %1739 = vmatprep.subr.bf16.mxu0 %v1428
    %1740 = vmatpush1.bf16.msra.mxu0 %v1427
    %1741 = vmatprep.mubr.bf16.mxu0 %v656
    %1742 = vmatmul.mubr.bf16.gmra.mrb[0].mxu0 %v655
    %v1743 = vpop.f32.mrb[0].mxu0
    %v1744 = vadd.f32 %v1701, %v1743
    %v1745 = vpop.f32.mrb[0].mxu0
    %v1746 = vadd.f32 %v1703, %v1745
    %v1747 = vpop.f32.mrb[0].mxu0
    %v1748 = vadd.f32 %v1705, %v1747
    %v1749 = vpop.f32.mrb[0].mxu0
    %v1750 = vadd.f32 %v1707, %v1749
    %1751 = vdwg.mxu0
    %1752 = vmatprep.subr.bf16.mxu0 %v1242
    %1753 = vmatpush1.bf16.msra.mxu0 %v1241
    %1754 = vmatprep.subr.bf16.mxu0 %v1246
    %1755 = vmatpush1.bf16.msra.mxu0 %v1245
    %1756 = vmatprep.subr.bf16.mxu0 %v1250
    %1757 = vmatpush1.bf16.msra.mxu0 %v1249
    %1758 = vmatprep.subr.bf16.mxu0 %v1254
    %1759 = vmatpush1.bf16.msra.mxu0 %v1253
    %1760 = vmatprep.subr.bf16.mxu0 %v1258
    %1761 = vmatpush1.bf16.msra.mxu0 %v1257
    %1762 = vmatprep.subr.bf16.mxu0 %v1262
    %1763 = vmatpush1.bf16.msra.mxu0 %v1261
    %1764 = vmatprep.subr.bf16.mxu0 %v1266
    %1765 = vmatpush1.bf16.msra.mxu0 %v1265
    %1766 = vmatprep.subr.bf16.mxu0 %v1270
    %1767 = vmatpush1.bf16.msra.mxu0 %v1269
    %1768 = vmatprep.subr.bf16.mxu0 %v1274
    %1769 = vmatpush1.bf16.msra.mxu0 %v1273
    %1770 = vmatprep.subr.bf16.mxu0 %v1278
    %1771 = vmatpush1.bf16.msra.mxu0 %v1277
    %1772 = vmatprep.subr.bf16.mxu0 %v1282
    %1773 = vmatpush1.bf16.msra.mxu0 %v1281
    %1774 = vmatprep.subr.bf16.mxu0 %v1286
    %1775 = vmatpush1.bf16.msra.mxu0 %v1285
    %1776 = vmatprep.subr.bf16.mxu0 %v1290
    %1777 = vmatpush1.bf16.msra.mxu0 %v1289
    %1778 = vmatprep.subr.bf16.mxu0 %v1294
    %1779 = vmatpush1.bf16.msra.mxu0 %v1293
    %1780 = vmatprep.subr.bf16.mxu0 %v1298
    %1781 = vmatpush1.bf16.msra.mxu0 %v1297
    %1782 = vmatprep.subr.bf16.mxu0 %v1302
    %1783 = vmatpush1.bf16.msra.mxu0 %v1301
    %1784 = vmatprep.mubr.bf16.mxu0 %v652
    %1785 = vmatmul.mubr.bf16.gmra.mrb[0].mxu0 %v651
    %v1786 = vpop.f32.mrb[0].mxu0
    %v1787 = vadd.f32 0.0, %v1786
    %v1788 = vpop.f32.mrb[0].mxu0
    %v1789 = vadd.f32 0.0, %v1788
    %v1790 = vpop.f32.mrb[0].mxu0
    %v1791 = vadd.f32 0.0, %v1790
    %v1792 = vpop.f32.mrb[0].mxu0
    %v1793 = vadd.f32 0.0, %v1792
    %1794 = vdwg.mxu0
    %1795 = vmatprep.subr.bf16.mxu0 %v1306
    %1796 = vmatpush1.bf16.msra.mxu0 %v1305
    %1797 = vmatprep.subr.bf16.mxu0 %v1310
    %1798 = vmatpush1.bf16.msra.mxu0 %v1309
    %1799 = vmatprep.subr.bf16.mxu0 %v1314
    %1800 = vmatpush1.bf16.msra.mxu0 %v1313
    %1801 = vmatprep.subr.bf16.mxu0 %v1318
    %1802 = vmatpush1.bf16.msra.mxu0 %v1317
    %1803 = vmatprep.subr.bf16.mxu0 %v1322
    %1804 = vmatpush1.bf16.msra.mxu0 %v1321
    %1805 = vmatprep.subr.bf16.mxu0 %v1326
    %1806 = vmatpush1.bf16.msra.mxu0 %v1325
    %1807 = vmatprep.subr.bf16.mxu0 %v1330
    %1808 = vmatpush1.bf16.msra.mxu0 %v1329
    %1809 = vmatprep.subr.bf16.mxu0 %v1334
    %1810 = vmatpush1.bf16.msra.mxu0 %v1333
    %1811 = vmatprep.subr.bf16.mxu0 %v1338
    %1812 = vmatpush1.bf16.msra.mxu0 %v1337
    %1813 = vmatprep.subr.bf16.mxu0 %v1342
    %1814 = vmatpush1.bf16.msra.mxu0 %v1341
    %1815 = vmatprep.subr.bf16.mxu0 %v1346
    %1816 = vmatpush1.bf16.msra.mxu0 %v1345
    %1817 = vmatprep.subr.bf16.mxu0 %v1350
    %1818 = vmatpush1.bf16.msra.mxu0 %v1349
    %1819 = vmatprep.subr.bf16.mxu0 %v1354
    %1820 = vmatpush1.bf16.msra.mxu0 %v1353
    %1821 = vmatprep.subr.bf16.mxu0 %v1358
    %1822 = vmatpush1.bf16.msra.mxu0 %v1357
    %1823 = vmatprep.subr.bf16.mxu0 %v1362
    %1824 = vmatpush1.bf16.msra.mxu0 %v1361
    %1825 = vmatprep.subr.bf16.mxu0 %v1366
    %1826 = vmatpush1.bf16.msra.mxu0 %v1365
    %1827 = vmatprep.mubr.bf16.mxu0 %v654
    %1828 = vmatmul.mubr.bf16.gmra.mrb[0].mxu0 %v653
    %v1829 = vpop.f32.mrb[0].mxu0
    %v1830 = vadd.f32 %v1787, %v1829
    %v1831 = vpop.f32.mrb[0].mxu0
    %v1832 = vadd.f32 %v1789, %v1831
    %v1833 = vpop.f32.mrb[0].mxu0
    %v1834 = vadd.f32 %v1791, %v1833
    %v1835 = vpop.f32.mrb[0].mxu0
    %v1836 = vadd.f32 %v1793, %v1835
    %1837 = vdwg.mxu0
    %1838 = vmatprep.subr.bf16.mxu0 %v1370
    %1839 = vmatpush1.bf16.msra.mxu0 %v1369
    %1840 = vmatprep.subr.bf16.mxu0 %v1374
    %1841 = vmatpush1.bf16.msra.mxu0 %v1373
    %1842 = vmatprep.subr.bf16.mxu0 %v1378
    %1843 = vmatpush1.bf16.msra.mxu0 %v1377
    %1844 = vmatprep.subr.bf16.mxu0 %v1382
    %1845 = vmatpush1.bf16.msra.mxu0 %v1381
    %1846 = vmatprep.subr.bf16.mxu0 %v1386
    %1847 = vmatpush1.bf16.msra.mxu0 %v1385
    %1848 = vmatprep.subr.bf16.mxu0 %v1390
    %1849 = vmatpush1.bf16.msra.mxu0 %v1389
    %1850 = vmatprep.subr.bf16.mxu0 %v1394
    %1851 = vmatpush1.bf16.msra.mxu0 %v1393
    %1852 = vmatprep.subr.bf16.mxu0 %v1398
    %1853 = vmatpush1.bf16.msra.mxu0 %v1397
    %1854 = vmatprep.subr.bf16.mxu0 %v1402
    %1855 = vmatpush1.bf16.msra.mxu0 %v1401
    %1856 = vmatprep.subr.bf16.mxu0 %v1406
    %1857 = vmatpush1.bf16.msra.mxu0 %v1405
    %1858 = vmatprep.subr.bf16.mxu0 %v1410
    %1859 = vmatpush1.bf16.msra.mxu0 %v1409
    %1860 = vmatprep.subr.bf16.mxu0 %v1414
    %1861 = vmatpush1.bf16.msra.mxu0 %v1413
    %1862 = vmatprep.subr.bf16.mxu0 %v1418
    %1863 = vmatpush1.bf16.msra.mxu0 %v1417
    %1864 = vmatprep.subr.bf16.mxu0 %v1422
    %1865 = vmatpush1.bf16.msra.mxu0 %v1421
    %1866 = vmatprep.subr.bf16.mxu0 %v1426
    %1867 = vmatpush1.bf16.msra.mxu0 %v1425
    %1868 = vmatprep.subr.bf16.mxu0 %v1430
    %1869 = vmatpush1.bf16.msra.mxu0 %v1429
    %1870 = vmatprep.mubr.bf16.mxu0 %v656
    %1871 = vmatmul.mubr.bf16.gmra.mrb[0].mxu0 %v655
    %v1872 = vpop.f32.mrb[0].mxu0
    %v1873 = vadd.f32 %v1830, %v1872
    %v1874 = vpop.f32.mrb[0].mxu0
    %v1875 = vadd.f32 %v1832, %v1874
    %v1876 = vpop.f32.mrb[0].mxu0
    %v1877 = vadd.f32 %v1834, %v1876
    %v1878 = vpop.f32.mrb[0].mxu0
    %v1879 = vadd.f32 %v1836, %v1878
    %1880 = vdwg.mxu0
    %v1889 = vunpack.c.l.b16 %v171
    %v1890 = vunpack.c.h.b16 %v171
    %v1891 = vunpack.c.l.b16 %v172
    %v1892 = vunpack.c.h.b16 %v172
    %v1893 = vunpack.c.l.b16 %v173
    %v1894 = vunpack.c.h.b16 %v173
    %v1895 = vunpack.c.l.b16 %v174
    %v1896 = vunpack.c.h.b16 %v174
    %v1897 = vunpack.c.l.b16 %v175
    %v1898 = vunpack.c.h.b16 %v175
    %v1899 = vunpack.c.l.b16 %v176
    %v1900 = vunpack.c.h.b16 %v176
    %v1901 = vunpack.c.l.b16 %v177
    %v1902 = vunpack.c.h.b16 %v177
    %v1903 = vunpack.c.l.b16 %v178
    %v1904 = vunpack.c.h.b16 %v178
    %v1905 = vpack.c.b16 %v1897, %v1889
    %v1906 = vpack.c.b16 %v1898, %v1890
    %v1907 = vpack.c.b16 %v1899, %v1891
    %v1908 = vpack.c.b16 %v1900, %v1892
    %v1909 = vpack.c.b16 %v1901, %v1893
    %v1910 = vpack.c.b16 %v1902, %v1894
    %v1911 = vpack.c.b16 %v1903, %v1895
    %v1912 = vpack.c.b16 %v1904, %v1896
    %v2177 = vunpack.c.l.b16 %v185
    %v2178 = vunpack.c.h.b16 %v185
    %v2179 = vunpack.c.l.b16 %v186
    %v2180 = vunpack.c.h.b16 %v186
    %v2181 = vunpack.c.l.b16 %v187
    %v2182 = vunpack.c.h.b16 %v187
    %v2183 = vunpack.c.l.b16 %v188
    %v2184 = vunpack.c.h.b16 %v188
    %v2185 = vunpack.c.l.b16 %v189
    %v2186 = vunpack.c.h.b16 %v189
    %v2187 = vunpack.c.l.b16 %v190
    %v2188 = vunpack.c.h.b16 %v190
    %v2189 = vunpack.c.l.b16 %v191
    %v2190 = vunpack.c.h.b16 %v191
    %v2191 = vunpack.c.l.b16 %v192
    %v2192 = vunpack.c.h.b16 %v192
    %v2193 = vunpack.c.l.b16 %v193
    %v2194 = vunpack.c.h.b16 %v193
    %v2195 = vunpack.c.l.b16 %v194
    %v2196 = vunpack.c.h.b16 %v194
    %v2197 = vunpack.c.l.b16 %v195
    %v2198 = vunpack.c.h.b16 %v195
    %v2199 = vunpack.c.l.b16 %v196
    %v2200 = vunpack.c.h.b16 %v196
    %v2201 = vunpack.c.l.b16 %v197
    %v2202 = vunpack.c.h.b16 %v197
    %v2203 = vunpack.c.l.b16 %v198
    %v2204 = vunpack.c.h.b16 %v198
    %v2205 = vunpack.c.l.b16 %v199
    %v2206 = vunpack.c.h.b16 %v199
    %v2207 = vunpack.c.l.b16 %v200
    %v2208 = vunpack.c.h.b16 %v200
    %v2209 = vunpack.c.l.b16 %v201
    %v2210 = vunpack.c.h.b16 %v201
    %v2211 = vunpack.c.l.b16 %v202
    %v2212 = vunpack.c.h.b16 %v202
    %v2213 = vunpack.c.l.b16 %v203
    %v2214 = vunpack.c.h.b16 %v203
    %v2215 = vunpack.c.l.b16 %v204
    %v2216 = vunpack.c.h.b16 %v204
    %v2217 = vunpack.c.l.b16 %v205
    %v2218 = vunpack.c.h.b16 %v205
    %v2219 = vunpack.c.l.b16 %v206
    %v2220 = vunpack.c.h.b16 %v206
    %v2221 = vunpack.c.l.b16 %v207
    %v2222 = vunpack.c.h.b16 %v207
    %v2223 = vunpack.c.l.b16 %v208
    %v2224 = vunpack.c.h.b16 %v208
    %v2225 = vunpack.c.l.b16 %v209
    %v2226 = vunpack.c.h.b16 %v209
    %v2227 = vunpack.c.l.b16 %v210
    %v2228 = vunpack.c.h.b16 %v210
    %v2229 = vunpack.c.l.b16 %v211
    %v2230 = vunpack.c.h.b16 %v211
    %v2231 = vunpack.c.l.b16 %v212
    %v2232 = vunpack.c.h.b16 %v212
    %v2233 = vunpack.c.l.b16 %v213
    %v2234 = vunpack.c.h.b16 %v213
    %v2235 = vunpack.c.l.b16 %v214
    %v2236 = vunpack.c.h.b16 %v214
    %v2237 = vunpack.c.l.b16 %v215
    %v2238 = vunpack.c.h.b16 %v215
    %v2239 = vunpack.c.l.b16 %v216
    %v2240 = vunpack.c.h.b16 %v216
    %v2241 = vunpack.c.l.b16 %v217
    %v2242 = vunpack.c.h.b16 %v217
    %v2243 = vunpack.c.l.b16 %v218
    %v2244 = vunpack.c.h.b16 %v218
    %v2245 = vunpack.c.l.b16 %v219
    %v2246 = vunpack.c.h.b16 %v219
    %v2247 = vunpack.c.l.b16 %v220
    %v2248 = vunpack.c.h.b16 %v220
    %v2249 = vunpack.c.l.b16 %v221
    %v2250 = vunpack.c.h.b16 %v221
    %v2251 = vunpack.c.l.b16 %v222
    %v2252 = vunpack.c.h.b16 %v222
    %v2253 = vunpack.c.l.b16 %v223
    %v2254 = vunpack.c.h.b16 %v223
    %v2255 = vunpack.c.l.b16 %v224
    %v2256 = vunpack.c.h.b16 %v224
    %v2257 = vunpack.c.l.b16 %v225
    %v2258 = vunpack.c.h.b16 %v225
    %v2259 = vunpack.c.l.b16 %v226
    %v2260 = vunpack.c.h.b16 %v226
    %v2261 = vunpack.c.l.b16 %v227
    %v2262 = vunpack.c.h.b16 %v227
    %v2263 = vunpack.c.l.b16 %v228
    %v2264 = vunpack.c.h.b16 %v228
    %v2265 = vunpack.c.l.b16 %v229
    %v2266 = vunpack.c.h.b16 %v229
    %v2267 = vunpack.c.l.b16 %v230
    %v2268 = vunpack.c.h.b16 %v230
    %v2269 = vunpack.c.l.b16 %v231
    %v2270 = vunpack.c.h.b16 %v231
    %v2271 = vunpack.c.l.b16 %v232
    %v2272 = vunpack.c.h.b16 %v232
    %v2273 = vunpack.c.l.b16 %v233
    %v2274 = vunpack.c.h.b16 %v233
    %v2275 = vunpack.c.l.b16 %v234
    %v2276 = vunpack.c.h.b16 %v234
    %v2277 = vunpack.c.l.b16 %v235
    %v2278 = vunpack.c.h.b16 %v235
    %v2279 = vunpack.c.l.b16 %v236
    %v2280 = vunpack.c.h.b16 %v236
    %v2281 = vunpack.c.l.b16 %v237
    %v2282 = vunpack.c.h.b16 %v237
    %v2283 = vunpack.c.l.b16 %v238
    %v2284 = vunpack.c.h.b16 %v238
    %v2285 = vunpack.c.l.b16 %v239
    %v2286 = vunpack.c.h.b16 %v239
    %v2287 = vunpack.c.l.b16 %v240
    %v2288 = vunpack.c.h.b16 %v240
    %v2289 = vunpack.c.l.b16 %v241
    %v2290 = vunpack.c.h.b16 %v241
    %v2291 = vunpack.c.l.b16 %v242
    %v2292 = vunpack.c.h.b16 %v242
    %v2293 = vunpack.c.l.b16 %v243
    %v2294 = vunpack.c.h.b16 %v243
    %v2295 = vunpack.c.l.b16 %v244
    %v2296 = vunpack.c.h.b16 %v244
    %v2297 = vunpack.c.l.b16 %v245
    %v2298 = vunpack.c.h.b16 %v245
    %v2299 = vunpack.c.l.b16 %v246
    %v2300 = vunpack.c.h.b16 %v246
    %v2301 = vunpack.c.l.b16 %v247
    %v2302 = vunpack.c.h.b16 %v247
    %v2303 = vunpack.c.l.b16 %v248
    %v2304 = vunpack.c.h.b16 %v248
    %v2305 = vunpack.c.l.b16 %v249
    %v2306 = vunpack.c.h.b16 %v249
    %v2307 = vunpack.c.l.b16 %v250
    %v2308 = vunpack.c.h.b16 %v250
    %v2309 = vunpack.c.l.b16 %v251
    %v2310 = vunpack.c.h.b16 %v251
    %v2311 = vunpack.c.l.b16 %v252
    %v2312 = vunpack.c.h.b16 %v252
    %v2313 = vunpack.c.l.b16 %v253
    %v2314 = vunpack.c.h.b16 %v253
    %v2315 = vunpack.c.l.b16 %v254
    %v2316 = vunpack.c.h.b16 %v254
    %v2317 = vunpack.c.l.b16 %v255
    %v2318 = vunpack.c.h.b16 %v255
    %v2319 = vunpack.c.l.b16 %v256
    %v2320 = vunpack.c.h.b16 %v256
    %v2321 = vunpack.c.l.b16 %v257
    %v2322 = vunpack.c.h.b16 %v257
    %v2323 = vunpack.c.l.b16 %v258
    %v2324 = vunpack.c.h.b16 %v258
    %v2325 = vunpack.c.l.b16 %v259
    %v2326 = vunpack.c.h.b16 %v259
    %v2327 = vunpack.c.l.b16 %v260
    %v2328 = vunpack.c.h.b16 %v260
    %v2329 = vunpack.c.l.b16 %v261
    %v2330 = vunpack.c.h.b16 %v261
    %v2331 = vunpack.c.l.b16 %v262
    %v2332 = vunpack.c.h.b16 %v262
    %v2333 = vunpack.c.l.b16 %v263
    %v2334 = vunpack.c.h.b16 %v263
    %v2335 = vunpack.c.l.b16 %v264
    %v2336 = vunpack.c.h.b16 %v264
    %v2337 = vunpack.c.l.b16 %v265
    %v2338 = vunpack.c.h.b16 %v265
    %v2339 = vunpack.c.l.b16 %v266
    %v2340 = vunpack.c.h.b16 %v266
    %v2341 = vunpack.c.l.b16 %v267
    %v2342 = vunpack.c.h.b16 %v267
    %v2343 = vunpack.c.l.b16 %v268
    %v2344 = vunpack.c.h.b16 %v268
    %v2345 = vunpack.c.l.b16 %v269
    %v2346 = vunpack.c.h.b16 %v269
    %v2347 = vunpack.c.l.b16 %v270
    %v2348 = vunpack.c.h.b16 %v270
    %v2349 = vunpack.c.l.b16 %v271
    %v2350 = vunpack.c.h.b16 %v271
    %v2351 = vunpack.c.l.b16 %v272
    %v2352 = vunpack.c.h.b16 %v272
    %v2353 = vunpack.c.l.b16 %v273
    %v2354 = vunpack.c.h.b16 %v273
    %v2355 = vunpack.c.l.b16 %v274
    %v2356 = vunpack.c.h.b16 %v274
    %v2357 = vunpack.c.l.b16 %v275
    %v2358 = vunpack.c.h.b16 %v275
    %v2359 = vunpack.c.l.b16 %v276
    %v2360 = vunpack.c.h.b16 %v276
    %v2361 = vunpack.c.l.b16 %v277
    %v2362 = vunpack.c.h.b16 %v277
    %v2363 = vunpack.c.l.b16 %v278
    %v2364 = vunpack.c.h.b16 %v278
    %v2365 = vunpack.c.l.b16 %v279
    %v2366 = vunpack.c.h.b16 %v279
    %v2367 = vunpack.c.l.b16 %v280
    %v2368 = vunpack.c.h.b16 %v280
    %v2369 = vunpack.c.l.b16 %v281
    %v2370 = vunpack.c.h.b16 %v281
    %v2371 = vunpack.c.l.b16 %v282
    %v2372 = vunpack.c.h.b16 %v282
    %v2373 = vunpack.c.l.b16 %v283
    %v2374 = vunpack.c.h.b16 %v283
    %v2375 = vunpack.c.l.b16 %v284
    %v2376 = vunpack.c.h.b16 %v284
    %v2377 = vunpack.c.l.b16 %v285
    %v2378 = vunpack.c.h.b16 %v285
    %v2379 = vunpack.c.l.b16 %v286
    %v2380 = vunpack.c.h.b16 %v286
    %v2381 = vunpack.c.l.b16 %v287
    %v2382 = vunpack.c.h.b16 %v287
    %v2383 = vunpack.c.l.b16 %v288
    %v2384 = vunpack.c.h.b16 %v288
    %v2385 = vunpack.c.l.b16 %v289
    %v2386 = vunpack.c.h.b16 %v289
    %v2387 = vunpack.c.l.b16 %v290
    %v2388 = vunpack.c.h.b16 %v290
    %v2389 = vunpack.c.l.b16 %v291
    %v2390 = vunpack.c.h.b16 %v291
    %v2391 = vunpack.c.l.b16 %v292
    %v2392 = vunpack.c.h.b16 %v292
    %v2393 = vunpack.c.l.b16 %v293
    %v2394 = vunpack.c.h.b16 %v293
    %v2395 = vunpack.c.l.b16 %v294
    %v2396 = vunpack.c.h.b16 %v294
    %v2397 = vunpack.c.l.b16 %v295
    %v2398 = vunpack.c.h.b16 %v295
    %v2399 = vunpack.c.l.b16 %v296
    %v2400 = vunpack.c.h.b16 %v296
    %v2401 = vunpack.c.l.b16 %v297
    %v2402 = vunpack.c.h.b16 %v297
    %v2403 = vunpack.c.l.b16 %v298
    %v2404 = vunpack.c.h.b16 %v298
    %v2405 = vunpack.c.l.b16 %v299
    %v2406 = vunpack.c.h.b16 %v299
    %v2407 = vunpack.c.l.b16 %v300
    %v2408 = vunpack.c.h.b16 %v300
    %v2409 = vunpack.c.l.b16 %v301
    %v2410 = vunpack.c.h.b16 %v301
    %v2411 = vunpack.c.l.b16 %v302
    %v2412 = vunpack.c.h.b16 %v302
    %v2413 = vunpack.c.l.b16 %v303
    %v2414 = vunpack.c.h.b16 %v303
    %v2415 = vunpack.c.l.b16 %v304
    %v2416 = vunpack.c.h.b16 %v304
    %v2417 = vunpack.c.l.b16 %v305
    %v2418 = vunpack.c.h.b16 %v305
    %v2419 = vunpack.c.l.b16 %v306
    %v2420 = vunpack.c.h.b16 %v306
    %v2421 = vunpack.c.l.b16 %v307
    %v2422 = vunpack.c.h.b16 %v307
    %v2423 = vunpack.c.l.b16 %v308
    %v2424 = vunpack.c.h.b16 %v308
    %v2425 = vunpack.c.l.b16 %v309
    %v2426 = vunpack.c.h.b16 %v309
    %v2427 = vunpack.c.l.b16 %v310
    %v2428 = vunpack.c.h.b16 %v310
    %v2429 = vunpack.c.l.b16 %v311
    %v2430 = vunpack.c.h.b16 %v311
    %v2431 = vunpack.c.l.b16 %v312
    %v2432 = vunpack.c.h.b16 %v312
    %v2433 = vunpack.c.l.b16 %v313
    %v2434 = vunpack.c.h.b16 %v313
    %v2435 = vunpack.c.l.b16 %v314
    %v2436 = vunpack.c.h.b16 %v314
    %v2437 = vunpack.c.l.b16 %v315
    %v2438 = vunpack.c.h.b16 %v315
    %v2439 = vunpack.c.l.b16 %v316
    %v2440 = vunpack.c.h.b16 %v316
    %v2441 = vunpack.c.l.b16 %v317
    %v2442 = vunpack.c.h.b16 %v317
    %v2443 = vunpack.c.l.b16 %v318
    %v2444 = vunpack.c.h.b16 %v318
    %v2445 = vunpack.c.l.b16 %v319
    %v2446 = vunpack.c.h.b16 %v319
    %v2447 = vunpack.c.l.b16 %v320
    %v2448 = vunpack.c.h.b16 %v320
    %v2449 = vunpack.c.l.b16 %v321
    %v2450 = vunpack.c.h.b16 %v321
    %v2451 = vunpack.c.l.b16 %v322
    %v2452 = vunpack.c.h.b16 %v322
    %v2453 = vunpack.c.l.b16 %v323
    %v2454 = vunpack.c.h.b16 %v323
    %v2455 = vunpack.c.l.b16 %v324
    %v2456 = vunpack.c.h.b16 %v324
    %v2457 = vunpack.c.l.b16 %v325
    %v2458 = vunpack.c.h.b16 %v325
    %v2459 = vunpack.c.l.b16 %v326
    %v2460 = vunpack.c.h.b16 %v326
    %v2461 = vunpack.c.l.b16 %v327
    %v2462 = vunpack.c.h.b16 %v327
    %v2463 = vunpack.c.l.b16 %v328
    %v2464 = vunpack.c.h.b16 %v328
    %v2465 = vunpack.c.l.b16 %v329
    %v2466 = vunpack.c.h.b16 %v329
    %v2467 = vunpack.c.l.b16 %v330
    %v2468 = vunpack.c.h.b16 %v330
    %v2469 = vunpack.c.l.b16 %v331
    %v2470 = vunpack.c.h.b16 %v331
    %v2471 = vunpack.c.l.b16 %v332
    %v2472 = vunpack.c.h.b16 %v332
    %v2473 = vunpack.c.l.b16 %v333
    %v2474 = vunpack.c.h.b16 %v333
    %v2475 = vunpack.c.l.b16 %v334
    %v2476 = vunpack.c.h.b16 %v334
    %v2477 = vunpack.c.l.b16 %v335
    %v2478 = vunpack.c.h.b16 %v335
    %v2479 = vunpack.c.l.b16 %v336
    %v2480 = vunpack.c.h.b16 %v336
    %v2481 = vunpack.c.l.b16 %v337
    %v2482 = vunpack.c.h.b16 %v337
    %v2483 = vunpack.c.l.b16 %v338
    %v2484 = vunpack.c.h.b16 %v338
    %v2485 = vunpack.c.l.b16 %v339
    %v2486 = vunpack.c.h.b16 %v339
    %v2487 = vunpack.c.l.b16 %v340
    %v2488 = vunpack.c.h.b16 %v340
    %v2489 = vunpack.c.l.b16 %v341
    %v2490 = vunpack.c.h.b16 %v341
    %v2491 = vunpack.c.l.b16 %v342
    %v2492 = vunpack.c.h.b16 %v342
    %v2493 = vunpack.c.l.b16 %v343
    %v2494 = vunpack.c.h.b16 %v343
    %v2495 = vunpack.c.l.b16 %v344
    %v2496 = vunpack.c.h.b16 %v344
    %v2497 = vunpack.c.l.b16 %v345
    %v2498 = vunpack.c.h.b16 %v345
    %v2499 = vunpack.c.l.b16 %v346
    %v2500 = vunpack.c.h.b16 %v346
    %v2501 = vunpack.c.l.b16 %v347
    %v2502 = vunpack.c.h.b16 %v347
    %v2503 = vunpack.c.l.b16 %v348
    %v2504 = vunpack.c.h.b16 %v348
    %v2505 = vunpack.c.l.b16 %v349
    %v2506 = vunpack.c.h.b16 %v349
    %v2507 = vunpack.c.l.b16 %v350
    %v2508 = vunpack.c.h.b16 %v350
    %v2509 = vunpack.c.l.b16 %v351
    %v2510 = vunpack.c.h.b16 %v351
    %v2511 = vunpack.c.l.b16 %v352
    %v2512 = vunpack.c.h.b16 %v352
    %v2513 = vunpack.c.l.b16 %v353
    %v2514 = vunpack.c.h.b16 %v353
    %v2515 = vunpack.c.l.b16 %v354
    %v2516 = vunpack.c.h.b16 %v354
    %v2517 = vunpack.c.l.b16 %v355
    %v2518 = vunpack.c.h.b16 %v355
    %v2519 = vunpack.c.l.b16 %v356
    %v2520 = vunpack.c.h.b16 %v356
    %v2521 = vunpack.c.l.b16 %v357
    %v2522 = vunpack.c.h.b16 %v357
    %v2523 = vunpack.c.l.b16 %v358
    %v2524 = vunpack.c.h.b16 %v358
    %v2525 = vunpack.c.l.b16 %v359
    %v2526 = vunpack.c.h.b16 %v359
    %v2527 = vunpack.c.l.b16 %v360
    %v2528 = vunpack.c.h.b16 %v360
    %v2529 = vunpack.c.l.b16 %v361
    %v2530 = vunpack.c.h.b16 %v361
    %v2531 = vunpack.c.l.b16 %v362
    %v2532 = vunpack.c.h.b16 %v362
    %v2533 = vunpack.c.l.b16 %v363
    %v2534 = vunpack.c.h.b16 %v363
    %v2535 = vunpack.c.l.b16 %v364
    %v2536 = vunpack.c.h.b16 %v364
    %v2537 = vunpack.c.l.b16 %v365
    %v2538 = vunpack.c.h.b16 %v365
    %v2539 = vunpack.c.l.b16 %v366
    %v2540 = vunpack.c.h.b16 %v366
    %v2541 = vunpack.c.l.b16 %v367
    %v2542 = vunpack.c.h.b16 %v367
    %v2543 = vunpack.c.l.b16 %v368
    %v2544 = vunpack.c.h.b16 %v368
    %v2545 = vunpack.c.l.b16 %v369
    %v2546 = vunpack.c.h.b16 %v369
    %v2547 = vunpack.c.l.b16 %v370
    %v2548 = vunpack.c.h.b16 %v370
    %v2549 = vunpack.c.l.b16 %v371
    %v2550 = vunpack.c.h.b16 %v371
    %v2551 = vunpack.c.l.b16 %v372
    %v2552 = vunpack.c.h.b16 %v372
    %v2553 = vunpack.c.l.b16 %v373
    %v2554 = vunpack.c.h.b16 %v373
    %v2555 = vunpack.c.l.b16 %v374
    %v2556 = vunpack.c.h.b16 %v374
    %v2557 = vunpack.c.l.b16 %v375
    %v2558 = vunpack.c.h.b16 %v375
    %v2559 = vunpack.c.l.b16 %v376
    %v2560 = vunpack.c.h.b16 %v376
    %v2561 = vunpack.c.l.b16 %v377
    %v2562 = vunpack.c.h.b16 %v377
    %v2563 = vunpack.c.l.b16 %v378
    %v2564 = vunpack.c.h.b16 %v378
    %v2565 = vunpack.c.l.b16 %v379
    %v2566 = vunpack.c.h.b16 %v379
    %v2567 = vunpack.c.l.b16 %v380
    %v2568 = vunpack.c.h.b16 %v380
    %v2569 = vunpack.c.l.b16 %v381
    %v2570 = vunpack.c.h.b16 %v381
    %v2571 = vunpack.c.l.b16 %v382
    %v2572 = vunpack.c.h.b16 %v382
    %v2573 = vunpack.c.l.b16 %v383
    %v2574 = vunpack.c.h.b16 %v383
    %v2575 = vunpack.c.l.b16 %v384
    %v2576 = vunpack.c.h.b16 %v384
    %v2577 = vunpack.c.l.b16 %v385
    %v2578 = vunpack.c.h.b16 %v385
    %v2579 = vunpack.c.l.b16 %v386
    %v2580 = vunpack.c.h.b16 %v386
    %v2581 = vunpack.c.l.b16 %v387
    %v2582 = vunpack.c.h.b16 %v387
    %v2583 = vunpack.c.l.b16 %v388
    %v2584 = vunpack.c.h.b16 %v388
    %v2585 = vunpack.c.l.b16 %v389
    %v2586 = vunpack.c.h.b16 %v389
    %v2587 = vunpack.c.l.b16 %v390
    %v2588 = vunpack.c.h.b16 %v390
    %v2589 = vunpack.c.l.b16 %v391
    %v2590 = vunpack.c.h.b16 %v391
    %v2591 = vunpack.c.l.b16 %v392
    %v2592 = vunpack.c.h.b16 %v392
    %v2593 = vunpack.c.l.b16 %v393
    %v2594 = vunpack.c.h.b16 %v393
    %v2595 = vunpack.c.l.b16 %v394
    %v2596 = vunpack.c.h.b16 %v394
    %v2597 = vunpack.c.l.b16 %v395
    %v2598 = vunpack.c.h.b16 %v395
    %v2599 = vunpack.c.l.b16 %v396
    %v2600 = vunpack.c.h.b16 %v396
    %v2601 = vunpack.c.l.b16 %v397
    %v2602 = vunpack.c.h.b16 %v397
    %v2603 = vunpack.c.l.b16 %v398
    %v2604 = vunpack.c.h.b16 %v398
    %v2605 = vunpack.c.l.b16 %v399
    %v2606 = vunpack.c.h.b16 %v399
    %v2607 = vunpack.c.l.b16 %v400
    %v2608 = vunpack.c.h.b16 %v400
    %v2609 = vunpack.c.l.b16 %v401
    %v2610 = vunpack.c.h.b16 %v401
    %v2611 = vunpack.c.l.b16 %v402
    %v2612 = vunpack.c.h.b16 %v402
    %v2613 = vunpack.c.l.b16 %v403
    %v2614 = vunpack.c.h.b16 %v403
    %v2615 = vunpack.c.l.b16 %v404
    %v2616 = vunpack.c.h.b16 %v404
    %v2617 = vunpack.c.l.b16 %v405
    %v2618 = vunpack.c.h.b16 %v405
    %v2619 = vunpack.c.l.b16 %v406
    %v2620 = vunpack.c.h.b16 %v406
    %v2621 = vunpack.c.l.b16 %v407
    %v2622 = vunpack.c.h.b16 %v407
    %v2623 = vunpack.c.l.b16 %v408
    %v2624 = vunpack.c.h.b16 %v408
    %v2625 = vunpack.c.l.b16 %v409
    %v2626 = vunpack.c.h.b16 %v409
    %v2627 = vunpack.c.l.b16 %v410
    %v2628 = vunpack.c.h.b16 %v410
    %v2629 = vunpack.c.l.b16 %v411
    %v2630 = vunpack.c.h.b16 %v411
    %v2631 = vunpack.c.l.b16 %v412
    %v2632 = vunpack.c.h.b16 %v412
    %v2633 = vunpack.c.l.b16 %v413
    %v2634 = vunpack.c.h.b16 %v413
    %v2635 = vunpack.c.l.b16 %v414
    %v2636 = vunpack.c.h.b16 %v414
    %v2637 = vunpack.c.l.b16 %v415
    %v2638 = vunpack.c.h.b16 %v415
    %v2639 = vunpack.c.l.b16 %v416
    %v2640 = vunpack.c.h.b16 %v416
    %v2641 = vunpack.c.l.b16 %v417
    %v2642 = vunpack.c.h.b16 %v417
    %v2643 = vunpack.c.l.b16 %v418
    %v2644 = vunpack.c.h.b16 %v418
    %v2645 = vunpack.c.l.b16 %v419
    %v2646 = vunpack.c.h.b16 %v419
    %v2647 = vunpack.c.l.b16 %v420
    %v2648 = vunpack.c.h.b16 %v420
    %v2649 = vunpack.c.l.b16 %v421
    %v2650 = vunpack.c.h.b16 %v421
    %v2651 = vunpack.c.l.b16 %v422
    %v2652 = vunpack.c.h.b16 %v422
    %v2653 = vunpack.c.l.b16 %v423
    %v2654 = vunpack.c.h.b16 %v423
    %v2655 = vunpack.c.l.b16 %v424
    %v2656 = vunpack.c.h.b16 %v424
    %v2657 = vunpack.c.l.b16 %v425
    %v2658 = vunpack.c.h.b16 %v425
    %v2659 = vunpack.c.l.b16 %v426
    %v2660 = vunpack.c.h.b16 %v426
    %v2661 = vunpack.c.l.b16 %v427
    %v2662 = vunpack.c.h.b16 %v427
    %v2663 = vunpack.c.l.b16 %v428
    %v2664 = vunpack.c.h.b16 %v428
    %v2665 = vunpack.c.l.b16 %v429
    %v2666 = vunpack.c.h.b16 %v429
    %v2667 = vunpack.c.l.b16 %v430
    %v2668 = vunpack.c.h.b16 %v430
    %v2669 = vunpack.c.l.b16 %v431
    %v2670 = vunpack.c.h.b16 %v431
    %v2671 = vunpack.c.l.b16 %v432
    %v2672 = vunpack.c.h.b16 %v432
    %v2673 = vunpack.c.l.b16 %v433
    %v2674 = vunpack.c.h.b16 %v433
    %v2675 = vunpack.c.l.b16 %v434
    %v2676 = vunpack.c.h.b16 %v434
    %v2677 = vunpack.c.l.b16 %v435
    %v2678 = vunpack.c.h.b16 %v435
    %v2679 = vunpack.c.l.b16 %v436
    %v2680 = vunpack.c.h.b16 %v436
    %v2681 = vunpack.c.l.b16 %v437
    %v2682 = vunpack.c.h.b16 %v437
    %v2683 = vunpack.c.l.b16 %v438
    %v2684 = vunpack.c.h.b16 %v438
    %v2685 = vunpack.c.l.b16 %v439
    %v2686 = vunpack.c.h.b16 %v439
    %v2687 = vunpack.c.l.b16 %v440
    %v2688 = vunpack.c.h.b16 %v440
    %v2689 = vpack.c.b16 %v2181, %v2177
    %v2690 = vpack.c.b16 %v2182, %v2178
    %v2691 = vpack.c.b16 %v2183, %v2179
    %v2692 = vpack.c.b16 %v2184, %v2180
    %v2693 = vpack.c.b16 %v2189, %v2185
    %v2694 = vpack.c.b16 %v2190, %v2186
    %v2695 = vpack.c.b16 %v2191, %v2187
    %v2696 = vpack.c.b16 %v2192, %v2188
    %v2697 = vpack.c.b16 %v2197, %v2193
    %v2698 = vpack.c.b16 %v2198, %v2194
    %v2699 = vpack.c.b16 %v2199, %v2195
    %v2700 = vpack.c.b16 %v2200, %v2196
    %v2701 = vpack.c.b16 %v2205, %v2201
    %v2702 = vpack.c.b16 %v2206, %v2202
    %v2703 = vpack.c.b16 %v2207, %v2203
    %v2704 = vpack.c.b16 %v2208, %v2204
    %v2705 = vpack.c.b16 %v2213, %v2209
    %v2706 = vpack.c.b16 %v2214, %v2210
    %v2707 = vpack.c.b16 %v2215, %v2211
    %v2708 = vpack.c.b16 %v2216, %v2212
    %v2709 = vpack.c.b16 %v2221, %v2217
    %v2710 = vpack.c.b16 %v2222, %v2218
    %v2711 = vpack.c.b16 %v2223, %v2219
    %v2712 = vpack.c.b16 %v2224, %v2220
    %v2713 = vpack.c.b16 %v2229, %v2225
    %v2714 = vpack.c.b16 %v2230, %v2226
    %v2715 = vpack.c.b16 %v2231, %v2227
    %v2716 = vpack.c.b16 %v2232, %v2228
    %v2717 = vpack.c.b16 %v2237, %v2233
    %v2718 = vpack.c.b16 %v2238, %v2234
    %v2719 = vpack.c.b16 %v2239, %v2235
    %v2720 = vpack.c.b16 %v2240, %v2236
    %v2721 = vpack.c.b16 %v2245, %v2241
    %v2722 = vpack.c.b16 %v2246, %v2242
    %v2723 = vpack.c.b16 %v2247, %v2243
    %v2724 = vpack.c.b16 %v2248, %v2244
    %v2725 = vpack.c.b16 %v2253, %v2249
    %v2726 = vpack.c.b16 %v2254, %v2250
    %v2727 = vpack.c.b16 %v2255, %v2251
    %v2728 = vpack.c.b16 %v2256, %v2252
    %v2729 = vpack.c.b16 %v2261, %v2257
    %v2730 = vpack.c.b16 %v2262, %v2258
    %v2731 = vpack.c.b16 %v2263, %v2259
    %v2732 = vpack.c.b16 %v2264, %v2260
    %v2733 = vpack.c.b16 %v2269, %v2265
    %v2734 = vpack.c.b16 %v2270, %v2266
    %v2735 = vpack.c.b16 %v2271, %v2267
    %v2736 = vpack.c.b16 %v2272, %v2268
    %v2737 = vpack.c.b16 %v2277, %v2273
    %v2738 = vpack.c.b16 %v2278, %v2274
    %v2739 = vpack.c.b16 %v2279, %v2275
    %v2740 = vpack.c.b16 %v2280, %v2276
    %v2741 = vpack.c.b16 %v2285, %v2281
    %v2742 = vpack.c.b16 %v2286, %v2282
    %v2743 = vpack.c.b16 %v2287, %v2283
    %v2744 = vpack.c.b16 %v2288, %v2284
    %v2745 = vpack.c.b16 %v2293, %v2289
    %v2746 = vpack.c.b16 %v2294, %v2290
    %v2747 = vpack.c.b16 %v2295, %v2291
    %v2748 = vpack.c.b16 %v2296, %v2292
    %v2749 = vpack.c.b16 %v2301, %v2297
    %v2750 = vpack.c.b16 %v2302, %v2298
    %v2751 = vpack.c.b16 %v2303, %v2299
    %v2752 = vpack.c.b16 %v2304, %v2300
    %v2753 = vpack.c.b16 %v2309, %v2305
    %v2754 = vpack.c.b16 %v2310, %v2306
    %v2755 = vpack.c.b16 %v2311, %v2307
    %v2756 = vpack.c.b16 %v2312, %v2308
    %v2757 = vpack.c.b16 %v2317, %v2313
    %v2758 = vpack.c.b16 %v2318, %v2314
    %v2759 = vpack.c.b16 %v2319, %v2315
    %v2760 = vpack.c.b16 %v2320, %v2316
    %v2761 = vpack.c.b16 %v2325, %v2321
    %v2762 = vpack.c.b16 %v2326, %v2322
    %v2763 = vpack.c.b16 %v2327, %v2323
    %v2764 = vpack.c.b16 %v2328, %v2324
    %v2765 = vpack.c.b16 %v2333, %v2329
    %v2766 = vpack.c.b16 %v2334, %v2330
    %v2767 = vpack.c.b16 %v2335, %v2331
    %v2768 = vpack.c.b16 %v2336, %v2332
    %v2769 = vpack.c.b16 %v2341, %v2337
    %v2770 = vpack.c.b16 %v2342, %v2338
    %v2771 = vpack.c.b16 %v2343, %v2339
    %v2772 = vpack.c.b16 %v2344, %v2340
    %v2773 = vpack.c.b16 %v2349, %v2345
    %v2774 = vpack.c.b16 %v2350, %v2346
    %v2775 = vpack.c.b16 %v2351, %v2347
    %v2776 = vpack.c.b16 %v2352, %v2348
    %v2777 = vpack.c.b16 %v2357, %v2353
    %v2778 = vpack.c.b16 %v2358, %v2354
    %v2779 = vpack.c.b16 %v2359, %v2355
    %v2780 = vpack.c.b16 %v2360, %v2356
    %v2781 = vpack.c.b16 %v2365, %v2361
    %v2782 = vpack.c.b16 %v2366, %v2362
    %v2783 = vpack.c.b16 %v2367, %v2363
    %v2784 = vpack.c.b16 %v2368, %v2364
    %v2785 = vpack.c.b16 %v2373, %v2369
    %v2786 = vpack.c.b16 %v2374, %v2370
    %v2787 = vpack.c.b16 %v2375, %v2371
    %v2788 = vpack.c.b16 %v2376, %v2372
    %v2789 = vpack.c.b16 %v2381, %v2377
    %v2790 = vpack.c.b16 %v2382, %v2378
    %v2791 = vpack.c.b16 %v2383, %v2379
    %v2792 = vpack.c.b16 %v2384, %v2380
    %v2793 = vpack.c.b16 %v2389, %v2385
    %v2794 = vpack.c.b16 %v2390, %v2386
    %v2795 = vpack.c.b16 %v2391, %v2387
    %v2796 = vpack.c.b16 %v2392, %v2388
    %v2797 = vpack.c.b16 %v2397, %v2393
    %v2798 = vpack.c.b16 %v2398, %v2394
    %v2799 = vpack.c.b16 %v2399, %v2395
    %v2800 = vpack.c.b16 %v2400, %v2396
    %v2801 = vpack.c.b16 %v2405, %v2401
    %v2802 = vpack.c.b16 %v2406, %v2402
    %v2803 = vpack.c.b16 %v2407, %v2403
    %v2804 = vpack.c.b16 %v2408, %v2404
    %v2805 = vpack.c.b16 %v2413, %v2409
    %v2806 = vpack.c.b16 %v2414, %v2410
    %v2807 = vpack.c.b16 %v2415, %v2411
    %v2808 = vpack.c.b16 %v2416, %v2412
    %v2809 = vpack.c.b16 %v2421, %v2417
    %v2810 = vpack.c.b16 %v2422, %v2418
    %v2811 = vpack.c.b16 %v2423, %v2419
    %v2812 = vpack.c.b16 %v2424, %v2420
    %v2813 = vpack.c.b16 %v2429, %v2425
    %v2814 = vpack.c.b16 %v2430, %v2426
    %v2815 = vpack.c.b16 %v2431, %v2427
    %v2816 = vpack.c.b16 %v2432, %v2428
    %v2817 = vpack.c.b16 %v2437, %v2433
    %v2818 = vpack.c.b16 %v2438, %v2434
    %v2819 = vpack.c.b16 %v2439, %v2435
    %v2820 = vpack.c.b16 %v2440, %v2436
    %v2821 = vpack.c.b16 %v2445, %v2441
    %v2822 = vpack.c.b16 %v2446, %v2442
    %v2823 = vpack.c.b16 %v2447, %v2443
    %v2824 = vpack.c.b16 %v2448, %v2444
    %v2825 = vpack.c.b16 %v2453, %v2449
    %v2826 = vpack.c.b16 %v2454, %v2450
    %v2827 = vpack.c.b16 %v2455, %v2451
    %v2828 = vpack.c.b16 %v2456, %v2452
    %v2829 = vpack.c.b16 %v2461, %v2457
    %v2830 = vpack.c.b16 %v2462, %v2458
    %v2831 = vpack.c.b16 %v2463, %v2459
    %v2832 = vpack.c.b16 %v2464, %v2460
    %v2833 = vpack.c.b16 %v2469, %v2465
    %v2834 = vpack.c.b16 %v2470, %v2466
    %v2835 = vpack.c.b16 %v2471, %v2467
    %v2836 = vpack.c.b16 %v2472, %v2468
    %v2837 = vpack.c.b16 %v2477, %v2473
    %v2838 = vpack.c.b16 %v2478, %v2474
    %v2839 = vpack.c.b16 %v2479, %v2475
    %v2840 = vpack.c.b16 %v2480, %v2476
    %v2841 = vpack.c.b16 %v2485, %v2481
    %v2842 = vpack.c.b16 %v2486, %v2482
    %v2843 = vpack.c.b16 %v2487, %v2483
    %v2844 = vpack.c.b16 %v2488, %v2484
    %v2845 = vpack.c.b16 %v2493, %v2489
    %v2846 = vpack.c.b16 %v2494, %v2490
    %v2847 = vpack.c.b16 %v2495, %v2491
    %v2848 = vpack.c.b16 %v2496, %v2492
    %v2849 = vpack.c.b16 %v2501, %v2497
    %v2850 = vpack.c.b16 %v2502, %v2498
    %v2851 = vpack.c.b16 %v2503, %v2499
    %v2852 = vpack.c.b16 %v2504, %v2500
    %v2853 = vpack.c.b16 %v2509, %v2505
    %v2854 = vpack.c.b16 %v2510, %v2506
    %v2855 = vpack.c.b16 %v2511, %v2507
    %v2856 = vpack.c.b16 %v2512, %v2508
    %v2857 = vpack.c.b16 %v2517, %v2513
    %v2858 = vpack.c.b16 %v2518, %v2514
    %v2859 = vpack.c.b16 %v2519, %v2515
    %v2860 = vpack.c.b16 %v2520, %v2516
    %v2861 = vpack.c.b16 %v2525, %v2521
    %v2862 = vpack.c.b16 %v2526, %v2522
    %v2863 = vpack.c.b16 %v2527, %v2523
    %v2864 = vpack.c.b16 %v2528, %v2524
    %v2865 = vpack.c.b16 %v2533, %v2529
    %v2866 = vpack.c.b16 %v2534, %v2530
    %v2867 = vpack.c.b16 %v2535, %v2531
    %v2868 = vpack.c.b16 %v2536, %v2532
    %v2869 = vpack.c.b16 %v2541, %v2537
    %v2870 = vpack.c.b16 %v2542, %v2538
    %v2871 = vpack.c.b16 %v2543, %v2539
    %v2872 = vpack.c.b16 %v2544, %v2540
    %v2873 = vpack.c.b16 %v2549, %v2545
    %v2874 = vpack.c.b16 %v2550, %v2546
    %v2875 = vpack.c.b16 %v2551, %v2547
    %v2876 = vpack.c.b16 %v2552, %v2548
    %v2877 = vpack.c.b16 %v2557, %v2553
    %v2878 = vpack.c.b16 %v2558, %v2554
    %v2879 = vpack.c.b16 %v2559, %v2555
    %v2880 = vpack.c.b16 %v2560, %v2556
    %v2881 = vpack.c.b16 %v2565, %v2561
    %v2882 = vpack.c.b16 %v2566, %v2562
    %v2883 = vpack.c.b16 %v2567, %v2563
    %v2884 = vpack.c.b16 %v2568, %v2564
    %v2885 = vpack.c.b16 %v2573, %v2569
    %v2886 = vpack.c.b16 %v2574, %v2570
    %v2887 = vpack.c.b16 %v2575, %v2571
    %v2888 = vpack.c.b16 %v2576, %v2572
    %v2889 = vpack.c.b16 %v2581, %v2577
    %v2890 = vpack.c.b16 %v2582, %v2578
    %v2891 = vpack.c.b16 %v2583, %v2579
    %v2892 = vpack.c.b16 %v2584, %v2580
    %v2893 = vpack.c.b16 %v2589, %v2585
    %v2894 = vpack.c.b16 %v2590, %v2586
    %v2895 = vpack.c.b16 %v2591, %v2587
    %v2896 = vpack.c.b16 %v2592, %v2588
    %v2897 = vpack.c.b16 %v2597, %v2593
    %v2898 = vpack.c.b16 %v2598, %v2594
    %v2899 = vpack.c.b16 %v2599, %v2595
    %v2900 = vpack.c.b16 %v2600, %v2596
    %v2901 = vpack.c.b16 %v2605, %v2601
    %v2902 = vpack.c.b16 %v2606, %v2602
    %v2903 = vpack.c.b16 %v2607, %v2603
    %v2904 = vpack.c.b16 %v2608, %v2604
    %v2905 = vpack.c.b16 %v2613, %v2609
    %v2906 = vpack.c.b16 %v2614, %v2610
    %v2907 = vpack.c.b16 %v2615, %v2611
    %v2908 = vpack.c.b16 %v2616, %v2612
    %v2909 = vpack.c.b16 %v2621, %v2617
    %v2910 = vpack.c.b16 %v2622, %v2618
    %v2911 = vpack.c.b16 %v2623, %v2619
    %v2912 = vpack.c.b16 %v2624, %v2620
    %v2913 = vpack.c.b16 %v2629, %v2625
    %v2914 = vpack.c.b16 %v2630, %v2626
    %v2915 = vpack.c.b16 %v2631, %v2627
    %v2916 = vpack.c.b16 %v2632, %v2628
    %v2917 = vpack.c.b16 %v2637, %v2633
    %v2918 = vpack.c.b16 %v2638, %v2634
    %v2919 = vpack.c.b16 %v2639, %v2635
    %v2920 = vpack.c.b16 %v2640, %v2636
    %v2921 = vpack.c.b16 %v2645, %v2641
    %v2922 = vpack.c.b16 %v2646, %v2642
    %v2923 = vpack.c.b16 %v2647, %v2643
    %v2924 = vpack.c.b16 %v2648, %v2644
    %v2925 = vpack.c.b16 %v2653, %v2649
    %v2926 = vpack.c.b16 %v2654, %v2650
    %v2927 = vpack.c.b16 %v2655, %v2651
    %v2928 = vpack.c.b16 %v2656, %v2652
    %v2929 = vpack.c.b16 %v2661, %v2657
    %v2930 = vpack.c.b16 %v2662, %v2658
    %v2931 = vpack.c.b16 %v2663, %v2659
    %v2932 = vpack.c.b16 %v2664, %v2660
    %v2933 = vpack.c.b16 %v2669, %v2665
    %v2934 = vpack.c.b16 %v2670, %v2666
    %v2935 = vpack.c.b16 %v2671, %v2667
    %v2936 = vpack.c.b16 %v2672, %v2668
    %v2937 = vpack.c.b16 %v2677, %v2673
    %v2938 = vpack.c.b16 %v2678, %v2674
    %v2939 = vpack.c.b16 %v2679, %v2675
    %v2940 = vpack.c.b16 %v2680, %v2676
    %v2941 = vpack.c.b16 %v2685, %v2681
    %v2942 = vpack.c.b16 %v2686, %v2682
    %v2943 = vpack.c.b16 %v2687, %v2683
    %v2944 = vpack.c.b16 %v2688, %v2684
    %3201 = vmatprep.subr.bf16.mxu0 %v2690
    %3202 = vmatpush1.bf16.msra.mxu0 %v2689
    %3203 = vmatprep.subr.bf16.mxu0 %v2694
    %3204 = vmatpush1.bf16.msra.mxu0 %v2693
    %3205 = vmatprep.subr.bf16.mxu0 %v2698
    %3206 = vmatpush1.bf16.msra.mxu0 %v2697
    %3207 = vmatprep.subr.bf16.mxu0 %v2702
    %3208 = vmatpush1.bf16.msra.mxu0 %v2701
    %3209 = vmatprep.subr.bf16.mxu0 %v2706
    %3210 = vmatpush1.bf16.msra.mxu0 %v2705
    %3211 = vmatprep.subr.bf16.mxu0 %v2710
    %3212 = vmatpush1.bf16.msra.mxu0 %v2709
    %3213 = vmatprep.subr.bf16.mxu0 %v2714
    %3214 = vmatpush1.bf16.msra.mxu0 %v2713
    %3215 = vmatprep.subr.bf16.mxu0 %v2718
    %3216 = vmatpush1.bf16.msra.mxu0 %v2717
    %3217 = vmatprep.subr.bf16.mxu0 %v2722
    %3218 = vmatpush1.bf16.msra.mxu0 %v2721
    %3219 = vmatprep.subr.bf16.mxu0 %v2726
    %3220 = vmatpush1.bf16.msra.mxu0 %v2725
    %3221 = vmatprep.subr.bf16.mxu0 %v2730
    %3222 = vmatpush1.bf16.msra.mxu0 %v2729
    %3223 = vmatprep.subr.bf16.mxu0 %v2734
    %3224 = vmatpush1.bf16.msra.mxu0 %v2733
    %3225 = vmatprep.subr.bf16.mxu0 %v2738
    %3226 = vmatpush1.bf16.msra.mxu0 %v2737
    %3227 = vmatprep.subr.bf16.mxu0 %v2742
    %3228 = vmatpush1.bf16.msra.mxu0 %v2741
    %3229 = vmatprep.subr.bf16.mxu0 %v2746
    %3230 = vmatpush1.bf16.msra.mxu0 %v2745
    %3231 = vmatprep.subr.bf16.mxu0 %v2750
    %3232 = vmatpush1.bf16.msra.mxu0 %v2749
    %3233 = vmatprep.mubr.bf16.mxu0 %v1906
    %3234 = vmatmul.mubr.bf16.gmra.mrb[0].mxu0 %v1905
    %v3235 = vpop.f32.mrb[0].mxu0
    %v3236 = vadd.f32 %v1744, %v3235
    %v3237 = vpop.f32.mrb[0].mxu0
    %v3238 = vadd.f32 %v1746, %v3237
    %v3239 = vpop.f32.mrb[0].mxu0
    %v3240 = vadd.f32 %v1748, %v3239
    %v3241 = vpop.f32.mrb[0].mxu0
    %v3242 = vadd.f32 %v1750, %v3241
    %3243 = vdwg.mxu0
    %3244 = vmatprep.subr.bf16.mxu0 %v2754
    %3245 = vmatpush1.bf16.msra.mxu0 %v2753
    %3246 = vmatprep.subr.bf16.mxu0 %v2758
    %3247 = vmatpush1.bf16.msra.mxu0 %v2757
    %3248 = vmatprep.subr.bf16.mxu0 %v2762
    %3249 = vmatpush1.bf16.msra.mxu0 %v2761
    %3250 = vmatprep.subr.bf16.mxu0 %v2766
    %3251 = vmatpush1.bf16.msra.mxu0 %v2765
    %3252 = vmatprep.subr.bf16.mxu0 %v2770
    %3253 = vmatpush1.bf16.msra.mxu0 %v2769
    %3254 = vmatprep.subr.bf16.mxu0 %v2774
    %3255 = vmatpush1.bf16.msra.mxu0 %v2773
    %3256 = vmatprep.subr.bf16.mxu0 %v2778
    %3257 = vmatpush1.bf16.msra.mxu0 %v2777
    %3258 = vmatprep.subr.bf16.mxu0 %v2782
    %3259 = vmatpush1.bf16.msra.mxu0 %v2781
    %3260 = vmatprep.subr.bf16.mxu0 %v2786
    %3261 = vmatpush1.bf16.msra.mxu0 %v2785
    %3262 = vmatprep.subr.bf16.mxu0 %v2790
    %3263 = vmatpush1.bf16.msra.mxu0 %v2789
    %3264 = vmatprep.subr.bf16.mxu0 %v2794
    %3265 = vmatpush1.bf16.msra.mxu0 %v2793
    %3266 = vmatprep.subr.bf16.mxu0 %v2798
    %3267 = vmatpush1.bf16.msra.mxu0 %v2797
    %3268 = vmatprep.subr.bf16.mxu0 %v2802
    %3269 = vmatpush1.bf16.msra.mxu0 %v2801
    %3270 = vmatprep.subr.bf16.mxu0 %v2806
    %3271 = vmatpush1.bf16.msra.mxu0 %v2805
    %3272 = vmatprep.subr.bf16.mxu0 %v2810
    %3273 = vmatpush1.bf16.msra.mxu0 %v2809
    %3274 = vmatprep.subr.bf16.mxu0 %v2814
    %3275 = vmatpush1.bf16.msra.mxu0 %v2813
    %3276 = vmatprep.mubr.bf16.mxu0 %v1908
    %3277 = vmatmul.mubr.bf16.gmra.mrb[0].mxu0 %v1907
    %v3278 = vpop.f32.mrb[0].mxu0
    %v3279 = vadd.f32 %v3236, %v3278
    %v3280 = vpop.f32.mrb[0].mxu0
    %v3281 = vadd.f32 %v3238, %v3280
    %v3282 = vpop.f32.mrb[0].mxu0
    %v3283 = vadd.f32 %v3240, %v3282
    %v3284 = vpop.f32.mrb[0].mxu0
    %v3285 = vadd.f32 %v3242, %v3284
    %3286 = vdwg.mxu0
    %3287 = vmatprep.subr.bf16.mxu0 %v2818
    %3288 = vmatpush1.bf16.msra.mxu0 %v2817
    %3289 = vmatprep.subr.bf16.mxu0 %v2822
    %3290 = vmatpush1.bf16.msra.mxu0 %v2821
    %3291 = vmatprep.subr.bf16.mxu0 %v2826
    %3292 = vmatpush1.bf16.msra.mxu0 %v2825
    %3293 = vmatprep.subr.bf16.mxu0 %v2830
    %3294 = vmatpush1.bf16.msra.mxu0 %v2829
    %3295 = vmatprep.subr.bf16.mxu0 %v2834
    %3296 = vmatpush1.bf16.msra.mxu0 %v2833
    %3297 = vmatprep.subr.bf16.mxu0 %v2838
    %3298 = vmatpush1.bf16.msra.mxu0 %v2837
    %3299 = vmatprep.subr.bf16.mxu0 %v2842
    %3300 = vmatpush1.bf16.msra.mxu0 %v2841
    %3301 = vmatprep.subr.bf16.mxu0 %v2846
    %3302 = vmatpush1.bf16.msra.mxu0 %v2845
    %3303 = vmatprep.subr.bf16.mxu0 %v2850
    %3304 = vmatpush1.bf16.msra.mxu0 %v2849
    %3305 = vmatprep.subr.bf16.mxu0 %v2854
    %3306 = vmatpush1.bf16.msra.mxu0 %v2853
    %3307 = vmatprep.subr.bf16.mxu0 %v2858
    %3308 = vmatpush1.bf16.msra.mxu0 %v2857
    %3309 = vmatprep.subr.bf16.mxu0 %v2862
    %3310 = vmatpush1.bf16.msra.mxu0 %v2861
    %3311 = vmatprep.subr.bf16.mxu0 %v2866
    %3312 = vmatpush1.bf16.msra.mxu0 %v2865
    %3313 = vmatprep.subr.bf16.mxu0 %v2870
    %3314 = vmatpush1.bf16.msra.mxu0 %v2869
    %3315 = vmatprep.subr.bf16.mxu0 %v2874
    %3316 = vmatpush1.bf16.msra.mxu0 %v2873
    %3317 = vmatprep.subr.bf16.mxu0 %v2878
    %3318 = vmatpush1.bf16.msra.mxu0 %v2877
    %3319 = vmatprep.mubr.bf16.mxu0 %v1910
    %3320 = vmatmul.mubr.bf16.gmra.mrb[0].mxu0 %v1909
    %v3321 = vpop.f32.mrb[0].mxu0
    %v3322 = vadd.f32 %v3279, %v3321
    %v3323 = vpop.f32.mrb[0].mxu0
    %v3324 = vadd.f32 %v3281, %v3323
    %v3325 = vpop.f32.mrb[0].mxu0
    %v3326 = vadd.f32 %v3283, %v3325
    %v3327 = vpop.f32.mrb[0].mxu0
    %v3328 = vadd.f32 %v3285, %v3327
    %3329 = vdwg.mxu0
    %3330 = vmatprep.subr.bf16.mxu0 %v2882
    %3331 = vmatpush1.bf16.msra.mxu0 %v2881
    %3332 = vmatprep.subr.bf16.mxu0 %v2886
    %3333 = vmatpush1.bf16.msra.mxu0 %v2885
    %3334 = vmatprep.subr.bf16.mxu0 %v2890
    %3335 = vmatpush1.bf16.msra.mxu0 %v2889
    %3336 = vmatprep.subr.bf16.mxu0 %v2894
    %3337 = vmatpush1.bf16.msra.mxu0 %v2893
    %3338 = vmatprep.subr.bf16.mxu0 %v2898
    %3339 = vmatpush1.bf16.msra.mxu0 %v2897
    %3340 = vmatprep.subr.bf16.mxu0 %v2902
    %3341 = vmatpush1.bf16.msra.mxu0 %v2901
    %3342 = vmatprep.subr.bf16.mxu0 %v2906
    %3343 = vmatpush1.bf16.msra.mxu0 %v2905
    %3344 = vmatprep.subr.bf16.mxu0 %v2910
    %3345 = vmatpush1.bf16.msra.mxu0 %v2909
    %3346 = vmatprep.subr.bf16.mxu0 %v2914
    %3347 = vmatpush1.bf16.msra.mxu0 %v2913
    %3348 = vmatprep.subr.bf16.mxu0 %v2918
    %3349 = vmatpush1.bf16.msra.mxu0 %v2917
    %3350 = vmatprep.subr.bf16.mxu0 %v2922
    %3351 = vmatpush1.bf16.msra.mxu0 %v2921
    %3352 = vmatprep.subr.bf16.mxu0 %v2926
    %3353 = vmatpush1.bf16.msra.mxu0 %v2925
    %3354 = vmatprep.subr.bf16.mxu0 %v2930
    %3355 = vmatpush1.bf16.msra.mxu0 %v2929
    %3356 = vmatprep.subr.bf16.mxu0 %v2934
    %3357 = vmatpush1.bf16.msra.mxu0 %v2933
    %3358 = vmatprep.subr.bf16.mxu0 %v2938
    %3359 = vmatpush1.bf16.msra.mxu0 %v2937
    %3360 = vmatprep.subr.bf16.mxu0 %v2942
    %3361 = vmatpush1.bf16.msra.mxu0 %v2941
    %3362 = vmatprep.mubr.bf16.mxu0 %v1912
    %3363 = vmatmul.mubr.bf16.gmra.mrb[0].mxu0 %v1911
    %v3364 = vpop.f32.mrb[0].mxu0
    %v3365 = vadd.f32 %v3322, %v3364
    %v3366 = vpop.f32.mrb[0].mxu0
    %v3367 = vadd.f32 %v3324, %v3366
    %v3368 = vpop.f32.mrb[0].mxu0
    %v3369 = vadd.f32 %v3326, %v3368
    %v3370 = vpop.f32.mrb[0].mxu0
    %v3371 = vadd.f32 %v3328, %v3370
    %3372 = vdwg.mxu0
    %3373 = vmatprep.subr.bf16.mxu0 %v2692
    %3374 = vmatpush1.bf16.msra.mxu0 %v2691
    %3375 = vmatprep.subr.bf16.mxu0 %v2696
    %3376 = vmatpush1.bf16.msra.mxu0 %v2695
    %3377 = vmatprep.subr.bf16.mxu0 %v2700
    %3378 = vmatpush1.bf16.msra.mxu0 %v2699
    %3379 = vmatprep.subr.bf16.mxu0 %v2704
    %3380 = vmatpush1.bf16.msra.mxu0 %v2703
    %3381 = vmatprep.subr.bf16.mxu0 %v2708
    %3382 = vmatpush1.bf16.msra.mxu0 %v2707
    %3383 = vmatprep.subr.bf16.mxu0 %v2712
    %3384 = vmatpush1.bf16.msra.mxu0 %v2711
    %3385 = vmatprep.subr.bf16.mxu0 %v2716
    %3386 = vmatpush1.bf16.msra.mxu0 %v2715
    %3387 = vmatprep.subr.bf16.mxu0 %v2720
    %3388 = vmatpush1.bf16.msra.mxu0 %v2719
    %3389 = vmatprep.subr.bf16.mxu0 %v2724
    %3390 = vmatpush1.bf16.msra.mxu0 %v2723
    %3391 = vmatprep.subr.bf16.mxu0 %v2728
    %3392 = vmatpush1.bf16.msra.mxu0 %v2727
    %3393 = vmatprep.subr.bf16.mxu0 %v2732
    %3394 = vmatpush1.bf16.msra.mxu0 %v2731
    %3395 = vmatprep.subr.bf16.mxu0 %v2736
    %3396 = vmatpush1.bf16.msra.mxu0 %v2735
    %3397 = vmatprep.subr.bf16.mxu0 %v2740
    %3398 = vmatpush1.bf16.msra.mxu0 %v2739
    %3399 = vmatprep.subr.bf16.mxu0 %v2744
    %3400 = vmatpush1.bf16.msra.mxu0 %v2743
    %3401 = vmatprep.subr.bf16.mxu0 %v2748
    %3402 = vmatpush1.bf16.msra.mxu0 %v2747
    %3403 = vmatprep.subr.bf16.mxu0 %v2752
    %3404 = vmatpush1.bf16.msra.mxu0 %v2751
    %3405 = vmatprep.mubr.bf16.mxu0 %v1906
    %3406 = vmatmul.mubr.bf16.gmra.mrb[0].mxu0 %v1905
    %v3407 = vpop.f32.mrb[0].mxu0
    %v3408 = vadd.f32 %v1873, %v3407
    %v3409 = vpop.f32.mrb[0].mxu0
    %v3410 = vadd.f32 %v1875, %v3409
    %v3411 = vpop.f32.mrb[0].mxu0
    %v3412 = vadd.f32 %v1877, %v3411
    %v3413 = vpop.f32.mrb[0].mxu0
    %v3414 = vadd.f32 %v1879, %v3413
    %3415 = vdwg.mxu0
    %3416 = vmatprep.subr.bf16.mxu0 %v2756
    %3417 = vmatpush1.bf16.msra.mxu0 %v2755
    %3418 = vmatprep.subr.bf16.mxu0 %v2760
    %3419 = vmatpush1.bf16.msra.mxu0 %v2759
    %3420 = vmatprep.subr.bf16.mxu0 %v2764
    %3421 = vmatpush1.bf16.msra.mxu0 %v2763
    %3422 = vmatprep.subr.bf16.mxu0 %v2768
    %3423 = vmatpush1.bf16.msra.mxu0 %v2767
    %3424 = vmatprep.subr.bf16.mxu0 %v2772
    %3425 = vmatpush1.bf16.msra.mxu0 %v2771
    %3426 = vmatprep.subr.bf16.mxu0 %v2776
    %3427 = vmatpush1.bf16.msra.mxu0 %v2775
    %3428 = vmatprep.subr.bf16.mxu0 %v2780
    %3429 = vmatpush1.bf16.msra.mxu0 %v2779
    %3430 = vmatprep.subr.bf16.mxu0 %v2784
    %3431 = vmatpush1.bf16.msra.mxu0 %v2783
    %3432 = vmatprep.subr.bf16.mxu0 %v2788
    %3433 = vmatpush1.bf16.msra.mxu0 %v2787
    %3434 = vmatprep.subr.bf16.mxu0 %v2792
    %3435 = vmatpush1.bf16.msra.mxu0 %v2791
    %3436 = vmatprep.subr.bf16.mxu0 %v2796
    %3437 = vmatpush1.bf16.msra.mxu0 %v2795
    %3438 = vmatprep.subr.bf16.mxu0 %v2800
    %3439 = vmatpush1.bf16.msra.mxu0 %v2799
    %3440 = vmatprep.subr.bf16.mxu0 %v2804
    %3441 = vmatpush1.bf16.msra.mxu0 %v2803
    %3442 = vmatprep.subr.bf16.mxu0 %v2808
    %3443 = vmatpush1.bf16.msra.mxu0 %v2807
    %3444 = vmatprep.subr.bf16.mxu0 %v2812
    %3445 = vmatpush1.bf16.msra.mxu0 %v2811
    %3446 = vmatprep.subr.bf16.mxu0 %v2816
    %3447 = vmatpush1.bf16.msra.mxu0 %v2815
    %3448 = vmatprep.mubr.bf16.mxu0 %v1908
    %3449 = vmatmul.mubr.bf16.gmra.mrb[0].mxu0 %v1907
    %v3450 = vpop.f32.mrb[0].mxu0
    %v3451 = vadd.f32 %v3408, %v3450
    %v3452 = vpop.f32.mrb[0].mxu0
    %v3453 = vadd.f32 %v3410, %v3452
    %v3454 = vpop.f32.mrb[0].mxu0
    %v3455 = vadd.f32 %v3412, %v3454
    %v3456 = vpop.f32.mrb[0].mxu0
    %v3457 = vadd.f32 %v3414, %v3456
    %3458 = vdwg.mxu0
    %3459 = vmatprep.subr.bf16.mxu0 %v2820
    %3460 = vmatpush1.bf16.msra.mxu0 %v2819
    %3461 = vmatprep.subr.bf16.mxu0 %v2824
    %3462 = vmatpush1.bf16.msra.mxu0 %v2823
    %3463 = vmatprep.subr.bf16.mxu0 %v2828
    %3464 = vmatpush1.bf16.msra.mxu0 %v2827
    %3465 = vmatprep.subr.bf16.mxu0 %v2832
    %3466 = vmatpush1.bf16.msra.mxu0 %v2831
    %3467 = vmatprep.subr.bf16.mxu0 %v2836
    %3468 = vmatpush1.bf16.msra.mxu0 %v2835
    %3469 = vmatprep.subr.bf16.mxu0 %v2840
    %3470 = vmatpush1.bf16.msra.mxu0 %v2839
    %3471 = vmatprep.subr.bf16.mxu0 %v2844
    %3472 = vmatpush1.bf16.msra.mxu0 %v2843
    %3473 = vmatprep.subr.bf16.mxu0 %v2848
    %3474 = vmatpush1.bf16.msra.mxu0 %v2847
    %3475 = vmatprep.subr.bf16.mxu0 %v2852
    %3476 = vmatpush1.bf16.msra.mxu0 %v2851
    %3477 = vmatprep.subr.bf16.mxu0 %v2856
    %3478 = vmatpush1.bf16.msra.mxu0 %v2855
    %3479 = vmatprep.subr.bf16.mxu0 %v2860
    %3480 = vmatpush1.bf16.msra.mxu0 %v2859
    %3481 = vmatprep.subr.bf16.mxu0 %v2864
    %3482 = vmatpush1.bf16.msra.mxu0 %v2863
    %3483 = vmatprep.subr.bf16.mxu0 %v2868
    %3484 = vmatpush1.bf16.msra.mxu0 %v2867
    %3485 = vmatprep.subr.bf16.mxu0 %v2872
    %3486 = vmatpush1.bf16.msra.mxu0 %v2871
    %3487 = vmatprep.subr.bf16.mxu0 %v2876
    %3488 = vmatpush1.bf16.msra.mxu0 %v2875
    %3489 = vmatprep.subr.bf16.mxu0 %v2880
    %3490 = vmatpush1.bf16.msra.mxu0 %v2879
    %3491 = vmatprep.mubr.bf16.mxu0 %v1910
    %3492 = vmatmul.mubr.bf16.gmra.mrb[0].mxu0 %v1909
    %v3493 = vpop.f32.mrb[0].mxu0
    %v3494 = vadd.f32 %v3451, %v3493
    %v3495 = vpop.f32.mrb[0].mxu0
    %v3496 = vadd.f32 %v3453, %v3495
    %v3497 = vpop.f32.mrb[0].mxu0
    %v3498 = vadd.f32 %v3455, %v3497
    %v3499 = vpop.f32.mrb[0].mxu0
    %v3500 = vadd.f32 %v3457, %v3499
    %3501 = vdwg.mxu0
    %3502 = vmatprep.subr.bf16.mxu0 %v2884
    %3503 = vmatpush1.bf16.msra.mxu0 %v2883
    %3504 = vmatprep.subr.bf16.mxu0 %v2888
    %3505 = vmatpush1.bf16.msra.mxu0 %v2887
    %3506 = vmatprep.subr.bf16.mxu0 %v2892
    %3507 = vmatpush1.bf16.msra.mxu0 %v2891
    %3508 = vmatprep.subr.bf16.mxu0 %v2896
    %3509 = vmatpush1.bf16.msra.mxu0 %v2895
    %3510 = vmatprep.subr.bf16.mxu0 %v2900
    %3511 = vmatpush1.bf16.msra.mxu0 %v2899
    %3512 = vmatprep.subr.bf16.mxu0 %v2904
    %3513 = vmatpush1.bf16.msra.mxu0 %v2903
    %3514 = vmatprep.subr.bf16.mxu0 %v2908
    %3515 = vmatpush1.bf16.msra.mxu0 %v2907
    %3516 = vmatprep.subr.bf16.mxu0 %v2912
    %3517 = vmatpush1.bf16.msra.mxu0 %v2911
    %3518 = vmatprep.subr.bf16.mxu0 %v2916
    %3519 = vmatpush1.bf16.msra.mxu0 %v2915
    %3520 = vmatprep.subr.bf16.mxu0 %v2920
    %3521 = vmatpush1.bf16.msra.mxu0 %v2919
    %3522 = vmatprep.subr.bf16.mxu0 %v2924
    %3523 = vmatpush1.bf16.msra.mxu0 %v2923
    %3524 = vmatprep.subr.bf16.mxu0 %v2928
    %3525 = vmatpush1.bf16.msra.mxu0 %v2927
    %3526 = vmatprep.subr.bf16.mxu0 %v2932
    %3527 = vmatpush1.bf16.msra.mxu0 %v2931
    %3528 = vmatprep.subr.bf16.mxu0 %v2936
    %3529 = vmatpush1.bf16.msra.mxu0 %v2935
    %3530 = vmatprep.subr.bf16.mxu0 %v2940
    %3531 = vmatpush1.bf16.msra.mxu0 %v2939
    %3532 = vmatprep.subr.bf16.mxu0 %v2944
    %3533 = vmatpush1.bf16.msra.mxu0 %v2943
    %3534 = vmatprep.mubr.bf16.mxu0 %v1912
    %3535 = vmatmul.mubr.bf16.gmra.mrb[0].mxu0 %v1911
    %v3536 = vpop.f32.mrb[0].mxu0
    %v3537 = vadd.f32 %v3494, %v3536
    %v3538 = vpop.f32.mrb[0].mxu0
    %v3539 = vadd.f32 %v3496, %v3538
    %v3540 = vpop.f32.mrb[0].mxu0
    %v3541 = vadd.f32 %v3498, %v3540
    %v3542 = vpop.f32.mrb[0].mxu0
    %v3543 = vadd.f32 %v3500, %v3542
    %3544 = vdwg.mxu0
    %v3545 = vld [vmem:[%s4] sm:$0xf]
    %v3547 = vlaneseq
    %v3548 = vshrl.u32 %v3547, 7
    %v3549 = vsub.s32 0, %v3548
    %v3550 = vrot.slane %v3545, %v3549
    %v3551 = vlaneseq
    %v3552 = vshrl.u32 %v3551, 7
    %v3553 = vsub.s32 1, %v3552
    %v3554 = vrot.slane %v3545, %v3553
    %v3555 = vlaneseq
    %v3556 = vshrl.u32 %v3555, 7
    %v3557 = vsub.s32 2, %v3556
    %v3558 = vrot.slane %v3545, %v3557
    %v3559 = vlaneseq
    %v3560 = vshrl.u32 %v3559, 7
    %v3561 = vsub.s32 3, %v3560
    %v3562 = vrot.slane %v3545, %v3561
    %v3567 = vadd.f32 %v3365, %v3550
    %v3568 = vadd.f32 %v3367, %v3554
    %v3569 = vadd.f32 %v3537, %v3558
    %v3570 = vadd.f32 %v3539, %v3562
    %v3571 = vadd.f32 %v3369, %v3550
    %v3572 = vadd.f32 %v3371, %v3554
    %v3573 = vadd.f32 %v3541, %v3558
    %v3574 = vadd.f32 %v3543, %v3562
    %v3575 = vmax.f32 %v3567, 0.0
    %v3576 = vmax.f32 %v3568, 0.0
    %v3577 = vmax.f32 %v3569, 0.0
    %v3578 = vmax.f32 %v3570, 0.0
    %v3579 = vmax.f32 %v3571, 0.0
    %v3580 = vmax.f32 %v3572, 0.0
    %v3581 = vmax.f32 %v3573, 0.0
    %v3582 = vmax.f32 %v3574, 0.0
    %v3583 = vpack.c.bf16 %v3579, %v3575
    %v3584 = vpack.c.bf16 %v3580, %v3576
    %v3585 = vpack.c.bf16 %v3581, %v3577
    %v3586 = vpack.c.bf16 %v3582, %v3578
    %s3587 = smul.u32 4, 64
    %s3588 = smul.u32 %s3587, 4
    %s3589 = sshll.u32 %s3588, 4
    %3590 = dma.done [#allocation5], %s3589
    %v3591 = vld [vmem:[#allocation2] sm:$0xff]
    %v3592 = vld [vmem:[#allocation2 + $0x8] sm:$0xff]
    %v3593 = vld [vmem:[#allocation2 + $0x10] sm:$0xff]
    %v3594 = vld [vmem:[#allocation2 + $0x18] sm:$0xff]
    %v3595 = vld [vmem:[#allocation2 + $0x20] sm:$0xff]
    %v3596 = vld [vmem:[#allocation2 + $0x28] sm:$0xff]
    %v3597 = vld [vmem:[#allocation2 + $0x30] sm:$0xff]
    %v3598 = vld [vmem:[#allocation2 + $0x38] sm:$0xff]
    %v3599 = vld [vmem:[#allocation2 + $0x40] sm:$0xff]
    %v3600 = vld [vmem:[#allocation2 + $0x48] sm:$0xff]
    %v3601 = vld [vmem:[#allocation2 + $0x50] sm:$0xff]
    %v3602 = vld [vmem:[#allocation2 + $0x58] sm:$0xff]
    %v3603 = vld [vmem:[#allocation2 + $0x60] sm:$0xff]
    %v3604 = vld [vmem:[#allocation2 + $0x68] sm:$0xff]
    %v3605 = vld [vmem:[#allocation2 + $0x70] sm:$0xff]
    %v3606 = vld [vmem:[#allocation2 + $0x78] sm:$0xff]
    %v3607 = vld [vmem:[#allocation2 + $0x80] sm:$0xff]
    %v3608 = vld [vmem:[#allocation2 + $0x88] sm:$0xff]
    %v3609 = vld [vmem:[#allocation2 + $0x90] sm:$0xff]
    %v3610 = vld [vmem:[#allocation2 + $0x98] sm:$0xff]
    %v3611 = vld [vmem:[#allocation2 + $0xa0] sm:$0xff]
    %v3612 = vld [vmem:[#allocation2 + $0xa8] sm:$0xff]
    %v3613 = vld [vmem:[#allocation2 + $0xb0] sm:$0xff]
    %v3614 = vld [vmem:[#allocation2 + $0xb8] sm:$0xff]
    %v3615 = vld [vmem:[#allocation2 + $0xc0] sm:$0xff]
    %v3616 = vld [vmem:[#allocation2 + $0xc8] sm:$0xff]
    %v3617 = vld [vmem:[#allocation2 + $0xd0] sm:$0xff]
    %v3618 = vld [vmem:[#allocation2 + $0xd8] sm:$0xff]
    %v3619 = vld [vmem:[#allocation2 + $0xe0] sm:$0xff]
    %v3620 = vld [vmem:[#allocation2 + $0xe8] sm:$0xff]
    %v3621 = vld [vmem:[#allocation2 + $0xf0] sm:$0xff]
    %v3622 = vld [vmem:[#allocation2 + $0xf8] sm:$0xff]
    %v3623 = vld [vmem:[#allocation2 + $0x100] sm:$0xff]
    %v3624 = vld [vmem:[#allocation2 + $0x108] sm:$0xff]
    %v3625 = vld [vmem:[#allocation2 + $0x110] sm:$0xff]
    %v3626 = vld [vmem:[#allocation2 + $0x118] sm:$0xff]
    %v3627 = vld [vmem:[#allocation2 + $0x120] sm:$0xff]
    %v3628 = vld [vmem:[#allocation2 + $0x128] sm:$0xff]
    %v3629 = vld [vmem:[#allocation2 + $0x130] sm:$0xff]
    %v3630 = vld [vmem:[#allocation2 + $0x138] sm:$0xff]
    %v3631 = vld [vmem:[#allocation2 + $0x140] sm:$0xff]
    %v3632 = vld [vmem:[#allocation2 + $0x148] sm:$0xff]
    %v3633 = vld [vmem:[#allocation2 + $0x150] sm:$0xff]
    %v3634 = vld [vmem:[#allocation2 + $0x158] sm:$0xff]
    %v3635 = vld [vmem:[#allocation2 + $0x160] sm:$0xff]
    %v3636 = vld [vmem:[#allocation2 + $0x168] sm:$0xff]
    %v3637 = vld [vmem:[#allocation2 + $0x170] sm:$0xff]
    %v3638 = vld [vmem:[#allocation2 + $0x178] sm:$0xff]
    %v3639 = vld [vmem:[#allocation2 + $0x180] sm:$0xff]
    %v3640 = vld [vmem:[#allocation2 + $0x188] sm:$0xff]
    %v3641 = vld [vmem:[#allocation2 + $0x190] sm:$0xff]
    %v3642 = vld [vmem:[#allocation2 + $0x198] sm:$0xff]
    %v3643 = vld [vmem:[#allocation2 + $0x1a0] sm:$0xff]
    %v3644 = vld [vmem:[#allocation2 + $0x1a8] sm:$0xff]
    %v3645 = vld [vmem:[#allocation2 + $0x1b0] sm:$0xff]
    %v3646 = vld [vmem:[#allocation2 + $0x1b8] sm:$0xff]
    %v3647 = vld [vmem:[#allocation2 + $0x1c0] sm:$0xff]
    %v3648 = vld [vmem:[#allocation2 + $0x1c8] sm:$0xff]
    %v3649 = vld [vmem:[#allocation2 + $0x1d0] sm:$0xff]
    %v3650 = vld [vmem:[#allocation2 + $0x1d8] sm:$0xff]
    %v3651 = vld [vmem:[#allocation2 + $0x1e0] sm:$0xff]
    %v3652 = vld [vmem:[#allocation2 + $0x1e8] sm:$0xff]
    %v3653 = vld [vmem:[#allocation2 + $0x1f0] sm:$0xff]
    %v3654 = vld [vmem:[#allocation2 + $0x1f8] sm:$0xff]
    %v3655 = vld [vmem:[#allocation2 + $0x200] sm:$0xff]
    %v3656 = vld [vmem:[#allocation2 + $0x208] sm:$0xff]
    %v3657 = vld [vmem:[#allocation2 + $0x210] sm:$0xff]
    %v3658 = vld [vmem:[#allocation2 + $0x218] sm:$0xff]
    %v3659 = vld [vmem:[#allocation2 + $0x220] sm:$0xff]
    %v3660 = vld [vmem:[#allocation2 + $0x228] sm:$0xff]
    %v3661 = vld [vmem:[#allocation2 + $0x230] sm:$0xff]
    %v3662 = vld [vmem:[#allocation2 + $0x238] sm:$0xff]
    %v3663 = vld [vmem:[#allocation2 + $0x240] sm:$0xff]
    %v3664 = vld [vmem:[#allocation2 + $0x248] sm:$0xff]
    %v3665 = vld [vmem:[#allocation2 + $0x250] sm:$0xff]
    %v3666 = vld [vmem:[#allocation2 + $0x258] sm:$0xff]
    %v3667 = vld [vmem:[#allocation2 + $0x260] sm:$0xff]
    %v3668 = vld [vmem:[#allocation2 + $0x268] sm:$0xff]
    %v3669 = vld [vmem:[#allocation2 + $0x270] sm:$0xff]
    %v3670 = vld [vmem:[#allocation2 + $0x278] sm:$0xff]
    %v3671 = vld [vmem:[#allocation2 + $0x280] sm:$0xff]
    %v3672 = vld [vmem:[#allocation2 + $0x288] sm:$0xff]
    %v3673 = vld [vmem:[#allocation2 + $0x290] sm:$0xff]
    %v3674 = vld [vmem:[#allocation2 + $0x298] sm:$0xff]
    %v3675 = vld [vmem:[#allocation2 + $0x2a0] sm:$0xff]
    %v3676 = vld [vmem:[#allocation2 + $0x2a8] sm:$0xff]
    %v3677 = vld [vmem:[#allocation2 + $0x2b0] sm:$0xff]
    %v3678 = vld [vmem:[#allocation2 + $0x2b8] sm:$0xff]
    %v3679 = vld [vmem:[#allocation2 + $0x2c0] sm:$0xff]
    %v3680 = vld [vmem:[#allocation2 + $0x2c8] sm:$0xff]
    %v3681 = vld [vmem:[#allocation2 + $0x2d0] sm:$0xff]
    %v3682 = vld [vmem:[#allocation2 + $0x2d8] sm:$0xff]
    %v3683 = vld [vmem:[#allocation2 + $0x2e0] sm:$0xff]
    %v3684 = vld [vmem:[#allocation2 + $0x2e8] sm:$0xff]
    %v3685 = vld [vmem:[#allocation2 + $0x2f0] sm:$0xff]
    %v3686 = vld [vmem:[#allocation2 + $0x2f8] sm:$0xff]
    %v3687 = vld [vmem:[#allocation2 + $0x300] sm:$0xff]
    %v3688 = vld [vmem:[#allocation2 + $0x308] sm:$0xff]
    %v3689 = vld [vmem:[#allocation2 + $0x310] sm:$0xff]
    %v3690 = vld [vmem:[#allocation2 + $0x318] sm:$0xff]
    %v3691 = vld [vmem:[#allocation2 + $0x320] sm:$0xff]
    %v3692 = vld [vmem:[#allocation2 + $0x328] sm:$0xff]
    %v3693 = vld [vmem:[#allocation2 + $0x330] sm:$0xff]
    %v3694 = vld [vmem:[#allocation2 + $0x338] sm:$0xff]
    %v3695 = vld [vmem:[#allocation2 + $0x340] sm:$0xff]
    %v3696 = vld [vmem:[#allocation2 + $0x348] sm:$0xff]
    %v3697 = vld [vmem:[#allocation2 + $0x350] sm:$0xff]
    %v3698 = vld [vmem:[#allocation2 + $0x358] sm:$0xff]
    %v3699 = vld [vmem:[#allocation2 + $0x360] sm:$0xff]
    %v3700 = vld [vmem:[#allocation2 + $0x368] sm:$0xff]
    %v3701 = vld [vmem:[#allocation2 + $0x370] sm:$0xff]
    %v3702 = vld [vmem:[#allocation2 + $0x378] sm:$0xff]
    %v3703 = vld [vmem:[#allocation2 + $0x380] sm:$0xff]
    %v3704 = vld [vmem:[#allocation2 + $0x388] sm:$0xff]
    %v3705 = vld [vmem:[#allocation2 + $0x390] sm:$0xff]
    %v3706 = vld [vmem:[#allocation2 + $0x398] sm:$0xff]
    %v3707 = vld [vmem:[#allocation2 + $0x3a0] sm:$0xff]
    %v3708 = vld [vmem:[#allocation2 + $0x3a8] sm:$0xff]
    %v3709 = vld [vmem:[#allocation2 + $0x3b0] sm:$0xff]
    %v3710 = vld [vmem:[#allocation2 + $0x3b8] sm:$0xff]
    %v3711 = vld [vmem:[#allocation2 + $0x3c0] sm:$0xff]
    %v3712 = vld [vmem:[#allocation2 + $0x3c8] sm:$0xff]
    %v3713 = vld [vmem:[#allocation2 + $0x3d0] sm:$0xff]
    %v3714 = vld [vmem:[#allocation2 + $0x3d8] sm:$0xff]
    %v3715 = vld [vmem:[#allocation2 + $0x3e0] sm:$0xff]
    %v3716 = vld [vmem:[#allocation2 + $0x3e8] sm:$0xff]
    %v3717 = vld [vmem:[#allocation2 + $0x3f0] sm:$0xff]
    %v3718 = vld [vmem:[#allocation2 + $0x3f8] sm:$0xff]
    %v3719 = vld [vmem:[%s5] sm:$0xf]
    %v3721 = vlaneseq
    %v3722 = vshrl.u32 %v3721, 7
    %v3723 = vsub.s32 0, %v3722
    %v3724 = vrot.slane %v3719, %v3723
    %v3725 = vlaneseq
    %v3726 = vshrl.u32 %v3725, 7
    %v3727 = vsub.s32 1, %v3726
    %v3728 = vrot.slane %v3719, %v3727
    %v3729 = vlaneseq
    %v3730 = vshrl.u32 %v3729, 7
    %v3731 = vsub.s32 2, %v3730
    %v3732 = vrot.slane %v3719, %v3731
    %v3733 = vlaneseq
    %v3734 = vshrl.u32 %v3733, 7
    %v3735 = vsub.s32 3, %v3734
    %v3736 = vrot.slane %v3719, %v3735
    %3741 = vmatprep.subr.bf16.mxu0 %v3592
    %3742 = vmatpush1.bf16.msra.mxu0 %v3591
    %3743 = vmatprep.subr.bf16.mxu0 %v3596
    %3744 = vmatpush1.bf16.msra.mxu0 %v3595
    %3745 = vmatprep.subr.bf16.mxu0 %v3600
    %3746 = vmatpush1.bf16.msra.mxu0 %v3599
    %3747 = vmatprep.subr.bf16.mxu0 %v3604
    %3748 = vmatpush1.bf16.msra.mxu0 %v3603
    %3749 = vmatprep.subr.bf16.mxu0 %v3608
    %3750 = vmatpush1.bf16.msra.mxu0 %v3607
    %3751 = vmatprep.subr.bf16.mxu0 %v3612
    %3752 = vmatpush1.bf16.msra.mxu0 %v3611
    %3753 = vmatprep.subr.bf16.mxu0 %v3616
    %3754 = vmatpush1.bf16.msra.mxu0 %v3615
    %3755 = vmatprep.subr.bf16.mxu0 %v3620
    %3756 = vmatpush1.bf16.msra.mxu0 %v3619
    %3757 = vmatprep.subr.bf16.mxu0 %v3624
    %3758 = vmatpush1.bf16.msra.mxu0 %v3623
    %3759 = vmatprep.subr.bf16.mxu0 %v3628
    %3760 = vmatpush1.bf16.msra.mxu0 %v3627
    %3761 = vmatprep.subr.bf16.mxu0 %v3632
    %3762 = vmatpush1.bf16.msra.mxu0 %v3631
    %3763 = vmatprep.subr.bf16.mxu0 %v3636
    %3764 = vmatpush1.bf16.msra.mxu0 %v3635
    %3765 = vmatprep.subr.bf16.mxu0 %v3640
    %3766 = vmatpush1.bf16.msra.mxu0 %v3639
    %3767 = vmatprep.subr.bf16.mxu0 %v3644
    %3768 = vmatpush1.bf16.msra.mxu0 %v3643
    %3769 = vmatprep.subr.bf16.mxu0 %v3648
    %3770 = vmatpush1.bf16.msra.mxu0 %v3647
    %3771 = vmatprep.subr.bf16.mxu0 %v3652
    %3772 = vmatpush1.bf16.msra.mxu0 %v3651
    %3773 = vmatprep.mubr.bf16.mxu0 %v3584
    %3774 = vmatmul.mubr.bf16.gmra.mrb[0].mxu0 %v3583
    %v3775 = vpop.f32.mrb[0].mxu0
    %v3776 = vadd.f32 %v3724, %v3775
    %v3777 = vpop.f32.mrb[0].mxu0
    %v3778 = vadd.f32 %v3728, %v3777
    %v3779 = vpop.f32.mrb[0].mxu0
    %v3780 = vadd.f32 %v3724, %v3779
    %v3781 = vpop.f32.mrb[0].mxu0
    %v3782 = vadd.f32 %v3728, %v3781
    %3783 = vdwg.mxu0
    %3784 = vmatprep.subr.bf16.mxu0 %v3656
    %3785 = vmatpush1.bf16.msra.mxu0 %v3655
    %3786 = vmatprep.subr.bf16.mxu0 %v3660
    %3787 = vmatpush1.bf16.msra.mxu0 %v3659
    %3788 = vmatprep.subr.bf16.mxu0 %v3664
    %3789 = vmatpush1.bf16.msra.mxu0 %v3663
    %3790 = vmatprep.subr.bf16.mxu0 %v3668
    %3791 = vmatpush1.bf16.msra.mxu0 %v3667
    %3792 = vmatprep.subr.bf16.mxu0 %v3672
    %3793 = vmatpush1.bf16.msra.mxu0 %v3671
    %3794 = vmatprep.subr.bf16.mxu0 %v3676
    %3795 = vmatpush1.bf16.msra.mxu0 %v3675
    %3796 = vmatprep.subr.bf16.mxu0 %v3680
    %3797 = vmatpush1.bf16.msra.mxu0 %v3679
    %3798 = vmatprep.subr.bf16.mxu0 %v3684
    %3799 = vmatpush1.bf16.msra.mxu0 %v3683
    %3800 = vmatprep.subr.bf16.mxu0 %v3688
    %3801 = vmatpush1.bf16.msra.mxu0 %v3687
    %3802 = vmatprep.subr.bf16.mxu0 %v3692
    %3803 = vmatpush1.bf16.msra.mxu0 %v3691
    %3804 = vmatprep.subr.bf16.mxu0 %v3696
    %3805 = vmatpush1.bf16.msra.mxu0 %v3695
    %3806 = vmatprep.subr.bf16.mxu0 %v3700
    %3807 = vmatpush1.bf16.msra.mxu0 %v3699
    %3808 = vmatprep.subr.bf16.mxu0 %v3704
    %3809 = vmatpush1.bf16.msra.mxu0 %v3703
    %3810 = vmatprep.subr.bf16.mxu0 %v3708
    %3811 = vmatpush1.bf16.msra.mxu0 %v3707
    %3812 = vmatprep.subr.bf16.mxu0 %v3712
    %3813 = vmatpush1.bf16.msra.mxu0 %v3711
    %3814 = vmatprep.subr.bf16.mxu0 %v3716
    %3815 = vmatpush1.bf16.msra.mxu0 %v3715
    %3816 = vmatprep.mubr.bf16.mxu0 %v3586
    %3817 = vmatmul.mubr.bf16.gmra.mrb[0].mxu0 %v3585
    %v3818 = vpop.f32.mrb[0].mxu0
    %v3819 = vadd.f32 %v3776, %v3818
    %v3820 = vpop.f32.mrb[0].mxu0
    %v3821 = vadd.f32 %v3778, %v3820
    %v3822 = vpop.f32.mrb[0].mxu0
    %v3823 = vadd.f32 %v3780, %v3822
    %v3824 = vpop.f32.mrb[0].mxu0
    %v3825 = vadd.f32 %v3782, %v3824
    %3826 = vdwg.mxu0
    %3827 = vmatprep.subr.bf16.mxu0 %v3594
    %3828 = vmatpush1.bf16.msra.mxu0 %v3593
    %3829 = vmatprep.subr.bf16.mxu0 %v3598
    %3830 = vmatpush1.bf16.msra.mxu0 %v3597
    %3831 = vmatprep.subr.bf16.mxu0 %v3602
    %3832 = vmatpush1.bf16.msra.mxu0 %v3601
    %3833 = vmatprep.subr.bf16.mxu0 %v3606
    %3834 = vmatpush1.bf16.msra.mxu0 %v3605
    %3835 = vmatprep.subr.bf16.mxu0 %v3610
    %3836 = vmatpush1.bf16.msra.mxu0 %v3609
    %3837 = vmatprep.subr.bf16.mxu0 %v3614
    %3838 = vmatpush1.bf16.msra.mxu0 %v3613
    %3839 = vmatprep.subr.bf16.mxu0 %v3618
    %3840 = vmatpush1.bf16.msra.mxu0 %v3617
    %3841 = vmatprep.subr.bf16.mxu0 %v3622
    %3842 = vmatpush1.bf16.msra.mxu0 %v3621
    %3843 = vmatprep.subr.bf16.mxu0 %v3626
    %3844 = vmatpush1.bf16.msra.mxu0 %v3625
    %3845 = vmatprep.subr.bf16.mxu0 %v3630
    %3846 = vmatpush1.bf16.msra.mxu0 %v3629
    %3847 = vmatprep.subr.bf16.mxu0 %v3634
    %3848 = vmatpush1.bf16.msra.mxu0 %v3633
    %3849 = vmatprep.subr.bf16.mxu0 %v3638
    %3850 = vmatpush1.bf16.msra.mxu0 %v3637
    %3851 = vmatprep.subr.bf16.mxu0 %v3642
    %3852 = vmatpush1.bf16.msra.mxu0 %v3641
    %3853 = vmatprep.subr.bf16.mxu0 %v3646
    %3854 = vmatpush1.bf16.msra.mxu0 %v3645
    %3855 = vmatprep.subr.bf16.mxu0 %v3650
    %3856 = vmatpush1.bf16.msra.mxu0 %v3649
    %3857 = vmatprep.subr.bf16.mxu0 %v3654
    %3858 = vmatpush1.bf16.msra.mxu0 %v3653
    %3859 = vmatprep.mubr.bf16.mxu0 %v3584
    %3860 = vmatmul.mubr.bf16.gmra.mrb[0].mxu0 %v3583
    %v3861 = vpop.f32.mrb[0].mxu0
    %v3862 = vadd.f32 %v3732, %v3861
    %v3863 = vpop.f32.mrb[0].mxu0
    %v3864 = vadd.f32 %v3736, %v3863
    %v3865 = vpop.f32.mrb[0].mxu0
    %v3866 = vadd.f32 %v3732, %v3865
    %v3867 = vpop.f32.mrb[0].mxu0
    %v3868 = vadd.f32 %v3736, %v3867
    %3869 = vdwg.mxu0
    %3870 = vmatprep.subr.bf16.mxu0 %v3658
    %3871 = vmatpush1.bf16.msra.mxu0 %v3657
    %3872 = vmatprep.subr.bf16.mxu0 %v3662
    %3873 = vmatpush1.bf16.msra.mxu0 %v3661
    %3874 = vmatprep.subr.bf16.mxu0 %v3666
    %3875 = vmatpush1.bf16.msra.mxu0 %v3665
    %3876 = vmatprep.subr.bf16.mxu0 %v3670
    %3877 = vmatpush1.bf16.msra.mxu0 %v3669
    %3878 = vmatprep.subr.bf16.mxu0 %v3674
    %3879 = vmatpush1.bf16.msra.mxu0 %v3673
    %3880 = vmatprep.subr.bf16.mxu0 %v3678
    %3881 = vmatpush1.bf16.msra.mxu0 %v3677
    %3882 = vmatprep.subr.bf16.mxu0 %v3682
    %3883 = vmatpush1.bf16.msra.mxu0 %v3681
    %3884 = vmatprep.subr.bf16.mxu0 %v3686
    %3885 = vmatpush1.bf16.msra.mxu0 %v3685
    %3886 = vmatprep.subr.bf16.mxu0 %v3690
    %3887 = vmatpush1.bf16.msra.mxu0 %v3689
    %3888 = vmatprep.subr.bf16.mxu0 %v3694
    %3889 = vmatpush1.bf16.msra.mxu0 %v3693
    %3890 = vmatprep.subr.bf16.mxu0 %v3698
    %3891 = vmatpush1.bf16.msra.mxu0 %v3697
    %3892 = vmatprep.subr.bf16.mxu0 %v3702
    %3893 = vmatpush1.bf16.msra.mxu0 %v3701
    %3894 = vmatprep.subr.bf16.mxu0 %v3706
    %3895 = vmatpush1.bf16.msra.mxu0 %v3705
    %3896 = vmatprep.subr.bf16.mxu0 %v3710
    %3897 = vmatpush1.bf16.msra.mxu0 %v3709
    %3898 = vmatprep.subr.bf16.mxu0 %v3714
    %3899 = vmatpush1.bf16.msra.mxu0 %v3713
    %3900 = vmatprep.subr.bf16.mxu0 %v3718
    %3901 = vmatpush1.bf16.msra.mxu0 %v3717
    %3902 = vmatprep.mubr.bf16.mxu0 %v3586
    %3903 = vmatmul.mubr.bf16.gmra.mrb[0].mxu0 %v3585
    %v3904 = vpop.f32.mrb[0].mxu0
    %v3905 = vadd.f32 %v3862, %v3904
    %v3906 = vpop.f32.mrb[0].mxu0
    %v3907 = vadd.f32 %v3864, %v3906
    %v3908 = vpop.f32.mrb[0].mxu0
    %v3909 = vadd.f32 %v3866, %v3908
    %v3910 = vpop.f32.mrb[0].mxu0
    %v3911 = vadd.f32 %v3868, %v3910
    %3912 = vdwg.mxu0
    %v3913 = vpack.c.bf16 %v3823, %v3819
    %v3914 = vpack.c.bf16 %v3825, %v3821
    %v3915 = vpack.c.bf16 %v3909, %v3905
    %v3916 = vpack.c.bf16 %v3911, %v3907
    %s3917 = smul.u32 %s3587, 2
    %s3918 = sshll.u32 %s3917, 4
    %3919 = dma.done %s124, %s3918
    %v3920 = vld [vmem:[#allocation3] sm:$0xff]
    %v3921 = vld [vmem:[#allocation3 + $0x8] sm:$0xff]
    %v3922 = vld [vmem:[#allocation3 + $0x10] sm:$0xff]
    %v3923 = vld [vmem:[#allocation3 + $0x18] sm:$0xff]
    %v3924 = vld [vmem:[#allocation3 + $0x20] sm:$0xff]
    %v3925 = vld [vmem:[#allocation3 + $0x28] sm:$0xff]
    %v3926 = vld [vmem:[#allocation3 + $0x30] sm:$0xff]
    %v3927 = vld [vmem:[#allocation3 + $0x38] sm:$0xff]
    %v3928 = vld [vmem:[#allocation3 + $0x40] sm:$0xff]
    %v3929 = vld [vmem:[#allocation3 + $0x48] sm:$0xff]
    %v3930 = vld [vmem:[#allocation3 + $0x50] sm:$0xff]
    %v3931 = vld [vmem:[#allocation3 + $0x58] sm:$0xff]
    %v3932 = vld [vmem:[#allocation3 + $0x60] sm:$0xff]
    %v3933 = vld [vmem:[#allocation3 + $0x68] sm:$0xff]
    %v3934 = vld [vmem:[#allocation3 + $0x70] sm:$0xff]
    %v3935 = vld [vmem:[#allocation3 + $0x78] sm:$0xff]
    %v3936 = vld [vmem:[#allocation3 + $0x80] sm:$0xff]
    %v3937 = vld [vmem:[#allocation3 + $0x88] sm:$0xff]
    %v3938 = vld [vmem:[#allocation3 + $0x90] sm:$0xff]
    %v3939 = vld [vmem:[#allocation3 + $0x98] sm:$0xff]
    %v3940 = vld [vmem:[#allocation3 + $0xa0] sm:$0xff]
    %v3941 = vld [vmem:[#allocation3 + $0xa8] sm:$0xff]
    %v3942 = vld [vmem:[#allocation3 + $0xb0] sm:$0xff]
    %v3943 = vld [vmem:[#allocation3 + $0xb8] sm:$0xff]
    %v3944 = vld [vmem:[#allocation3 + $0xc0] sm:$0xff]
    %v3945 = vld [vmem:[#allocation3 + $0xc8] sm:$0xff]
    %v3946 = vld [vmem:[#allocation3 + $0xd0] sm:$0xff]
    %v3947 = vld [vmem:[#allocation3 + $0xd8] sm:$0xff]
    %v3948 = vld [vmem:[#allocation3 + $0xe0] sm:$0xff]
    %v3949 = vld [vmem:[#allocation3 + $0xe8] sm:$0xff]
    %v3950 = vld [vmem:[#allocation3 + $0xf0] sm:$0xff]
    %v3951 = vld [vmem:[#allocation3 + $0xf8] sm:$0xff]
    %v3952 = vld [vmem:[#allocation3 + $0x100] sm:$0xff]
    %v3953 = vld [vmem:[#allocation3 + $0x108] sm:$0xff]
    %v3954 = vld [vmem:[#allocation3 + $0x110] sm:$0xff]
    %v3955 = vld [vmem:[#allocation3 + $0x118] sm:$0xff]
    %v3956 = vld [vmem:[#allocation3 + $0x120] sm:$0xff]
    %v3957 = vld [vmem:[#allocation3 + $0x128] sm:$0xff]
    %v3958 = vld [vmem:[#allocation3 + $0x130] sm:$0xff]
    %v3959 = vld [vmem:[#allocation3 + $0x138] sm:$0xff]
    %v3960 = vld [vmem:[#allocation3 + $0x140] sm:$0xff]
    %v3961 = vld [vmem:[#allocation3 + $0x148] sm:$0xff]
    %v3962 = vld [vmem:[#allocation3 + $0x150] sm:$0xff]
    %v3963 = vld [vmem:[#allocation3 + $0x158] sm:$0xff]
    %v3964 = vld [vmem:[#allocation3 + $0x160] sm:$0xff]
    %v3965 = vld [vmem:[#allocation3 + $0x168] sm:$0xff]
    %v3966 = vld [vmem:[#allocation3 + $0x170] sm:$0xff]
    %v3967 = vld [vmem:[#allocation3 + $0x178] sm:$0xff]
    %v3968 = vld [vmem:[#allocation3 + $0x180] sm:$0xff]
    %v3969 = vld [vmem:[#allocation3 + $0x188] sm:$0xff]
    %v3970 = vld [vmem:[#allocation3 + $0x190] sm:$0xff]
    %v3971 = vld [vmem:[#allocation3 + $0x198] sm:$0xff]
    %v3972 = vld [vmem:[#allocation3 + $0x1a0] sm:$0xff]
    %v3973 = vld [vmem:[#allocation3 + $0x1a8] sm:$0xff]
    %v3974 = vld [vmem:[#allocation3 + $0x1b0] sm:$0xff]
    %v3975 = vld [vmem:[#allocation3 + $0x1b8] sm:$0xff]
    %v3976 = vld [vmem:[#allocation3 + $0x1c0] sm:$0xff]
    %v3977 = vld [vmem:[#allocation3 + $0x1c8] sm:$0xff]
    %v3978 = vld [vmem:[#allocation3 + $0x1d0] sm:$0xff]
    %v3979 = vld [vmem:[#allocation3 + $0x1d8] sm:$0xff]
    %v3980 = vld [vmem:[#allocation3 + $0x1e0] sm:$0xff]
    %v3981 = vld [vmem:[#allocation3 + $0x1e8] sm:$0xff]
    %v3982 = vld [vmem:[#allocation3 + $0x1f0] sm:$0xff]
    %v3983 = vld [vmem:[#allocation3 + $0x1f8] sm:$0xff]
    %v3984 = vld [vmem:[%s6] sm:$0x3]
    %v3986 = vlaneseq
    %v3987 = vshrl.u32 %v3986, 7
    %v3988 = vsub.s32 0, %v3987
    %v3989 = vrot.slane %v3984, %v3988
    %v3990 = vlaneseq
    %v3991 = vshrl.u32 %v3990, 7
    %v3992 = vsub.s32 1, %v3991
    %v3993 = vrot.slane %v3984, %v3992
    %3996 = vmatprep.subr.bf16.mxu0 %v3921
    %3997 = vmatpush1.bf16.msra.mxu0 %v3920
    %3998 = vmatprep.subr.bf16.mxu0 %v3923
    %3999 = vmatpush1.bf16.msra.mxu0 %v3922
    %4000 = vmatprep.subr.bf16.mxu0 %v3925
    %4001 = vmatpush1.bf16.msra.mxu0 %v3924
    %4002 = vmatprep.subr.bf16.mxu0 %v3927
    %4003 = vmatpush1.bf16.msra.mxu0 %v3926
    %4004 = vmatprep.subr.bf16.mxu0 %v3929
    %4005 = vmatpush1.bf16.msra.mxu0 %v3928
    %4006 = vmatprep.subr.bf16.mxu0 %v3931
    %4007 = vmatpush1.bf16.msra.mxu0 %v3930
    %4008 = vmatprep.subr.bf16.mxu0 %v3933
    %4009 = vmatpush1.bf16.msra.mxu0 %v3932
    %4010 = vmatprep.subr.bf16.mxu0 %v3935
    %4011 = vmatpush1.bf16.msra.mxu0 %v3934
    %4012 = vmatprep.subr.bf16.mxu0 %v3937
    %4013 = vmatpush1.bf16.msra.mxu0 %v3936
    %4014 = vmatprep.subr.bf16.mxu0 %v3939
    %4015 = vmatpush1.bf16.msra.mxu0 %v3938
    %4016 = vmatprep.subr.bf16.mxu0 %v3941
    %4017 = vmatpush1.bf16.msra.mxu0 %v3940
    %4018 = vmatprep.subr.bf16.mxu0 %v3943
    %4019 = vmatpush1.bf16.msra.mxu0 %v3942
    %4020 = vmatprep.subr.bf16.mxu0 %v3945
    %4021 = vmatpush1.bf16.msra.mxu0 %v3944
    %4022 = vmatprep.subr.bf16.mxu0 %v3947
    %4023 = vmatpush1.bf16.msra.mxu0 %v3946
    %4024 = vmatprep.subr.bf16.mxu0 %v3949
    %4025 = vmatpush1.bf16.msra.mxu0 %v3948
    %4026 = vmatprep.subr.bf16.mxu0 %v3951
    %4027 = vmatpush1.bf16.msra.mxu0 %v3950
    %4028 = vmatprep.mubr.bf16.mxu0 %v3914
    %4029 = vmatmul.mubr.bf16.gmra.mrb[0].mxu0 %v3913
    %v4030 = vpop.f32.mrb[0].mxu0
    %v4031 = vadd.f32 %v3989, %v4030
    %v4032 = vpop.f32.mrb[0].mxu0
    %v4033 = vadd.f32 %v3993, %v4032
    %v4034 = vpop.f32.mrb[0].mxu0
    %v4035 = vadd.f32 %v3989, %v4034
    %v4036 = vpop.f32.mrb[0].mxu0
    %v4037 = vadd.f32 %v3993, %v4036
    %4038 = vdwg.mxu0
    %4039 = vmatprep.subr.bf16.mxu0 %v3953
    %4040 = vmatpush1.bf16.msra.mxu0 %v3952
    %4041 = vmatprep.subr.bf16.mxu0 %v3955
    %4042 = vmatpush1.bf16.msra.mxu0 %v3954
    %4043 = vmatprep.subr.bf16.mxu0 %v3957
    %4044 = vmatpush1.bf16.msra.mxu0 %v3956
    %4045 = vmatprep.subr.bf16.mxu0 %v3959
    %4046 = vmatpush1.bf16.msra.mxu0 %v3958
    %4047 = vmatprep.subr.bf16.mxu0 %v3961
    %4048 = vmatpush1.bf16.msra.mxu0 %v3960
    %4049 = vmatprep.subr.bf16.mxu0 %v3963
    %4050 = vmatpush1.bf16.msra.mxu0 %v3962
    %4051 = vmatprep.subr.bf16.mxu0 %v3965
    %4052 = vmatpush1.bf16.msra.mxu0 %v3964
    %4053 = vmatprep.subr.bf16.mxu0 %v3967
    %4054 = vmatpush1.bf16.msra.mxu0 %v3966
    %4055 = vmatprep.subr.bf16.mxu0 %v3969
    %4056 = vmatpush1.bf16.msra.mxu0 %v3968
    %4057 = vmatprep.subr.bf16.mxu0 %v3971
    %4058 = vmatpush1.bf16.msra.mxu0 %v3970
    %4059 = vmatprep.subr.bf16.mxu0 %v3973
    %4060 = vmatpush1.bf16.msra.mxu0 %v3972
    %4061 = vmatprep.subr.bf16.mxu0 %v3975
    %4062 = vmatpush1.bf16.msra.mxu0 %v3974
    %4063 = vmatprep.subr.bf16.mxu0 %v3977
    %4064 = vmatpush1.bf16.msra.mxu0 %v3976
    %4065 = vmatprep.subr.bf16.mxu0 %v3979
    %4066 = vmatpush1.bf16.msra.mxu0 %v3978
    %4067 = vmatprep.subr.bf16.mxu0 %v3981
    %4068 = vmatpush1.bf16.msra.mxu0 %v3980
    %4069 = vmatprep.subr.bf16.mxu0 %v3983
    %4070 = vmatpush1.bf16.msra.mxu0 %v3982
    %4071 = vmatprep.mubr.bf16.mxu0 %v3916
    %4072 = vmatmul.mubr.bf16.gmra.mrb[0].mxu0 %v3915
    %v4073 = vpop.f32.mrb[0].mxu0
    %v4074 = vadd.f32 %v4031, %v4073
    %v4075 = vpop.f32.mrb[0].mxu0
    %v4076 = vadd.f32 %v4033, %v4075
    %v4077 = vpop.f32.mrb[0].mxu0
    %v4078 = vadd.f32 %v4035, %v4077
    %v4079 = vpop.f32.mrb[0].mxu0
    %v4080 = vadd.f32 %v4037, %v4079
    %4081 = vdwg.mxu0
    %v4082 = vmax.f32 %v4074, 0.0
    %v4083 = vmax.f32 %v4076, 0.0
    %v4084 = vmax.f32 %v4078, 0.0
    %v4085 = vmax.f32 %v4080, 0.0
    %v4086 = vpack.c.bf16 %v4084, %v4082
    %v4087 = vpack.c.bf16 %v4085, %v4083
    %s4088 = smul.u32 4, 32
    %s4089 = smul.u32 %s4088, 1
    %s4090 = sshll.u32 %s4089, 4
    %4091 = dma.done %s159, %s4090
    %v4092 = vld [vmem:[#allocation4] sm:$0xff]
    %v4093 = vld [vmem:[#allocation4 + $0x8] sm:$0xff]
    %v4094 = vld [vmem:[#allocation4 + $0x10] sm:$0xff]
    %v4095 = vld [vmem:[#allocation4 + $0x18] sm:$0xff]
    %v4096 = vld [vmem:[#allocation4 + $0x20] sm:$0xff]
    %v4097 = vld [vmem:[#allocation4 + $0x28] sm:$0xff]
    %v4098 = vld [vmem:[#allocation4 + $0x30] sm:$0xff]
    %v4099 = vld [vmem:[#allocation4 + $0x38] sm:$0xff]
    %v4100 = vld [vmem:[#allocation4 + $0x40] sm:$0xff]
    %v4101 = vld [vmem:[#allocation4 + $0x48] sm:$0xff]
    %v4102 = vld [vmem:[#allocation4 + $0x50] sm:$0xff]
    %v4103 = vld [vmem:[#allocation4 + $0x58] sm:$0xff]
    %v4104 = vld [vmem:[#allocation4 + $0x60] sm:$0xff]
    %v4105 = vld [vmem:[#allocation4 + $0x68] sm:$0xff]
    %v4106 = vld [vmem:[#allocation4 + $0x70] sm:$0xff]
    %v4107 = vld [vmem:[#allocation4 + $0x78] sm:$0xff]
    %v4108 = vld [vmem:[%s7] sm:$0x1]
    %v4110 = vlaneseq
    %v4111 = vshrl.u32 %v4110, 7
    %v4112 = vsub.s32 0, %v4111
    %v4113 = vrot.slane %v4108, %v4112
    %4115 = vmatprep.subr.bf16.mxu0 0
    %4116 = vmatpush1.bf16.msra.mxu0 %v4092
    %4117 = vmatprep.subr.bf16.mxu0 0
    %4118 = vmatpush1.bf16.msra.mxu0 %v4093
    %4119 = vmatprep.subr.bf16.mxu0 0
    %4120 = vmatpush1.bf16.msra.mxu0 %v4094
    %4121 = vmatprep.subr.bf16.mxu0 0
    %4122 = vmatpush1.bf16.msra.mxu0 %v4095
    %4123 = vmatprep.subr.bf16.mxu0 0
    %4124 = vmatpush1.bf16.msra.mxu0 %v4096
    %4125 = vmatprep.subr.bf16.mxu0 0
    %4126 = vmatpush1.bf16.msra.mxu0 %v4097
    %4127 = vmatprep.subr.bf16.mxu0 0
    %4128 = vmatpush1.bf16.msra.mxu0 %v4098
    %4129 = vmatprep.subr.bf16.mxu0 0
    %4130 = vmatpush1.bf16.msra.mxu0 %v4099
    %4131 = vmatprep.subr.bf16.mxu0 0
    %4132 = vmatpush1.bf16.msra.mxu0 %v4100
    %4133 = vmatprep.subr.bf16.mxu0 0
    %4134 = vmatpush1.bf16.msra.mxu0 %v4101
    %4135 = vmatprep.subr.bf16.mxu0 0
    %4136 = vmatpush1.bf16.msra.mxu0 %v4102
    %4137 = vmatprep.subr.bf16.mxu0 0
    %4138 = vmatpush1.bf16.msra.mxu0 %v4103
    %4139 = vmatprep.subr.bf16.mxu0 0
    %4140 = vmatpush1.bf16.msra.mxu0 %v4104
    %4141 = vmatprep.subr.bf16.mxu0 0
    %4142 = vmatpush1.bf16.msra.mxu0 %v4105
    %4143 = vmatprep.subr.bf16.mxu0 0
    %4144 = vmatpush1.bf16.msra.mxu0 %v4106
    %4145 = vmatprep.subr.bf16.mxu0 0
    %4146 = vmatpush1.bf16.msra.mxu0 %v4107
    %4147 = vmatprep.mubr.bf16.mxu0 %v4087
    %4148 = vmatmul.mubr.bf16.gmra.mrb[0].mxu0 %v4086
    %v4149 = vpop.f32.mrb[0].mxu0
    %v4150 = vadd.f32 %v4113, %v4149
    %v4151 = vpop.f32.mrb[0].mxu0
    %v4152 = vpop.f32.mrb[0].mxu0
    %v4153 = vadd.f32 %v4113, %v4152
    %v4154 = vpop.f32.mrb[0].mxu0
    %4155 = vdwg.mxu0
    %v4156 = vpack.c.bf16 %v4153, %v4150
    %v4158 = vunpack.c.l.b16 %v4156
    %v4159 = vunpack.c.h.b16 %v4156
    %v4160 = vpack.c.b16 %v4158, %v4158
    %v4161 = vpack.c.b16 %v4159, %v4159
    %4164 = vst [vmem:[#allocation14] sm:$0xf] %v4160
    %4165 = vst [vmem:[#allocation14 + $0x4] sm:$0xf] %v4161
    // Predicated region
    $region54: #{tpu_custom_call.1} parent=1 // pred_check
      _
    $region55: #{tpu_custom_call.1} parent=1 // pred_check_branch
      %4167 = sbr.rel (0) target = $region57
    $region56: #{tpu_custom_call.1} parent=1 // pred_region
      %s4169 = ssub.s32 128, 128
      %4170 = vsyncadd [#allocation8], %s4169
      %s4171 = sshll.u32 [#allocation14], 4
      %s4172 = int_to_ptr.vmem [resolvable:$true] %s4171
      %4177 = dma.vmem_to_hbm [thread:$0]  %s4172, 128, %s11, [#allocation8], 64, 64, 4
    $region57: #{tpu_custom_call.1} parent=1 // pred_fallthru
      _
    // Predicated region
    $region58: #{tpu_custom_call.1} parent=1 // pred_check
      _
    $region59: #{tpu_custom_call.1} parent=1 // pred_check_branch
      %4179 = sbr.rel (0) target = $region61
    $region60: #{tpu_custom_call.1} parent=1 // pred_region
      %4180 = dma.done [#allocation8], 128
    $region61: #{tpu_custom_call.1} parent=1 // pred_fallthru
      _
    %4181 = vsyncpa [#allocation7], 1
    %4182 = vsyncpa [#allocation10], 1
    %4183 = vsyncpa [#allocation13], 1
    %4184 = vsyncpa [#allocation8], 1
  %4185 = vsyncmov [#allocation5]
  %s4186 = vpop.sfrf %4185
  %p4187 = scmp.eq.s32.totalorder %s4186, 0
  %p4188 = pneg %p4187
  %4190 = shalt.err (%p4188)
  %s4191 = scalar_lea.sflag [#allocation5], 1
  %4192 = vsyncmov %s4191
  %s4193 = vpop.sfrf %4192
  %p4194 = scmp.eq.s32.totalorder %s4193, 0
  %p4195 = pneg %p4194
  %4197 = shalt.err (%p4195)
  %s4198 = scalar_lea.sflag [#allocation5], 2
  %4199 = vsyncmov %s4198
  %s4200 = vpop.sfrf %4199
  %p4201 = scmp.eq.s32.totalorder %s4200, 0
  %p4202 = pneg %p4201
  %4204 = shalt.err (%p4202)

</llo_original>
